<compile_context>
chip_gen: v6e
topology: v6e:2x2x1
jax: 0.10.0
libtpu: 0.0.40
codegen_flags: <defaults>
</compile_context>

<pallas_src>
import math
import functools

import jax
import jax.numpy as jnp
import numpy as np
from jax.experimental import pallas as pl
from jax.experimental.pallas import tpu as pltpu

PAD = 5  # max padding among the three dilated convs; input is pre-padded once.

# Fixed tap order (row-major, center skipped) shared by weight packing + kernel.
_OFF_TAPS = tuple((ky, kx) for ky in range(3) for kx in range(3) if (ky, kx) != (1, 1))


def _conv_our_d_kernel(x_ref, wcen_ref, w1o_ref, w3o_ref, w5o_ref,
                       b1_ref, b3_ref, b5_ref, bc_ref, out_ref):
    """One (image, H-strip) per grid step.

    x_ref    : (1, SH+2*PAD, W+2*PAD, Cin) bf16   padded input strip (with halo)
    wcen_ref : (Cin, 4*Cmed)               bf16   center taps of w1/w3/w5 + 1x1, BN-scaled
    w{1,3,5}o: (8*Cin, Cmed)               bf16   8 off-center taps stacked along K, BN-scaled
    b*       : (1, Cmed)                   f32    folded BatchNorm bias
    out_ref  : (1, SH, W, out_ch)          f32    final output strip (already channel-sliced)
    """
    SH = out_ref.shape[1]
    W = out_ref.shape[2]
    out_ch = out_ref.shape[3]
    Cin = x_ref.shape[3]
    Cmed = b1_ref.shape[1]

    # Row cache: each distinct vertical offset is loaded from VMEM exactly once;
    # the three horizontal taps of that row are then sliced from the value.
    row_cache = {}

    def row(dh):
        if dh not in row_cache:
            row_cache[dh] = x_ref[0, PAD + dh:PAD + dh + SH, :, :]   # (SH, Wp, Cin)
        return row_cache[dh]

    def patch(dh, dw):
        # Static-offset (SH, W, Cin) window flattened to (SH*W, Cin); lane dim untouched.
        r = row(dh)
        return r[:, PAD + dw:PAD + dw + W, :].reshape(SH * W, Cin)

    # Shared center tap of all three 3x3 convs fused with the 1x1 conv:
    # one MXU op instead of four, and the center patch is materialized once.
    yc = jnp.dot(patch(0, 0), wcen_ref[...], preferred_element_type=jnp.float32)  # (SH*W, 4*Cmed)

    def off_center(d, w_ref):
        # im2col: 8 off-center taps stacked along the contraction axis ->
        # a single (SH*W, 8*Cin) x (8*Cin, Cmed) MXU op per dilation branch.
        cols = [patch((ky - 1) * d, (kx - 1) * d) for ky, kx in _OFF_TAPS]
        return jnp.dot(jnp.concatenate(cols, axis=-1), w_ref[...],
                       preferred_element_type=jnp.float32)

    # BN scale already folded into weights -> just bias + ReLU (f32 VPU math).
    # Branches accumulate sequentially so only one (SH*W, Cmed) f32 value stays live.
    xa = jnp.maximum(off_center(1, w1o_ref) + yc[:, 0:Cmed] + b1_ref[...], 0.0)
    xa = xa + jnp.maximum(off_center(3, w3o_ref) + yc[:, Cmed:2 * Cmed] + b3_ref[...], 0.0)
    xa = xa + jnp.maximum(off_center(5, w5o_ref) + yc[:, 2 * Cmed:3 * Cmed] + b5_ref[...], 0.0)
    xn = jnp.maximum(yc[:, 3 * Cmed:4 * Cmed] + bc_ref[...], 0.0)

    # torch.cat([xa, xn], C)[:, :out_ch] written directly into out_ref slices
    # (exactly out_ch channels emitted; no in-kernel concatenate).
    out_ref[:, :, :, 0:Cmed] = xa.reshape(1, SH, W, Cmed).astype(out_ref.dtype)
    if out_ch > Cmed:
        out_ref[:, :, :, Cmed:out_ch] = xn[:, :out_ch - Cmed].reshape(
            1, SH, W, out_ch - Cmed).astype(out_ref.dtype)


def _pick_strip_h(H, target):
    """Largest divisor of H that is <= target (keeps output blocks exact)."""
    sh = max(1, min(H, int(target)))
    while H % sh:
        sh -= 1
    return sh


@functools.partial(jax.jit, static_argnames=("out_ch", "strip_h"))
def conv_our_d_forward(x_nchw, packed, *, out_ch, strip_h=128):
    """x_nchw: (N, Cin, H, W) float32.  Returns (N, out_ch, H, W) float32."""
    N, Cin, H, W = x_nchw.shape
    Cmed = packed["b1"].shape[1]
    assert out_ch <= 2 * Cmed

    SH = _pick_strip_h(H, strip_h)
    S = H // SH
    Hs, Wp = SH + 2 * PAD, W + 2 * PAD

    # NCHW -> NHWC, one max-halo pad, bf16 cast, and overlapping-strip gather.
    # All fused under jit; the ~2*PAD/SH halo duplication buys fully auto-pipelined
    # strip DMA and bounds per-step VMEM to a single strip (v7x 64 MiB safe).
    xpad = jnp.pad(jnp.transpose(x_nchw, (0, 2, 3, 1)).astype(jnp.bfloat16),
                   ((0, 0), (PAD, PAD), (PAD, PAD), (0, 0)))
    rows = jnp.arange(S)[:, None] * SH + jnp.arange(Hs)[None, :]        # (S, Hs)
    xstrips = jnp.take(xpad, rows, axis=1).reshape(N * S, Hs, Wp, Cin)  # (N*S, Hs, Wp, Cin)

    def full(shape):
        return pl.BlockSpec(shape, lambda g: (0,) * len(shape))

    in_specs = [
        pl.BlockSpec((1, Hs, Wp, Cin), lambda g: (g, 0, 0, 0)),
        full((Cin, 4 * Cmed)),
        full((8 * Cin, Cmed)), full((8 * Cin, Cmed)), full((8 * Cin, Cmed)),
        full((1, Cmed)), full((1, Cmed)), full((1, Cmed)), full((1, Cmed)),
    ]
    out_spec = pl.BlockSpec((1, SH, W, out_ch), lambda g: (g, 0, 0, 0))

    out = pl.pallas_call(
        _conv_our_d_kernel,
        out_shape=jax.ShapeDtypeStruct((N * S, SH, W, out_ch), jnp.float32),
        grid_spec=pltpu.PrefetchScalarGridSpec(
            num_scalar_prefetch=0,
            grid=(N * S,),
            in_specs=in_specs,
            out_specs=out_spec,
        ),
        compiler_params=pltpu.CompilerParams(
            dimension_semantics=("parallel",),
            vmem_limit_bytes=64 * 1024 * 1024),
    )(xstrips,
      packed["wcen"], packed["w1o"], packed["w3o"], packed["w5o"],
      packed["b1"], packed["b3"], packed["b5"], packed["bc"])

    out_nhwc = out.reshape(N, H, W, out_ch)        # merge strips back into H
    return jnp.transpose(out_nhwc, (0, 3, 1, 2))   # NHWC -> NCHW


def pack_params(params):
    """Fold eval-mode BN scale into the conv weights, pack taps for the fused
    MXU matmuls, and cast matmul operands to bf16 (biases stay f32)."""
    w1 = params["w1"] * params["s1"][0]            # (3,3,Cin,Cmed) * (Cmed,)
    w3 = params["w3"] * params["s3"][0]
    w5 = params["w5"] * params["s5"][0]
    wc = params["wc"] * params["sc"][0]            # (Cin,Cmed)

    wcen = jnp.concatenate([w1[1, 1], w3[1, 1], w5[1, 1], wc], axis=-1)  # (Cin, 4*Cmed)

    def pack_off(w):                               # (8*Cin, Cmed), tap-major rows
        return jnp.concatenate([w[ky, kx] for ky, kx in _OFF_TAPS], axis=0)

    bf16 = jnp.bfloat16
    return {
        "wcen": wcen.astype(bf16),
        "w1o": pack_off(w1).astype(bf16),
        "w3o": pack_off(w3).astype(bf16),
        "w5o": pack_off(w5).astype(bf16),
        "b1": params["b1"], "b3": params["b3"],
        "b5": params["b5"], "bc": params["bc"],
    }


def make_params(key, in_ch, out_ch):
    """Deterministic synthetic parameters matching the PyTorch module shapes."""
    med_ch = math.ceil(out_ch / 2)
    ks = jax.random.split(key, 12)
    eps = 1e-5

    def fold_bn(kg, kb):
        gamma = jax.random.uniform(kg, (med_ch,), jnp.float32, 0.5, 1.5)
        beta = jax.random.normal(kb, (med_ch,), jnp.float32) * 0.1
        mean = jnp.zeros((med_ch,), jnp.float32)   # running stats (eval-mode BN)
        var = jnp.ones((med_ch,), jnp.float32)
        scale = gamma / jnp.sqrt(var + eps)
        bias = beta - mean * scale
        return scale.reshape(1, med_ch), bias.reshape(1, med_ch)

    def conv3_w(k):
        # torch layout (Cout, Cin, kH, kW) -> kernel layout (kH, kW, Cin, Cout)
        w = jax.random.normal(k, (med_ch, in_ch, 3, 3), jnp.float32) * 0.1
        return jnp.transpose(w, (2, 3, 1, 0))

    s1, b1 = fold_bn(ks[3], ks[4])
    s3, b3 = fold_bn(ks[5], ks[6])
    s5, b5 = fold_bn(ks[7], ks[8])
    sc, bc = fold_bn(ks[9], ks[10])
    wc = jax.random.normal(ks[11], (med_ch, in_ch, 1, 1), jnp.float32) * 0.1

    return {
        "w1": conv3_w(ks[0]), "w3": conv3_w(ks[1]), "w5": conv3_w(ks[2]),
        "wc": jnp.transpose(wc[:, :, 0, 0], (1, 0)),      # (Cin, Cmed)
        "s1": s1, "b1": b1, "s3": s3, "b3": b3,
        "s5": s5, "b5": b5, "sc": sc, "bc": bc,
    }


@functools.partial(jax.jit, static_argnames=("out_ch",))
def reference_forward(x_nchw, params, out_ch):
    """Pure-JAX f32 reference (lax convs) for correctness checking."""
    def conv3(x, w_khwio, d):
        w = jnp.transpose(w_khwio, (3, 2, 0, 1))  # OIHW
        return jax.lax.conv_general_dilated(
            x, w, window_strides=(1, 1), padding=[(d, d), (d, d)],
            rhs_dilation=(d, d),
            dimension_numbers=("NCHW", "OIHW", "NCHW"))

    def bn_relu(y, s, b):
        return jnp.maximum(y * s[0][None, :, None, None] + b[0][None, :, None, None], 0.0)

    x1 = bn_relu(conv3(x_nchw, params["w1"], 1), params["s1"], params["b1"])
    x3 = bn_relu(conv3(x_nchw, params["w3"], 3), params["s3"], params["b3"])
    x5 = bn_relu(conv3(x_nchw, params["w5"], 5), params["s5"], params["b5"])
    xa = x1 + x3 + x5
    wc = jnp.transpose(params["wc"], (1, 0))[:, :, None, None]  # OIHW 1x1
    xn = jax.lax.conv_general_dilated(
        x_nchw, wc, (1, 1), [(0, 0), (0, 0)],
        dimension_numbers=("NCHW", "OIHW", "NCHW"))
    xn = bn_relu(xn, params["sc"], params["bc"])
    return jnp.concatenate([xa, xn], axis=1)[:, :out_ch, :, :]


if __name__ == "__main__":
    in_ch, out_ch = 4, 5      # med_ch = ceil(5/2) = 3 -> concat width 6, sliced to 5
    N, H, W = 2, 16, 16

    key = jax.random.PRNGKey(0)
    kx, kp = jax.random.split(key)
    x = jax.random.normal(kx, (N, in_ch, H, W), jnp.float32)
    params = make_params(kp, in_ch, out_ch)
    packed = pack_params(params)

    # strip_h=8 -> 2 strips per image (4 parallel grid steps) to exercise the
    # halo / strip logic at this small demo size.
    out = conv_our_d_forward(x, packed, out_ch=out_ch, strip_h=8)
    out = jax.block_until_ready(out)

    ref = jax.block_until_ready(reference_forward(x, params, out_ch))
    # bf16 matmul operands (f32 accumulation) vs the f32 reference -> loosened tol.
    np.testing.assert_allclose(np.asarray(out), np.asarray(ref), rtol=3e-2, atol=3e-2)
    assert out.shape == (N, out_ch, H, W)

    print("KERNEL_OK")
</pallas_src>

<mosaic_0001>
module attributes {stable_mosaic.version = 11 : i64} {
  func.func @_conv_our_d_kernel(%arg0: i32, %arg1: memref<1x18x26x4xbf16, #tpu.memory_space<vmem>>, %arg2: memref<4x12xbf16, #tpu.memory_space<vmem>>, %arg3: memref<32x3xbf16, #tpu.memory_space<vmem>>, %arg4: memref<32x3xbf16, #tpu.memory_space<vmem>>, %arg5: memref<32x3xbf16, #tpu.memory_space<vmem>>, %arg6: memref<1x3xf32, #tpu.memory_space<vmem>>, %arg7: memref<1x3xf32, #tpu.memory_space<vmem>>, %arg8: memref<1x3xf32, #tpu.memory_space<vmem>>, %arg9: memref<1x3xf32, #tpu.memory_space<vmem>>, %arg10: memref<1x8x16x5xf32, #tpu.memory_space<vmem>>) attributes {dimension_semantics = [#tpu.dimension_semantics<parallel>], iteration_bounds = array<i64: 4>, scalar_prefetch = 0 : i64, scratch_operands = 0 : i64, tpu.core_type = #tpu.core_type<tc>, window_params = [{transform_indices = @transform_0, window_bounds = array<i64: 1, 18, 26, 4>}, {pipeline_mode = #tpu.pipeline_mode<synchronous>, transform_indices = @transform_1, window_bounds = array<i64: 4, 12>}, {pipeline_mode = #tpu.pipeline_mode<synchronous>, transform_indices = @transform_2, window_bounds = array<i64: 32, 3>}, {pipeline_mode = #tpu.pipeline_mode<synchronous>, transform_indices = @transform_3, window_bounds = array<i64: 32, 3>}, {pipeline_mode = #tpu.pipeline_mode<synchronous>, transform_indices = @transform_4, window_bounds = array<i64: 32, 3>}, {pipeline_mode = #tpu.pipeline_mode<synchronous>, transform_indices = @transform_5, window_bounds = array<i64: 1, 3>}, {pipeline_mode = #tpu.pipeline_mode<synchronous>, transform_indices = @transform_6, window_bounds = array<i64: 1, 3>}, {pipeline_mode = #tpu.pipeline_mode<synchronous>, transform_indices = @transform_7, window_bounds = array<i64: 1, 3>}, {pipeline_mode = #tpu.pipeline_mode<synchronous>, transform_indices = @transform_8, window_bounds = array<i64: 1, 3>}, {transform_indices = @transform_9, window_bounds = array<i64: 1, 8, 16, 5>}]} {
    %c0 = arith.constant 0 : index
    %c5 = arith.constant 5 : index
    %c0_0 = arith.constant 0 : index
    %c0_1 = arith.constant 0 : index
    %0 = vector.load %arg1[%c0, %c5, %c0_0, %c0_1] : memref<1x18x26x4xbf16, #tpu.memory_space<vmem>>, vector<1x8x26x4xbf16>
    %1 = vector.shape_cast %0 : vector<1x8x26x4xbf16> to vector<8x26x4xbf16>
    %2 = vector.extract_strided_slice %1 {offsets = [0, 5, 0], sizes = [8, 16, 4], strides = [1, 1, 1]} : vector<8x26x4xbf16> to vector<8x16x4xbf16>
    %3 = vector.shape_cast %2 : vector<8x16x4xbf16> to vector<128x4xbf16>
    %c0_2 = arith.constant 0 : index
    %c0_3 = arith.constant 0 : index
    %4 = vector.load %arg2[%c0_2, %c0_3] : memref<4x12xbf16, #tpu.memory_space<vmem>>, vector<4x12xbf16>
    %cst = arith.constant dense<0.000000e+00> : vector<128x12xf32>
    %5 = tpu.matmul %3, %4, %cst {dimension_numbers = #tpu.dot_dimension_numbers<[1], [0], [0], [1], [0, 0, 1, 1], [], []>} : vector<128x4xbf16>, vector<4x12xbf16>, vector<128x12xf32> -> vector<128x12xf32>
    %c0_4 = arith.constant 0 : index
    %c4 = arith.constant 4 : index
    %c0_5 = arith.constant 0 : index
    %c0_6 = arith.constant 0 : index
    %6 = vector.load %arg1[%c0_4, %c4, %c0_5, %c0_6] : memref<1x18x26x4xbf16, #tpu.memory_space<vmem>>, vector<1x8x26x4xbf16>
    %7 = vector.shape_cast %6 : vector<1x8x26x4xbf16> to vector<8x26x4xbf16>
    %8 = vector.extract_strided_slice %7 {offsets = [0, 4, 0], sizes = [8, 16, 4], strides = [1, 1, 1]} : vector<8x26x4xbf16> to vector<8x16x4xbf16>
    %9 = vector.shape_cast %8 : vector<8x16x4xbf16> to vector<128x4xbf16>
    %10 = vector.extract_strided_slice %7 {offsets = [0, 5, 0], sizes = [8, 16, 4], strides = [1, 1, 1]} : vector<8x26x4xbf16> to vector<8x16x4xbf16>
    %11 = vector.shape_cast %10 : vector<8x16x4xbf16> to vector<128x4xbf16>
    %12 = vector.extract_strided_slice %7 {offsets = [0, 6, 0], sizes = [8, 16, 4], strides = [1, 1, 1]} : vector<8x26x4xbf16> to vector<8x16x4xbf16>
    %13 = vector.shape_cast %12 : vector<8x16x4xbf16> to vector<128x4xbf16>
    %14 = vector.extract_strided_slice %1 {offsets = [0, 4, 0], sizes = [8, 16, 4], strides = [1, 1, 1]} : vector<8x26x4xbf16> to vector<8x16x4xbf16>
    %15 = vector.shape_cast %14 : vector<8x16x4xbf16> to vector<128x4xbf16>
    %16 = vector.extract_strided_slice %1 {offsets = [0, 6, 0], sizes = [8, 16, 4], strides = [1, 1, 1]} : vector<8x26x4xbf16> to vector<8x16x4xbf16>
    %17 = vector.shape_cast %16 : vector<8x16x4xbf16> to vector<128x4xbf16>
    %c0_7 = arith.constant 0 : index
    %c6 = arith.constant 6 : index
    %c0_8 = arith.constant 0 : index
    %c0_9 = arith.constant 0 : index
    %18 = vector.load %arg1[%c0_7, %c6, %c0_8, %c0_9] : memref<1x18x26x4xbf16, #tpu.memory_space<vmem>>, vector<1x8x26x4xbf16>
    %19 = vector.shape_cast %18 : vector<1x8x26x4xbf16> to vector<8x26x4xbf16>
    %20 = vector.extract_strided_slice %19 {offsets = [0, 4, 0], sizes = [8, 16, 4], strides = [1, 1, 1]} : vector<8x26x4xbf16> to vector<8x16x4xbf16>
    %21 = vector.shape_cast %20 : vector<8x16x4xbf16> to vector<128x4xbf16>
    %22 = vector.extract_strided_slice %19 {offsets = [0, 5, 0], sizes = [8, 16, 4], strides = [1, 1, 1]} : vector<8x26x4xbf16> to vector<8x16x4xbf16>
    %23 = vector.shape_cast %22 : vector<8x16x4xbf16> to vector<128x4xbf16>
    %24 = vector.extract_strided_slice %19 {offsets = [0, 6, 0], sizes = [8, 16, 4], strides = [1, 1, 1]} : vector<8x26x4xbf16> to vector<8x16x4xbf16>
    %25 = vector.shape_cast %24 : vector<8x16x4xbf16> to vector<128x4xbf16>
    %26 = tpu.concatenate %9, %11, %13, %15, %17, %21, %23, %25 in 1 : vector<128x4xbf16>, vector<128x4xbf16>, vector<128x4xbf16>, vector<128x4xbf16>, vector<128x4xbf16>, vector<128x4xbf16>, vector<128x4xbf16>, vector<128x4xbf16> -> vector<128x32xbf16>
    %c0_10 = arith.constant 0 : index
    %c0_11 = arith.constant 0 : index
    %27 = vector.load %arg3[%c0_10, %c0_11] : memref<32x3xbf16, #tpu.memory_space<vmem>>, vector<32x3xbf16>
    %cst_12 = arith.constant dense<0.000000e+00> : vector<128x3xf32>
    %28 = tpu.matmul %26, %27, %cst_12 {dimension_numbers = #tpu.dot_dimension_numbers<[1], [0], [0], [1], [0, 0, 1, 1], [], []>} : vector<128x32xbf16>, vector<32x3xbf16>, vector<128x3xf32> -> vector<128x3xf32>
    %29 = vector.extract_strided_slice %5 {offsets = [0, 0], sizes = [128, 3], strides = [1, 1]} : vector<128x12xf32> to vector<128x3xf32>
    %30 = arith.addf %28, %29 : vector<128x3xf32>
    %c0_13 = arith.constant 0 : index
    %c0_14 = arith.constant 0 : index
    %31 = vector.load %arg6[%c0_13, %c0_14] : memref<1x3xf32, #tpu.memory_space<vmem>>, vector<1x3xf32>
    %32 = vector.broadcast %31 : vector<1x3xf32> to vector<128x3xf32>
    %33 = arith.addf %30, %32 : vector<128x3xf32>
    %cst_15 = arith.constant 0.000000e+00 : f32
    %34 = vector.broadcast %cst_15 : f32 to vector<128x3xf32>
    %35 = arith.maximumf %33, %34 : vector<128x3xf32>
    %c0_16 = arith.constant 0 : index
    %c2 = arith.constant 2 : index
    %c0_17 = arith.constant 0 : index
    %c0_18 = arith.constant 0 : index
    %36 = vector.load %arg1[%c0_16, %c2, %c0_17, %c0_18] : memref<1x18x26x4xbf16, #tpu.memory_space<vmem>>, vector<1x8x26x4xbf16>
    %37 = vector.shape_cast %36 : vector<1x8x26x4xbf16> to vector<8x26x4xbf16>
    %38 = vector.extract_strided_slice %37 {offsets = [0, 2, 0], sizes = [8, 16, 4], strides = [1, 1, 1]} : vector<8x26x4xbf16> to vector<8x16x4xbf16>
    %39 = vector.shape_cast %38 : vector<8x16x4xbf16> to vector<128x4xbf16>
    %40 = vector.extract_strided_slice %37 {offsets = [0, 5, 0], sizes = [8, 16, 4], strides = [1, 1, 1]} : vector<8x26x4xbf16> to vector<8x16x4xbf16>
    %41 = vector.shape_cast %40 : vector<8x16x4xbf16> to vector<128x4xbf16>
    %42 = vector.extract_strided_slice %37 {offsets = [0, 8, 0], sizes = [8, 16, 4], strides = [1, 1, 1]} : vector<8x26x4xbf16> to vector<8x16x4xbf16>
    %43 = vector.shape_cast %42 : vector<8x16x4xbf16> to vector<128x4xbf16>
    %44 = vector.extract_strided_slice %1 {offsets = [0, 2, 0], sizes = [8, 16, 4], strides = [1, 1, 1]} : vector<8x26x4xbf16> to vector<8x16x4xbf16>
    %45 = vector.shape_cast %44 : vector<8x16x4xbf16> to vector<128x4xbf16>
    %46 = vector.extract_strided_slice %1 {offsets = [0, 8, 0], sizes = [8, 16, 4], strides = [1, 1, 1]} : vector<8x26x4xbf16> to vector<8x16x4xbf16>
    %47 = vector.shape_cast %46 : vector<8x16x4xbf16> to vector<128x4xbf16>
    %c0_19 = arith.constant 0 : index
    %c8 = arith.constant 8 : index
    %c0_20 = arith.constant 0 : index
    %c0_21 = arith.constant 0 : index
    %48 = vector.load %arg1[%c0_19, %c8, %c0_20, %c0_21] : memref<1x18x26x4xbf16, #tpu.memory_space<vmem>>, vector<1x8x26x4xbf16>
    %49 = vector.shape_cast %48 : vector<1x8x26x4xbf16> to vector<8x26x4xbf16>
    %50 = vector.extract_strided_slice %49 {offsets = [0, 2, 0], sizes = [8, 16, 4], strides = [1, 1, 1]} : vector<8x26x4xbf16> to vector<8x16x4xbf16>
    %51 = vector.shape_cast %50 : vector<8x16x4xbf16> to vector<128x4xbf16>
    %52 = vector.extract_strided_slice %49 {offsets = [0, 5, 0], sizes = [8, 16, 4], strides = [1, 1, 1]} : vector<8x26x4xbf16> to vector<8x16x4xbf16>
    %53 = vector.shape_cast %52 : vector<8x16x4xbf16> to vector<128x4xbf16>
    %54 = vector.extract_strided_slice %49 {offsets = [0, 8, 0], sizes = [8, 16, 4], strides = [1, 1, 1]} : vector<8x26x4xbf16> to vector<8x16x4xbf16>
    %55 = vector.shape_cast %54 : vector<8x16x4xbf16> to vector<128x4xbf16>
    %56 = tpu.concatenate %39, %41, %43, %45, %47, %51, %53, %55 in 1 : vector<128x4xbf16>, vector<128x4xbf16>, vector<128x4xbf16>, vector<128x4xbf16>, vector<128x4xbf16>, vector<128x4xbf16>, vector<128x4xbf16>, vector<128x4xbf16> -> vector<128x32xbf16>
    %c0_22 = arith.constant 0 : index
    %c0_23 = arith.constant 0 : index
    %57 = vector.load %arg4[%c0_22, %c0_23] : memref<32x3xbf16, #tpu.memory_space<vmem>>, vector<32x3xbf16>
    %cst_24 = arith.constant dense<0.000000e+00> : vector<128x3xf32>
    %58 = tpu.matmul %56, %57, %cst_24 {dimension_numbers = #tpu.dot_dimension_numbers<[1], [0], [0], [1], [0, 0, 1, 1], [], []>} : vector<128x32xbf16>, vector<32x3xbf16>, vector<128x3xf32> -> vector<128x3xf32>
    %59 = vector.extract_strided_slice %5 {offsets = [0, 3], sizes = [128, 3], strides = [1, 1]} : vector<128x12xf32> to vector<128x3xf32>
    %60 = arith.addf %58, %59 : vector<128x3xf32>
    %c0_25 = arith.constant 0 : index
    %c0_26 = arith.constant 0 : index
    %61 = vector.load %arg7[%c0_25, %c0_26] : memref<1x3xf32, #tpu.memory_space<vmem>>, vector<1x3xf32>
    %62 = vector.broadcast %61 : vector<1x3xf32> to vector<128x3xf32>
    %63 = arith.addf %60, %62 : vector<128x3xf32>
    %cst_27 = arith.constant 0.000000e+00 : f32
    %64 = vector.broadcast %cst_27 : f32 to vector<128x3xf32>
    %65 = arith.maximumf %63, %64 : vector<128x3xf32>
    %66 = arith.addf %35, %65 : vector<128x3xf32>
    %c0_28 = arith.constant 0 : index
    %c0_29 = arith.constant 0 : index
    %c0_30 = arith.constant 0 : index
    %c0_31 = arith.constant 0 : index
    %67 = vector.load %arg1[%c0_28, %c0_29, %c0_30, %c0_31] : memref<1x18x26x4xbf16, #tpu.memory_space<vmem>>, vector<1x8x26x4xbf16>
    %68 = vector.shape_cast %67 : vector<1x8x26x4xbf16> to vector<8x26x4xbf16>
    %69 = vector.extract_strided_slice %68 {offsets = [0, 0, 0], sizes = [8, 16, 4], strides = [1, 1, 1]} : vector<8x26x4xbf16> to vector<8x16x4xbf16>
    %70 = vector.shape_cast %69 : vector<8x16x4xbf16> to vector<128x4xbf16>
    %71 = vector.extract_strided_slice %68 {offsets = [0, 5, 0], sizes = [8, 16, 4], strides = [1, 1, 1]} : vector<8x26x4xbf16> to vector<8x16x4xbf16>
    %72 = vector.shape_cast %71 : vector<8x16x4xbf16> to vector<128x4xbf16>
    %73 = vector.extract_strided_slice %68 {offsets = [0, 10, 0], sizes = [8, 16, 4], strides = [1, 1, 1]} : vector<8x26x4xbf16> to vector<8x16x4xbf16>
    %74 = vector.shape_cast %73 : vector<8x16x4xbf16> to vector<128x4xbf16>
    %75 = vector.extract_strided_slice %1 {offsets = [0, 0, 0], sizes = [8, 16, 4], strides = [1, 1, 1]} : vector<8x26x4xbf16> to vector<8x16x4xbf16>
    %76 = vector.shape_cast %75 : vector<8x16x4xbf16> to vector<128x4xbf16>
    %77 = vector.extract_strided_slice %1 {offsets = [0, 10, 0], sizes = [8, 16, 4], strides = [1, 1, 1]} : vector<8x26x4xbf16> to vector<8x16x4xbf16>
    %78 = vector.shape_cast %77 : vector<8x16x4xbf16> to vector<128x4xbf16>
    %c0_32 = arith.constant 0 : index
    %c10 = arith.constant 10 : index
    %c0_33 = arith.constant 0 : index
    %c0_34 = arith.constant 0 : index
    %79 = vector.load %arg1[%c0_32, %c10, %c0_33, %c0_34] : memref<1x18x26x4xbf16, #tpu.memory_space<vmem>>, vector<1x8x26x4xbf16>
    %80 = vector.shape_cast %79 : vector<1x8x26x4xbf16> to vector<8x26x4xbf16>
    %81 = vector.extract_strided_slice %80 {offsets = [0, 0, 0], sizes = [8, 16, 4], strides = [1, 1, 1]} : vector<8x26x4xbf16> to vector<8x16x4xbf16>
    %82 = vector.shape_cast %81 : vector<8x16x4xbf16> to vector<128x4xbf16>
    %83 = vector.extract_strided_slice %80 {offsets = [0, 5, 0], sizes = [8, 16, 4], strides = [1, 1, 1]} : vector<8x26x4xbf16> to vector<8x16x4xbf16>
    %84 = vector.shape_cast %83 : vector<8x16x4xbf16> to vector<128x4xbf16>
    %85 = vector.extract_strided_slice %80 {offsets = [0, 10, 0], sizes = [8, 16, 4], strides = [1, 1, 1]} : vector<8x26x4xbf16> to vector<8x16x4xbf16>
    %86 = vector.shape_cast %85 : vector<8x16x4xbf16> to vector<128x4xbf16>
    %87 = tpu.concatenate %70, %72, %74, %76, %78, %82, %84, %86 in 1 : vector<128x4xbf16>, vector<128x4xbf16>, vector<128x4xbf16>, vector<128x4xbf16>, vector<128x4xbf16>, vector<128x4xbf16>, vector<128x4xbf16>, vector<128x4xbf16> -> vector<128x32xbf16>
    %c0_35 = arith.constant 0 : index
    %c0_36 = arith.constant 0 : index
    %88 = vector.load %arg5[%c0_35, %c0_36] : memref<32x3xbf16, #tpu.memory_space<vmem>>, vector<32x3xbf16>
    %cst_37 = arith.constant dense<0.000000e+00> : vector<128x3xf32>
    %89 = tpu.matmul %87, %88, %cst_37 {dimension_numbers = #tpu.dot_dimension_numbers<[1], [0], [0], [1], [0, 0, 1, 1], [], []>} : vector<128x32xbf16>, vector<32x3xbf16>, vector<128x3xf32> -> vector<128x3xf32>
    %90 = vector.extract_strided_slice %5 {offsets = [0, 6], sizes = [128, 3], strides = [1, 1]} : vector<128x12xf32> to vector<128x3xf32>
    %91 = arith.addf %89, %90 : vector<128x3xf32>
    %c0_38 = arith.constant 0 : index
    %c0_39 = arith.constant 0 : index
    %92 = vector.load %arg8[%c0_38, %c0_39] : memref<1x3xf32, #tpu.memory_space<vmem>>, vector<1x3xf32>
    %93 = vector.broadcast %92 : vector<1x3xf32> to vector<128x3xf32>
    %94 = arith.addf %91, %93 : vector<128x3xf32>
    %cst_40 = arith.constant 0.000000e+00 : f32
    %95 = vector.broadcast %cst_40 : f32 to vector<128x3xf32>
    %96 = arith.maximumf %94, %95 : vector<128x3xf32>
    %97 = arith.addf %66, %96 : vector<128x3xf32>
    %98 = vector.extract_strided_slice %5 {offsets = [0, 9], sizes = [128, 3], strides = [1, 1]} : vector<128x12xf32> to vector<128x3xf32>
    %c0_41 = arith.constant 0 : index
    %c0_42 = arith.constant 0 : index
    %99 = vector.load %arg9[%c0_41, %c0_42] : memref<1x3xf32, #tpu.memory_space<vmem>>, vector<1x3xf32>
    %100 = vector.broadcast %99 : vector<1x3xf32> to vector<128x3xf32>
    %101 = arith.addf %98, %100 : vector<128x3xf32>
    %cst_43 = arith.constant 0.000000e+00 : f32
    %102 = vector.broadcast %cst_43 : f32 to vector<128x3xf32>
    %103 = arith.maximumf %101, %102 : vector<128x3xf32>
    %104 = vector.shape_cast %97 : vector<128x3xf32> to vector<1x8x16x3xf32>
    %c0_44 = arith.constant 0 : index
    %c0_45 = arith.constant 0 : index
    %c0_46 = arith.constant 0 : index
    %c0_47 = arith.constant 0 : index
    %105 = vector.load %arg10[%c0_44, %c0_45, %c0_46, %c0_47] : memref<1x8x16x5xf32, #tpu.memory_space<vmem>>, vector<1x8x16x3xf32>
    tpu.vector_store %arg10[%c0_44, %c0_45, %c0_46, %c0_47], %104 {strides = array<i32>} : memref<1x8x16x5xf32, #tpu.memory_space<vmem>>, vector<1x8x16x3xf32>,
    %106 = vector.extract_strided_slice %103 {offsets = [0, 0], sizes = [128, 2], strides = [1, 1]} : vector<128x3xf32> to vector<128x2xf32>
    %107 = vector.shape_cast %106 : vector<128x2xf32> to vector<1x8x16x2xf32>
    %c0_48 = arith.constant 0 : index
    %c0_49 = arith.constant 0 : index
    %c0_50 = arith.constant 0 : index
    %c3 = arith.constant 3 : index
    %108 = vector.load %arg10[%c0_48, %c0_49, %c0_50, %c3] : memref<1x8x16x5xf32, #tpu.memory_space<vmem>>, vector<1x8x16x2xf32>
    tpu.vector_store %arg10[%c0_48, %c0_49, %c0_50, %c3], %107 {strides = array<i32>} : memref<1x8x16x5xf32, #tpu.memory_space<vmem>>, vector<1x8x16x2xf32>,
    return
  }
  func.func @transform_0(%arg0: i32) -> (i32, i32, i32, i32) {
    %c0_i32 = arith.constant 0 : i32
    %c0_i32_0 = arith.constant 0 : i32
    %c0_i32_1 = arith.constant 0 : i32
    %c0_i32_2 = arith.constant 0 : i32
    return %arg0, %c0_i32, %c0_i32_0, %c0_i32_1 : i32, i32, i32, i32
  }
  func.func @transform_1(%arg0: i32) -> (i32, i32) {
    %c0_i32 = arith.constant 0 : i32
    %c0_i32_0 = arith.constant 0 : i32
    %c0_i32_1 = arith.constant 0 : i32
    return %c0_i32, %c0_i32_0 : i32, i32
  }
  func.func @transform_2(%arg0: i32) -> (i32, i32) {
    %c0_i32 = arith.constant 0 : i32
    %c0_i32_0 = arith.constant 0 : i32
    %c0_i32_1 = arith.constant 0 : i32
    return %c0_i32, %c0_i32_0 : i32, i32
  }
  func.func @transform_3(%arg0: i32) -> (i32, i32) {
    %c0_i32 = arith.constant 0 : i32
    %c0_i32_0 = arith.constant 0 : i32
    %c0_i32_1 = arith.constant 0 : i32
    return %c0_i32, %c0_i32_0 : i32, i32
  }
  func.func @transform_4(%arg0: i32) -> (i32, i32) {
    %c0_i32 = arith.constant 0 : i32
    %c0_i32_0 = arith.constant 0 : i32
    %c0_i32_1 = arith.constant 0 : i32
    return %c0_i32, %c0_i32_0 : i32, i32
  }
  func.func @transform_5(%arg0: i32) -> (i32, i32) {
    %c0_i32 = arith.constant 0 : i32
    %c0_i32_0 = arith.constant 0 : i32
    %c0_i32_1 = arith.constant 0 : i32
    return %c0_i32, %c0_i32_0 : i32, i32
  }
  func.func @transform_6(%arg0: i32) -> (i32, i32) {
    %c0_i32 = arith.constant 0 : i32
    %c0_i32_0 = arith.constant 0 : i32
    %c0_i32_1 = arith.constant 0 : i32
    return %c0_i32, %c0_i32_0 : i32, i32
  }
  func.func @transform_7(%arg0: i32) -> (i32, i32) {
    %c0_i32 = arith.constant 0 : i32
    %c0_i32_0 = arith.constant 0 : i32
    %c0_i32_1 = arith.constant 0 : i32
    return %c0_i32, %c0_i32_0 : i32, i32
  }
  func.func @transform_8(%arg0: i32) -> (i32, i32) {
    %c0_i32 = arith.constant 0 : i32
    %c0_i32_0 = arith.constant 0 : i32
    %c0_i32_1 = arith.constant 0 : i32
    return %c0_i32, %c0_i32_0 : i32, i32
  }
  func.func @transform_9(%arg0: i32) -> (i32, i32, i32, i32) {
    %c0_i32 = arith.constant 0 : i32
    %c0_i32_0 = arith.constant 0 : i32
    %c0_i32_1 = arith.constant 0 : i32
    %c0_i32_2 = arith.constant 0 : i32
    return %arg0, %c0_i32, %c0_i32_0, %c0_i32_1 : i32, i32, i32, i32
  }
}

</mosaic_0001>

<llo_original>
// kernel: conv_our_d_forward.1
$region0: #{conv_our_d_forward.1}
  #allocation0 [shape = 'u32[]', space=smem, size = 0x4, offset = 0x4, fixed_abs, tag = 'smem constant byte address 0x4 - core index']
  #allocation1 [shape = 'u32[144,128]{1,0:T(1,128)}', space=vmem, size = 0x12000, scoped, tag = 'internal scratch']
  %s0 = inlined_call_operand.vmem [shape: bf16[4,18,26,4], index: 0, kind: input, shape index: {}]
  %s1 = inlined_call_operand.vmem [shape: bf16[4,12], index: 1, kind: input, shape index: {}]
  %s2 = inlined_call_operand.vmem [shape: bf16[32,3], index: 2, kind: input, shape index: {}]
  %s3 = inlined_call_operand.vmem [shape: bf16[32,3], index: 3, kind: input, shape index: {}]
  %s4 = inlined_call_operand.vmem [shape: bf16[32,3], index: 4, kind: input, shape index: {}]
  %s5 = inlined_call_operand.vmem [shape: f32[1,3], index: 5, kind: input, shape index: {}]
  %s6 = inlined_call_operand.vmem [shape: f32[1,3], index: 6, kind: input, shape index: {}]
  %s7 = inlined_call_operand.vmem [shape: f32[1,3], index: 7, kind: input, shape index: {}]
  %s8 = inlined_call_operand.vmem [shape: f32[1,3], index: 8, kind: input, shape index: {}]
  %s9 = inlined_call_operand.vmem [shape: f32[4,8,16,5], index: 9, kind: output, shape index: {}]
  %s10 = sld [smem:[#allocation0]]
  $region69: #{conv_our_d_forward.1} parent=0
    _
  %s12 = ssub.s32 1, %s10
  %s13 = scalar_select 0, %s12, %s10
  loop: start=0, step=1, limit=6
  $region2: #{conv_our_d_forward.1} parent=0 // loop_pre_header
    _
  $region3: #{conv_our_d_forward.1} parent=0 // loop_header
    %s15 = sphi 0, %s19
    %p16 = scmp.ge.s32.totalorder %s15, 6
    %s25 = sphi 0, %s27
    %s28 = sphi 0, %s25
    %s29 = sphi 0, %s28
    %s45 = sphi 0, %s29
    %s49 = sphi 0, %s49
    %s51 = sphi 0, %s49
    %s52 = sphi 0, %s51
    %s66 = sphi 0, %s52
    %s70 = sphi 0, %s70
    %s72 = sphi 0, %s70
    %s73 = sphi 0, %s72
    %s87 = sphi 0, %s73
    %s91 = sphi 0, %s91
    %s93 = sphi 0, %s91
    %s94 = sphi 0, %s93
    %s108 = sphi 0, %s94
    %s112 = sphi 0, %s112
    %s114 = sphi 0, %s112
    %s115 = sphi 0, %s114
    %s129 = sphi 0, %s115
    %s133 = sphi 0, %s133
    %s135 = sphi 0, %s133
    %s136 = sphi 0, %s135
    %s150 = sphi 0, %s136
    %s154 = sphi 0, %s154
    %s156 = sphi 0, %s154
    %s157 = sphi 0, %s156
    %s171 = sphi 0, %s157
    %s175 = sphi 0, %s175
    %s177 = sphi 0, %s175
    %s178 = sphi 0, %s177
    %s192 = sphi 0, %s178
    %s196 = sphi 0, %s196
    %s198 = sphi 0, %s196
    %s199 = sphi 0, %s198
    %s213 = sphi 0, %s199
    %s219 = sphi 0, %s221
    %s222 = sphi 0, %s219
    %s223 = sphi 0, %s222
    %s239 = sphi 0, %s223
  $region4: #{conv_our_d_forward.1} parent=0 // loop_header_branch
    %18 = sbr.rel (%p16) target = $region8
  $region5: #{conv_our_d_forward.1} parent=0 // loop_body
    %s20 = ssub.s32 %s15, 1
    %s21 = ssub.s32 %s15, 2
    %s22 = sadd.s32 %s15, 1
    %s23 = ssub.s32 %s15, %s22
    %p24 = scmp.eq.s32.totalorder %s23, 0
    %s26 = sadd.s32 %s25, 1
    %s27 = scalar_select %p24, %s25, %s26
    %p30 = pneg %p24
    %p31 = scmp.eq.s32.totalorder %s15, 3
    %p32 = por %p30, %p31
    %p33 = scmp.ne.s32.totalorder %s25, %s28
    %p34 = scmp.eq.s32.totalorder %s15, 0
    %p35 = por %p33, %p34
    %p36 = scmp.ne.s32.totalorder %s25, %s28
    %p37 = scmp.eq.s32.totalorder %s20, 3
    %p38 = por %p36, %p37
    %p39 = scmp.ne.s32.totalorder %s28, %s29
    %p40 = scmp.eq.s32.totalorder %s20, 0
    %p41 = por %p39, %p40
    %p42 = scmp.ne.s32.totalorder %s28, %s29
    %p43 = scmp.eq.s32.totalorder %s21, 3
    %p44 = por %p42, %p43
    %p46 = scmp.ne.s32.totalorder %s29, %s45
    %p47 = scmp.eq.s32.totalorder %s21, 0
    %p48 = por %p46, %p47
    %s50 = sadd.s32 %s49, 1
    %p53 = scmp.eq.s32.totalorder %s15, 3
    %p54 = scmp.ne.s32.totalorder %s49, %s51
    %p55 = scmp.eq.s32.totalorder %s15, 0
    %p56 = por %p54, %p55
    %p57 = scmp.ne.s32.totalorder %s49, %s51
    %p58 = scmp.eq.s32.totalorder %s20, 3
    %p59 = por %p57, %p58
    %p60 = scmp.ne.s32.totalorder %s51, %s52
    %p61 = scmp.eq.s32.totalorder %s20, 0
    %p62 = por %p60, %p61
    %p63 = scmp.ne.s32.totalorder %s51, %s52
    %p64 = scmp.eq.s32.totalorder %s21, 3
    %p65 = por %p63, %p64
    %p67 = scmp.ne.s32.totalorder %s52, %s66
    %p68 = scmp.eq.s32.totalorder %s21, 0
    %p69 = por %p67, %p68
    %s71 = sadd.s32 %s70, 1
    %p74 = scmp.eq.s32.totalorder %s15, 3
    %p75 = scmp.ne.s32.totalorder %s70, %s72
    %p76 = scmp.eq.s32.totalorder %s15, 0
    %p77 = por %p75, %p76
    %p78 = scmp.ne.s32.totalorder %s70, %s72
    %p79 = scmp.eq.s32.totalorder %s20, 3
    %p80 = por %p78, %p79
    %p81 = scmp.ne.s32.totalorder %s72, %s73
    %p82 = scmp.eq.s32.totalorder %s20, 0
    %p83 = por %p81, %p82
    %p84 = scmp.ne.s32.totalorder %s72, %s73
    %p85 = scmp.eq.s32.totalorder %s21, 3
    %p86 = por %p84, %p85
    %p88 = scmp.ne.s32.totalorder %s73, %s87
    %p89 = scmp.eq.s32.totalorder %s21, 0
    %p90 = por %p88, %p89
    %s92 = sadd.s32 %s91, 1
    %p95 = scmp.eq.s32.totalorder %s15, 3
    %p96 = scmp.ne.s32.totalorder %s91, %s93
    %p97 = scmp.eq.s32.totalorder %s15, 0
    %p98 = por %p96, %p97
    %p99 = scmp.ne.s32.totalorder %s91, %s93
    %p100 = scmp.eq.s32.totalorder %s20, 3
    %p101 = por %p99, %p100
    %p102 = scmp.ne.s32.totalorder %s93, %s94
    %p103 = scmp.eq.s32.totalorder %s20, 0
    %p104 = por %p102, %p103
    %p105 = scmp.ne.s32.totalorder %s93, %s94
    %p106 = scmp.eq.s32.totalorder %s21, 3
    %p107 = por %p105, %p106
    %p109 = scmp.ne.s32.totalorder %s94, %s108
    %p110 = scmp.eq.s32.totalorder %s21, 0
    %p111 = por %p109, %p110
    %s113 = sadd.s32 %s112, 1
    %p116 = scmp.eq.s32.totalorder %s15, 3
    %p117 = scmp.ne.s32.totalorder %s112, %s114
    %p118 = scmp.eq.s32.totalorder %s15, 0
    %p119 = por %p117, %p118
    %p120 = scmp.ne.s32.totalorder %s112, %s114
    %p121 = scmp.eq.s32.totalorder %s20, 3
    %p122 = por %p120, %p121
    %p123 = scmp.ne.s32.totalorder %s114, %s115
    %p124 = scmp.eq.s32.totalorder %s20, 0
    %p125 = por %p123, %p124
    %p126 = scmp.ne.s32.totalorder %s114, %s115
    %p127 = scmp.eq.s32.totalorder %s21, 3
    %p128 = por %p126, %p127
    %p130 = scmp.ne.s32.totalorder %s115, %s129
    %p131 = scmp.eq.s32.totalorder %s21, 0
    %p132 = por %p130, %p131
    %s134 = sadd.s32 %s133, 1
    %p137 = scmp.eq.s32.totalorder %s15, 3
    %p138 = scmp.ne.s32.totalorder %s133, %s135
    %p139 = scmp.eq.s32.totalorder %s15, 0
    %p140 = por %p138, %p139
    %p141 = scmp.ne.s32.totalorder %s133, %s135
    %p142 = scmp.eq.s32.totalorder %s20, 3
    %p143 = por %p141, %p142
    %p144 = scmp.ne.s32.totalorder %s135, %s136
    %p145 = scmp.eq.s32.totalorder %s20, 0
    %p146 = por %p144, %p145
    %p147 = scmp.ne.s32.totalorder %s135, %s136
    %p148 = scmp.eq.s32.totalorder %s21, 3
    %p149 = por %p147, %p148
    %p151 = scmp.ne.s32.totalorder %s136, %s150
    %p152 = scmp.eq.s32.totalorder %s21, 0
    %p153 = por %p151, %p152
    %s155 = sadd.s32 %s154, 1
    %p158 = scmp.eq.s32.totalorder %s15, 3
    %p159 = scmp.ne.s32.totalorder %s154, %s156
    %p160 = scmp.eq.s32.totalorder %s15, 0
    %p161 = por %p159, %p160
    %p162 = scmp.ne.s32.totalorder %s154, %s156
    %p163 = scmp.eq.s32.totalorder %s20, 3
    %p164 = por %p162, %p163
    %p165 = scmp.ne.s32.totalorder %s156, %s157
    %p166 = scmp.eq.s32.totalorder %s20, 0
    %p167 = por %p165, %p166
    %p168 = scmp.ne.s32.totalorder %s156, %s157
    %p169 = scmp.eq.s32.totalorder %s21, 3
    %p170 = por %p168, %p169
    %p172 = scmp.ne.s32.totalorder %s157, %s171
    %p173 = scmp.eq.s32.totalorder %s21, 0
    %p174 = por %p172, %p173
    %s176 = sadd.s32 %s175, 1
    %p179 = scmp.eq.s32.totalorder %s15, 3
    %p180 = scmp.ne.s32.totalorder %s175, %s177
    %p181 = scmp.eq.s32.totalorder %s15, 0
    %p182 = por %p180, %p181
    %p183 = scmp.ne.s32.totalorder %s175, %s177
    %p184 = scmp.eq.s32.totalorder %s20, 3
    %p185 = por %p183, %p184
    %p186 = scmp.ne.s32.totalorder %s177, %s178
    %p187 = scmp.eq.s32.totalorder %s20, 0
    %p188 = por %p186, %p187
    %p189 = scmp.ne.s32.totalorder %s177, %s178
    %p190 = scmp.eq.s32.totalorder %s21, 3
    %p191 = por %p189, %p190
    %p193 = scmp.ne.s32.totalorder %s178, %s192
    %p194 = scmp.eq.s32.totalorder %s21, 0
    %p195 = por %p193, %p194
    %s197 = sadd.s32 %s196, 1
    %p200 = scmp.eq.s32.totalorder %s15, 3
    %p201 = scmp.ne.s32.totalorder %s196, %s198
    %p202 = scmp.eq.s32.totalorder %s15, 0
    %p203 = por %p201, %p202
    %p204 = scmp.ne.s32.totalorder %s196, %s198
    %p205 = scmp.eq.s32.totalorder %s20, 3
    %p206 = por %p204, %p205
    %p207 = scmp.ne.s32.totalorder %s198, %s199
    %p208 = scmp.eq.s32.totalorder %s20, 0
    %p209 = por %p207, %p208
    %p210 = scmp.ne.s32.totalorder %s198, %s199
    %p211 = scmp.eq.s32.totalorder %s21, 3
    %p212 = por %p210, %p211
    %p214 = scmp.ne.s32.totalorder %s199, %s213
    %p215 = scmp.eq.s32.totalorder %s21, 0
    %p216 = por %p214, %p215
    %s217 = ssub.s32 %s15, %s22
    %p218 = scmp.eq.s32.totalorder %s217, 0
    %s220 = sadd.s32 %s219, 1
    %s221 = scalar_select %p218, %s219, %s220
    %p224 = pneg %p218
    %p225 = scmp.eq.s32.totalorder %s15, 3
    %p226 = por %p224, %p225
    %p227 = scmp.ne.s32.totalorder %s219, %s222
    %p228 = scmp.eq.s32.totalorder %s15, 0
    %p229 = por %p227, %p228
    %p230 = scmp.ne.s32.totalorder %s219, %s222
    %p231 = scmp.eq.s32.totalorder %s20, 3
    %p232 = por %p230, %p231
    %p233 = scmp.ne.s32.totalorder %s222, %s223
    %p234 = scmp.eq.s32.totalorder %s20, 0
    %p235 = por %p233, %p234
    %p236 = scmp.ne.s32.totalorder %s222, %s223
    %p237 = scmp.eq.s32.totalorder %s21, 3
    %p238 = por %p236, %p237
    %p240 = scmp.ne.s32.totalorder %s223, %s239
    %p241 = scmp.eq.s32.totalorder %s21, 0
    %p242 = por %p240, %p241
    %p243 = scmp.le.s32.totalorder 1, %s15
    %p244 = scmp.lt.s32.totalorder %s15, 5
    %p245 = pnand %p243, %p244
    %p246 = pneg %p245
    // Predicated region
    $region9: #{conv_our_d_forward.1} parent=5 // pred_check
      _
    $region10: #{conv_our_d_forward.1} parent=5 // pred_check_branch
      %248 = sbr.rel (%p245) target = $region12
    $region11: #{conv_our_d_forward.1} parent=5 // pred_region
      %s249 = ssub.s32 %s15, 1
      // Predicated region
      $region13: #{conv_our_d_forward.1} parent=11 // pred_check
        %p250 = pneg %p62
      $region14: #{conv_our_d_forward.1} parent=11 // pred_check_branch
        %252 = sbr.rel (%p250) target = $region16
      $region15: #{conv_our_d_forward.1} parent=11 // pred_region
        _
      $region16: #{conv_our_d_forward.1} parent=11 // pred_fallthru
        _
      // Predicated region
      $region17: #{conv_our_d_forward.1} parent=11 // pred_check
        %p253 = pneg %p83
      $region18: #{conv_our_d_forward.1} parent=11 // pred_check_branch
        %255 = sbr.rel (%p253) target = $region20
      $region19: #{conv_our_d_forward.1} parent=11 // pred_region
        _
      $region20: #{conv_our_d_forward.1} parent=11 // pred_fallthru
        _
      // Predicated region
      $region21: #{conv_our_d_forward.1} parent=11 // pred_check
        %p256 = pneg %p104
      $region22: #{conv_our_d_forward.1} parent=11 // pred_check_branch
        %258 = sbr.rel (%p256) target = $region24
      $region23: #{conv_our_d_forward.1} parent=11 // pred_region
        _
      $region24: #{conv_our_d_forward.1} parent=11 // pred_fallthru
        _
      // Predicated region
      $region25: #{conv_our_d_forward.1} parent=11 // pred_check
        %p259 = pneg %p125
      $region26: #{conv_our_d_forward.1} parent=11 // pred_check_branch
        %261 = sbr.rel (%p259) target = $region28
      $region27: #{conv_our_d_forward.1} parent=11 // pred_region
        _
      $region28: #{conv_our_d_forward.1} parent=11 // pred_fallthru
        _
      // Predicated region
      $region29: #{conv_our_d_forward.1} parent=11 // pred_check
        %p262 = pneg %p146
      $region30: #{conv_our_d_forward.1} parent=11 // pred_check_branch
        %264 = sbr.rel (%p262) target = $region32
      $region31: #{conv_our_d_forward.1} parent=11 // pred_region
        _
      $region32: #{conv_our_d_forward.1} parent=11 // pred_fallthru
        _
      // Predicated region
      $region33: #{conv_our_d_forward.1} parent=11 // pred_check
        %p265 = pneg %p167
      $region34: #{conv_our_d_forward.1} parent=11 // pred_check_branch
        %267 = sbr.rel (%p265) target = $region36
      $region35: #{conv_our_d_forward.1} parent=11 // pred_region
        _
      $region36: #{conv_our_d_forward.1} parent=11 // pred_fallthru
        _
      // Predicated region
      $region37: #{conv_our_d_forward.1} parent=11 // pred_check
        %p268 = pneg %p188
      $region38: #{conv_our_d_forward.1} parent=11 // pred_check_branch
        %270 = sbr.rel (%p268) target = $region40
      $region39: #{conv_our_d_forward.1} parent=11 // pred_region
        _
      $region40: #{conv_our_d_forward.1} parent=11 // pred_fallthru
        _
      // Predicated region
      $region41: #{conv_our_d_forward.1} parent=11 // pred_check
        %p271 = pneg %p209
      $region42: #{conv_our_d_forward.1} parent=11 // pred_check_branch
        %273 = sbr.rel (%p271) target = $region44
      $region43: #{conv_our_d_forward.1} parent=11 // pred_region
        _
      $region44: #{conv_our_d_forward.1} parent=11 // pred_fallthru
        _
    $region12: #{conv_our_d_forward.1} parent=5 // pred_fallthru
      _
    %p274 = scmp.lt.s32.totalorder %s15, 4
    // Predicated region
    $region45: #{conv_our_d_forward.1} parent=5 // pred_check
      %p275 = pneg %p274
    $region46: #{conv_our_d_forward.1} parent=5 // pred_check_branch
      %277 = sbr.rel (%p275) target = $region48
    $region47: #{conv_our_d_forward.1} parent=5 // pred_region
      // Predicated region
      $region49: #{conv_our_d_forward.1} parent=47 // pred_check
        %p278 = pneg %p35
      $region50: #{conv_our_d_forward.1} parent=47 // pred_check_branch
        %280 = sbr.rel (%p278) target = $region52
      $region51: #{conv_our_d_forward.1} parent=47 // pred_region
        %p281 = scmp.lt.s32.totalorder %s15, 3
        %s282 = scalar_select %p281, %s15, 3
        %s283 = smul.addr %s282, 72
        %s284 = smul.addr %s283, 4
        %s285 = scalar_lea.vmem %s0, %s284
      $region52: #{conv_our_d_forward.1} parent=47 // pred_fallthru
        _
    $region48: #{conv_our_d_forward.1} parent=5 // pred_fallthru
      _
    %p286 = scmp.le.s32.totalorder 1, %s15
    %p287 = scmp.lt.s32.totalorder %s15, 5
    %p288 = pnand %p286, %p287
    %p289 = pneg %p288
    // Predicated region
    $region53: #{conv_our_d_forward.1} parent=5 // pred_check
      _
    $region54: #{conv_our_d_forward.1} parent=5 // pred_check_branch
      %291 = sbr.rel (%p288) target = $region56
    $region55: #{conv_our_d_forward.1} parent=5 // pred_region
      %s292 = ssub.s32 %s15, 1
      %p293 = scmp.lt.s32.totalorder %s20, 3
      %s294 = scalar_select %p293, %s20, 3
      %s295 = smul.addr %s294, 72
      %s296 = smul.addr %s295, 4
      %s297 = scalar_lea.vmem %s0, %s296
      %p298 = pneg %p41
      %p299 = pneg %p38
      %p300 = pneg %p62
      %p301 = pneg %p59
      %p302 = pneg %p83
      %p303 = pneg %p80
      %p304 = pneg %p104
      %p305 = pneg %p101
      %p306 = pneg %p125
      %p307 = pneg %p122
      %p308 = pneg %p146
      %p309 = pneg %p143
      %p310 = pneg %p167
      %p311 = pneg %p164
      %p312 = pneg %p188
      %p313 = pneg %p185
      %p314 = pneg %p209
      %p315 = pneg %p206
      %p316 = pneg %p235
      %p317 = pneg %p232
      %p318 = scmp.lt.s32.totalorder %s20, 3
      %s319 = scalar_select %p318, %s20, 3
      %s320 = smul.addr %s319, 16
      %s321 = smul.addr %s320, 8
      %s322 = scalar_lea.vmem %s9, %s321
      %p323 = scmp.lt.s32.totalorder %s20, 3
      %s324 = scalar_select %p323, %s20, 3
      %s325 = smul.addr %s324, 72
      %s326 = smul.addr %s325, 4
      %s327 = scalar_lea.vmem %s0, %s326
      %p328 = scmp.lt.s32.totalorder %s20, 3
      %s329 = scalar_select %p328, %s20, 3
      %s330 = smul.addr %s329, 16
      %s331 = smul.addr %s330, 8
      %s332 = scalar_lea.vmem %s9, %s331
      %s334 = scalar_lea.vmem %s327, 80
      %v335 = vld [vmem:[%s334] sm:$0xf]
      %v336 = vld [vmem:[%s334 + $0x4] sm:$0xf]
      %v337 = vld [vmem:[%s334 + $0x8] sm:$0xf]
      %v338 = vld [vmem:[%s334 + $0xc] sm:$0x1]
      %v339 = vld [vmem:[%s334 + $0x10] sm:$0xf]
      %v340 = vld [vmem:[%s334 + $0x14] sm:$0xf]
      %v341 = vld [vmem:[%s334 + $0x18] sm:$0xf]
      %v342 = vld [vmem:[%s334 + $0x1c] sm:$0x1]
      %v343 = vld [vmem:[%s334 + $0x20] sm:$0xf]
      %v344 = vld [vmem:[%s334 + $0x24] sm:$0xf]
      %v345 = vld [vmem:[%s334 + $0x28] sm:$0xf]
      %v346 = vld [vmem:[%s334 + $0x2c] sm:$0x1]
      %v347 = vld [vmem:[%s334 + $0x30] sm:$0xf]
      %v348 = vld [vmem:[%s334 + $0x34] sm:$0xf]
      %v349 = vld [vmem:[%s334 + $0x38] sm:$0xf]
      %v350 = vld [vmem:[%s334 + $0x3c] sm:$0x1]
      %v351 = vld [vmem:[%s334 + $0x40] sm:$0xf]
      %v352 = vld [vmem:[%s334 + $0x44] sm:$0xf]
      %v353 = vld [vmem:[%s334 + $0x48] sm:$0xf]
      %v354 = vld [vmem:[%s334 + $0x4c] sm:$0x1]
      %v355 = vld [vmem:[%s334 + $0x50] sm:$0xf]
      %v356 = vld [vmem:[%s334 + $0x54] sm:$0xf]
      %v357 = vld [vmem:[%s334 + $0x58] sm:$0xf]
      %v358 = vld [vmem:[%s334 + $0x5c] sm:$0x1]
      %v359 = vld [vmem:[%s334 + $0x60] sm:$0xf]
      %v360 = vld [vmem:[%s334 + $0x64] sm:$0xf]
      %v361 = vld [vmem:[%s334 + $0x68] sm:$0xf]
      %v362 = vld [vmem:[%s334 + $0x6c] sm:$0x1]
      %v363 = vld [vmem:[%s334 + $0x70] sm:$0xf]
      %v364 = vld [vmem:[%s334 + $0x74] sm:$0xf]
      %v365 = vld [vmem:[%s334 + $0x78] sm:$0xf]
      %v366 = vld [vmem:[%s334 + $0x7c] sm:$0x1]
      %vm367 = vsmask.f32 1280
      %vm368 = vsmask.f32 5392
      %vm369 = vmor %vm367, %vm368
      %v371 = vshrl.u32 %v335, 16
      %v373 = vrot.slane %v371, 6
      %v374 = vshll.u32 %v335, 16
      %v376 = vrot.slane %v374, 7
      %v377 = vor.u32 %v373, %v376
      %v378 = vrot.slane %v377, 4
      %v380 = vshrl.u32 %v336, 16
      %v382 = vrot.slane %v380, 6
      %v383 = vshll.u32 %v336, 16
      %v385 = vrot.slane %v383, 7
      %v386 = vor.u32 %v382, %v385
      %v387 = vsel %vm369, %v378, %v386
      %v388 = vrot.slane %v386, 4
      %v390 = vshrl.u32 %v337, 16
      %v392 = vrot.slane %v390, 6
      %v393 = vshll.u32 %v337, 16
      %v395 = vrot.slane %v393, 7
      %v396 = vor.u32 %v392, %v395
      %v397 = vsel %vm369, %v388, %v396
      %v399 = vshrl.u32 %v339, 16
      %v401 = vrot.slane %v399, 6
      %v402 = vshll.u32 %v339, 16
      %v404 = vrot.slane %v402, 7
      %v405 = vor.u32 %v401, %v404
      %v406 = vrot.slane %v405, 4
      %v408 = vshrl.u32 %v340, 16
      %v410 = vrot.slane %v408, 6
      %v411 = vshll.u32 %v340, 16
      %v413 = vrot.slane %v411, 7
      %v414 = vor.u32 %v410, %v413
      %v415 = vsel %vm369, %v406, %v414
      %v416 = vrot.slane %v414, 4
      %v418 = vshrl.u32 %v341, 16
      %v420 = vrot.slane %v418, 6
      %v421 = vshll.u32 %v341, 16
      %v423 = vrot.slane %v421, 7
      %v424 = vor.u32 %v420, %v423
      %v425 = vsel %vm369, %v416, %v424
      %v427 = vshrl.u32 %v343, 16
      %v429 = vrot.slane %v427, 6
      %v430 = vshll.u32 %v343, 16
      %v432 = vrot.slane %v430, 7
      %v433 = vor.u32 %v429, %v432
      %v434 = vrot.slane %v433, 4
      %v436 = vshrl.u32 %v344, 16
      %v438 = vrot.slane %v436, 6
      %v439 = vshll.u32 %v344, 16
      %v441 = vrot.slane %v439, 7
      %v442 = vor.u32 %v438, %v441
      %v443 = vsel %vm369, %v434, %v442
      %v444 = vrot.slane %v442, 4
      %v446 = vshrl.u32 %v345, 16
      %v448 = vrot.slane %v446, 6
      %v449 = vshll.u32 %v345, 16
      %v451 = vrot.slane %v449, 7
      %v452 = vor.u32 %v448, %v451
      %v453 = vsel %vm369, %v444, %v452
      %v455 = vshrl.u32 %v347, 16
      %v457 = vrot.slane %v455, 6
      %v458 = vshll.u32 %v347, 16
      %v460 = vrot.slane %v458, 7
      %v461 = vor.u32 %v457, %v460
      %v462 = vrot.slane %v461, 4
      %v464 = vshrl.u32 %v348, 16
      %v466 = vrot.slane %v464, 6
      %v467 = vshll.u32 %v348, 16
      %v469 = vrot.slane %v467, 7
      %v470 = vor.u32 %v466, %v469
      %v471 = vsel %vm369, %v462, %v470
      %v472 = vrot.slane %v470, 4
      %v474 = vshrl.u32 %v349, 16
      %v476 = vrot.slane %v474, 6
      %v477 = vshll.u32 %v349, 16
      %v479 = vrot.slane %v477, 7
      %v480 = vor.u32 %v476, %v479
      %v481 = vsel %vm369, %v472, %v480
      %v483 = vshrl.u32 %v351, 16
      %v485 = vrot.slane %v483, 6
      %v486 = vshll.u32 %v351, 16
      %v488 = vrot.slane %v486, 7
      %v489 = vor.u32 %v485, %v488
      %v490 = vrot.slane %v489, 4
      %v492 = vshrl.u32 %v352, 16
      %v494 = vrot.slane %v492, 6
      %v495 = vshll.u32 %v352, 16
      %v497 = vrot.slane %v495, 7
      %v498 = vor.u32 %v494, %v497
      %v499 = vsel %vm369, %v490, %v498
      %v500 = vrot.slane %v498, 4
      %v502 = vshrl.u32 %v353, 16
      %v504 = vrot.slane %v502, 6
      %v505 = vshll.u32 %v353, 16
      %v507 = vrot.slane %v505, 7
      %v508 = vor.u32 %v504, %v507
      %v509 = vsel %vm369, %v500, %v508
      %v511 = vshrl.u32 %v355, 16
      %v513 = vrot.slane %v511, 6
      %v514 = vshll.u32 %v355, 16
      %v516 = vrot.slane %v514, 7
      %v517 = vor.u32 %v513, %v516
      %v518 = vrot.slane %v517, 4
      %v520 = vshrl.u32 %v356, 16
      %v522 = vrot.slane %v520, 6
      %v523 = vshll.u32 %v356, 16
      %v525 = vrot.slane %v523, 7
      %v526 = vor.u32 %v522, %v525
      %v527 = vsel %vm369, %v518, %v526
      %v528 = vrot.slane %v526, 4
      %v530 = vshrl.u32 %v357, 16
      %v532 = vrot.slane %v530, 6
      %v533 = vshll.u32 %v357, 16
      %v535 = vrot.slane %v533, 7
      %v536 = vor.u32 %v532, %v535
      %v537 = vsel %vm369, %v528, %v536
      %v539 = vshrl.u32 %v359, 16
      %v541 = vrot.slane %v539, 6
      %v542 = vshll.u32 %v359, 16
      %v544 = vrot.slane %v542, 7
      %v545 = vor.u32 %v541, %v544
      %v546 = vrot.slane %v545, 4
      %v548 = vshrl.u32 %v360, 16
      %v550 = vrot.slane %v548, 6
      %v551 = vshll.u32 %v360, 16
      %v553 = vrot.slane %v551, 7
      %v554 = vor.u32 %v550, %v553
      %v555 = vsel %vm369, %v546, %v554
      %v556 = vrot.slane %v554, 4
      %v558 = vshrl.u32 %v361, 16
      %v560 = vrot.slane %v558, 6
      %v561 = vshll.u32 %v361, 16
      %v563 = vrot.slane %v561, 7
      %v564 = vor.u32 %v560, %v563
      %v565 = vsel %vm369, %v556, %v564
      %v567 = vshrl.u32 %v363, 16
      %v569 = vrot.slane %v567, 6
      %v570 = vshll.u32 %v363, 16
      %v572 = vrot.slane %v570, 7
      %v573 = vor.u32 %v569, %v572
      %v574 = vrot.slane %v573, 4
      %v576 = vshrl.u32 %v364, 16
      %v578 = vrot.slane %v576, 6
      %v579 = vshll.u32 %v364, 16
      %v581 = vrot.slane %v579, 7
      %v582 = vor.u32 %v578, %v581
      %v583 = vsel %vm369, %v574, %v582
      %v584 = vrot.slane %v582, 4
      %v586 = vshrl.u32 %v365, 16
      %v588 = vrot.slane %v586, 6
      %v589 = vshll.u32 %v365, 16
      %v591 = vrot.slane %v589, 7
      %v592 = vor.u32 %v588, %v591
      %v593 = vsel %vm369, %v584, %v592
      %v594 = vld [vmem:[%s1] sm:$0x3]
      %v595 = vunpack.c.l.b16 %v387
      %v596 = vunpack.c.l.b16 %v397
      %v597 = vunpack.c.l.b16 %v415
      %v598 = vunpack.c.l.b16 %v425
      %v599 = vunpack.c.l.b16 %v443
      %v600 = vunpack.c.l.b16 %v453
      %v601 = vunpack.c.l.b16 %v471
      %v602 = vunpack.c.l.b16 %v481
      %v603 = vunpack.c.l.b16 %v499
      %v604 = vunpack.c.l.b16 %v509
      %v605 = vunpack.c.l.b16 %v527
      %v606 = vunpack.c.l.b16 %v537
      %v607 = vunpack.c.l.b16 %v555
      %v608 = vunpack.c.l.b16 %v565
      %v609 = vunpack.c.l.b16 %v583
      %v610 = vunpack.c.l.b16 %v593
      %v611 = vpack.c.b16 %v596, %v595
      %v612 = vpack.c.b16 %v598, %v597
      %v613 = vpack.c.b16 %v600, %v599
      %v614 = vpack.c.b16 %v602, %v601
      %v615 = vpack.c.b16 %v604, %v603
      %v616 = vpack.c.b16 %v606, %v605
      %v617 = vpack.c.b16 %v608, %v607
      %v618 = vpack.c.b16 %v610, %v609
      %vm619 = vcmask 31744
      %v621 = vsel %vm619, %v611, 0
      %v624 = vsel %vm619, %v612, 0
      %v627 = vsel %vm619, %v613, 0
      %v630 = vsel %vm619, %v614, 0
      %v633 = vsel %vm619, %v615, 0
      %v636 = vsel %vm619, %v616, 0
      %v639 = vsel %vm619, %v617, 0
      %v642 = vsel %vm619, %v618, 0
      %vm644 = vcmask 1041408
      %v646 = vsel %vm644, %v594, 0
      %648 = vmatprep.subr.bf16.mxu0 0
      %649 = vmatpush1.bf16.msra.mxu0 0
      %650 = vmatprep.subr.bf16.mxu0 0
      %651 = vmatpush1.bf16.msra.mxu0 0
      %652 = vmatprep.subr.bf16.mxu0 0
      %653 = vmatpush1.bf16.msra.mxu0 0
      %654 = vmatprep.subr.bf16.mxu0 0
      %655 = vmatpush1.bf16.msra.mxu0 0
      %656 = vmatprep.subr.bf16.mxu0 0
      %657 = vmatpush1.bf16.msra.mxu0 0
      %658 = vmatprep.subr.bf16.mxu0 0
      %659 = vmatpush1.bf16.msra.mxu0 0
      %660 = vmatprep.subr.bf16.mxu0 0
      %661 = vmatpush1.bf16.msra.mxu0 0
      %662 = vmatprep.subr.bf16.mxu0 0
      %663 = vmatpush1.bf16.msra.mxu0 %v646
      %664 = vmatprep.subr.bf16.mxu0 0
      %665 = vmatpush2.bf16.msra.mxu0 0
      %666 = vmatprep.subr.bf16.mxu0 0
      %667 = vmatpush2.bf16.msra.mxu0 0
      %668 = vmatprep.subr.bf16.mxu0 0
      %669 = vmatpush2.bf16.msra.mxu0 0
      %670 = vmatprep.subr.bf16.mxu0 0
      %671 = vmatpush2.bf16.msra.mxu0 0
      %672 = vmatprep.subr.bf16.mxu0 0
      %673 = vmatpush2.bf16.msra.mxu0 0
      %674 = vmatprep.subr.bf16.mxu0 0
      %675 = vmatpush2.bf16.msra.mxu0 0
      %676 = vmatprep.subr.bf16.mxu0 0
      %677 = vmatpush2.bf16.msra.mxu0 0
      %678 = vmatprep.subr.bf16.mxu0 0
      %679 = vmatpush2.bf16.msra.mxu0 0
      %680 = vmatprep.mubr.bf16.mxu0 0
      %681 = vmatmul.mubr.bf16.gmra.mxu0 %v621
      %v682 = vpop.f32.mrf.mxu0
      %v683 = vadd.f32 0.0, %v682
      %v684 = vpop.f32.mrf.mxu0
      %v685 = vpop.f32.mrf.mxu0
      %v686 = vadd.f32 0.0, %v685
      %v687 = vpop.f32.mrf.mxu0
      %688 = vmatprep.mubr.bf16.mxu0 0
      %689 = vmatmul.mubr.bf16.gmra.mxu0 %v624
      %v690 = vpop.f32.mrf.mxu0
      %v691 = vadd.f32 0.0, %v690
      %v692 = vpop.f32.mrf.mxu0
      %v693 = vpop.f32.mrf.mxu0
      %v694 = vadd.f32 0.0, %v693
      %v695 = vpop.f32.mrf.mxu0
      %696 = vmatprep.mubr.bf16.mxu0 0
      %697 = vmatmul.mubr.bf16.gmra.mxu0 %v627
      %v698 = vpop.f32.mrf.mxu0
      %v699 = vadd.f32 0.0, %v698
      %v700 = vpop.f32.mrf.mxu0
      %v701 = vpop.f32.mrf.mxu0
      %v702 = vadd.f32 0.0, %v701
      %v703 = vpop.f32.mrf.mxu0
      %704 = vmatprep.mubr.bf16.mxu0 0
      %705 = vmatmul.mubr.bf16.gmra.mxu0 %v630
      %v706 = vpop.f32.mrf.mxu0
      %v707 = vadd.f32 0.0, %v706
      %v708 = vpop.f32.mrf.mxu0
      %v709 = vpop.f32.mrf.mxu0
      %v710 = vadd.f32 0.0, %v709
      %v711 = vpop.f32.mrf.mxu0
      %712 = vmatprep.mubr.bf16.mxu0 0
      %713 = vmatmul.mubr.bf16.gmra.mxu0 %v633
      %v714 = vpop.f32.mrf.mxu0
      %v715 = vadd.f32 0.0, %v714
      %v716 = vpop.f32.mrf.mxu0
      %v717 = vpop.f32.mrf.mxu0
      %v718 = vadd.f32 0.0, %v717
      %v719 = vpop.f32.mrf.mxu0
      %720 = vmatprep.mubr.bf16.mxu0 0
      %721 = vmatmul.mubr.bf16.gmra.mxu0 %v636
      %v722 = vpop.f32.mrf.mxu0
      %v723 = vadd.f32 0.0, %v722
      %v724 = vpop.f32.mrf.mxu0
      %v725 = vpop.f32.mrf.mxu0
      %v726 = vadd.f32 0.0, %v725
      %v727 = vpop.f32.mrf.mxu0
      %728 = vmatprep.mubr.bf16.mxu0 0
      %729 = vmatmul.mubr.bf16.gmra.mxu0 %v639
      %v730 = vpop.f32.mrf.mxu0
      %v731 = vadd.f32 0.0, %v730
      %v732 = vpop.f32.mrf.mxu0
      %v733 = vpop.f32.mrf.mxu0
      %v734 = vadd.f32 0.0, %v733
      %v735 = vpop.f32.mrf.mxu0
      %736 = vmatprep.mubr.bf16.mxu0 0
      %737 = vmatmul.mubr.bf16.gmra.mxu0 %v642
      %v738 = vpop.f32.mrf.mxu0
      %v739 = vadd.f32 0.0, %v738
      %v740 = vpop.f32.mrf.mxu0
      %v741 = vpop.f32.mrf.mxu0
      %v742 = vadd.f32 0.0, %v741
      %v743 = vpop.f32.mrf.mxu0
      %744 = vdwg.mxu0
      %s745 = scalar_lea.vmem %s327, 64
      %v746 = vld [vmem:[%s745] sm:$0xf]
      %v747 = vld [vmem:[%s745 + $0x4] sm:$0xf]
      %v748 = vld [vmem:[%s745 + $0x8] sm:$0xf]
      %v749 = vld [vmem:[%s745 + $0x10] sm:$0xf]
      %v750 = vld [vmem:[%s745 + $0x14] sm:$0xf]
      %v751 = vld [vmem:[%s745 + $0x18] sm:$0xf]
      %v752 = vld [vmem:[%s745 + $0x20] sm:$0xf]
      %v753 = vld [vmem:[%s745 + $0x24] sm:$0xf]
      %v754 = vld [vmem:[%s745 + $0x28] sm:$0xf]
      %v755 = vld [vmem:[%s745 + $0x30] sm:$0xf]
      %v756 = vld [vmem:[%s745 + $0x34] sm:$0xf]
      %v757 = vld [vmem:[%s745 + $0x38] sm:$0xf]
      %v758 = vld [vmem:[%s745 + $0x40] sm:$0xf]
      %v759 = vld [vmem:[%s745 + $0x44] sm:$0xf]
      %v760 = vld [vmem:[%s745 + $0x48] sm:$0xf]
      %v761 = vld [vmem:[%s745 + $0x50] sm:$0xf]
      %v762 = vld [vmem:[%s745 + $0x54] sm:$0xf]
      %v763 = vld [vmem:[%s745 + $0x58] sm:$0xf]
      %v764 = vld [vmem:[%s745 + $0x60] sm:$0xf]
      %v765 = vld [vmem:[%s745 + $0x64] sm:$0xf]
      %v766 = vld [vmem:[%s745 + $0x68] sm:$0xf]
      %v767 = vld [vmem:[%s745 + $0x70] sm:$0xf]
      %v768 = vld [vmem:[%s745 + $0x74] sm:$0xf]
      %v769 = vld [vmem:[%s745 + $0x78] sm:$0xf]
      %vm794 = vcmask 1041408
      %vm795 = vcmask 1045508
      %vm796 = vmor %vm794, %vm795
      %v797 = vrot.slane %v746, 6
      %v798 = vrot.slane %v797, 4
      %v799 = vrot.slane %v747, 6
      %v800 = vsel %vm796, %v798, %v799
      %v801 = vrot.slane %v799, 4
      %v802 = vrot.slane %v748, 6
      %v803 = vsel %vm796, %v801, %v802
      %v804 = vrot.slane %v749, 6
      %v805 = vrot.slane %v804, 4
      %v806 = vrot.slane %v750, 6
      %v807 = vsel %vm796, %v805, %v806
      %v808 = vrot.slane %v806, 4
      %v809 = vrot.slane %v751, 6
      %v810 = vsel %vm796, %v808, %v809
      %v811 = vrot.slane %v752, 6
      %v812 = vrot.slane %v811, 4
      %v813 = vrot.slane %v753, 6
      %v814 = vsel %vm796, %v812, %v813
      %v815 = vrot.slane %v813, 4
      %v816 = vrot.slane %v754, 6
      %v817 = vsel %vm796, %v815, %v816
      %v818 = vrot.slane %v755, 6
      %v819 = vrot.slane %v818, 4
      %v820 = vrot.slane %v756, 6
      %v821 = vsel %vm796, %v819, %v820
      %v822 = vrot.slane %v820, 4
      %v823 = vrot.slane %v757, 6
      %v824 = vsel %vm796, %v822, %v823
      %v825 = vrot.slane %v758, 6
      %v826 = vrot.slane %v825, 4
      %v827 = vrot.slane %v759, 6
      %v828 = vsel %vm796, %v826, %v827
      %v829 = vrot.slane %v827, 4
      %v830 = vrot.slane %v760, 6
      %v831 = vsel %vm796, %v829, %v830
      %v832 = vrot.slane %v761, 6
      %v833 = vrot.slane %v832, 4
      %v834 = vrot.slane %v762, 6
      %v835 = vsel %vm796, %v833, %v834
      %v836 = vrot.slane %v834, 4
      %v837 = vrot.slane %v763, 6
      %v838 = vsel %vm796, %v836, %v837
      %v839 = vrot.slane %v764, 6
      %v840 = vrot.slane %v839, 4
      %v841 = vrot.slane %v765, 6
      %v842 = vsel %vm796, %v840, %v841
      %v843 = vrot.slane %v841, 4
      %v844 = vrot.slane %v766, 6
      %v845 = vsel %vm796, %v843, %v844
      %v846 = vrot.slane %v767, 6
      %v847 = vrot.slane %v846, 4
      %v848 = vrot.slane %v768, 6
      %v849 = vsel %vm796, %v847, %v848
      %v850 = vrot.slane %v848, 4
      %v851 = vrot.slane %v769, 6
      %v852 = vsel %vm796, %v850, %v851
      %v854 = vshrl.u32 %v746, 16
      %v856 = vrot.slane %v854, 6
      %v857 = vshll.u32 %v746, 16
      %v859 = vrot.slane %v857, 7
      %v860 = vor.u32 %v856, %v859
      %v861 = vrot.slane %v860, 4
      %v863 = vshrl.u32 %v747, 16
      %v865 = vrot.slane %v863, 6
      %v866 = vshll.u32 %v747, 16
      %v868 = vrot.slane %v866, 7
      %v869 = vor.u32 %v865, %v868
      %v870 = vsel %vm369, %v861, %v869
      %v871 = vrot.slane %v869, 4
      %v873 = vshrl.u32 %v748, 16
      %v875 = vrot.slane %v873, 6
      %v876 = vshll.u32 %v748, 16
      %v878 = vrot.slane %v876, 7
      %v879 = vor.u32 %v875, %v878
      %v880 = vsel %vm369, %v871, %v879
      %v882 = vshrl.u32 %v749, 16
      %v884 = vrot.slane %v882, 6
      %v885 = vshll.u32 %v749, 16
      %v887 = vrot.slane %v885, 7
      %v888 = vor.u32 %v884, %v887
      %v889 = vrot.slane %v888, 4
      %v891 = vshrl.u32 %v750, 16
      %v893 = vrot.slane %v891, 6
      %v894 = vshll.u32 %v750, 16
      %v896 = vrot.slane %v894, 7
      %v897 = vor.u32 %v893, %v896
      %v898 = vsel %vm369, %v889, %v897
      %v899 = vrot.slane %v897, 4
      %v901 = vshrl.u32 %v751, 16
      %v903 = vrot.slane %v901, 6
      %v904 = vshll.u32 %v751, 16
      %v906 = vrot.slane %v904, 7
      %v907 = vor.u32 %v903, %v906
      %v908 = vsel %vm369, %v899, %v907
      %v910 = vshrl.u32 %v752, 16
      %v912 = vrot.slane %v910, 6
      %v913 = vshll.u32 %v752, 16
      %v915 = vrot.slane %v913, 7
      %v916 = vor.u32 %v912, %v915
      %v917 = vrot.slane %v916, 4
      %v919 = vshrl.u32 %v753, 16
      %v921 = vrot.slane %v919, 6
      %v922 = vshll.u32 %v753, 16
      %v924 = vrot.slane %v922, 7
      %v925 = vor.u32 %v921, %v924
      %v926 = vsel %vm369, %v917, %v925
      %v927 = vrot.slane %v925, 4
      %v929 = vshrl.u32 %v754, 16
      %v931 = vrot.slane %v929, 6
      %v932 = vshll.u32 %v754, 16
      %v934 = vrot.slane %v932, 7
      %v935 = vor.u32 %v931, %v934
      %v936 = vsel %vm369, %v927, %v935
      %v938 = vshrl.u32 %v755, 16
      %v940 = vrot.slane %v938, 6
      %v941 = vshll.u32 %v755, 16
      %v943 = vrot.slane %v941, 7
      %v944 = vor.u32 %v940, %v943
      %v945 = vrot.slane %v944, 4
      %v947 = vshrl.u32 %v756, 16
      %v949 = vrot.slane %v947, 6
      %v950 = vshll.u32 %v756, 16
      %v952 = vrot.slane %v950, 7
      %v953 = vor.u32 %v949, %v952
      %v954 = vsel %vm369, %v945, %v953
      %v955 = vrot.slane %v953, 4
      %v957 = vshrl.u32 %v757, 16
      %v959 = vrot.slane %v957, 6
      %v960 = vshll.u32 %v757, 16
      %v962 = vrot.slane %v960, 7
      %v963 = vor.u32 %v959, %v962
      %v964 = vsel %vm369, %v955, %v963
      %v966 = vshrl.u32 %v758, 16
      %v968 = vrot.slane %v966, 6
      %v969 = vshll.u32 %v758, 16
      %v971 = vrot.slane %v969, 7
      %v972 = vor.u32 %v968, %v971
      %v973 = vrot.slane %v972, 4
      %v975 = vshrl.u32 %v759, 16
      %v977 = vrot.slane %v975, 6
      %v978 = vshll.u32 %v759, 16
      %v980 = vrot.slane %v978, 7
      %v981 = vor.u32 %v977, %v980
      %v982 = vsel %vm369, %v973, %v981
      %v983 = vrot.slane %v981, 4
      %v985 = vshrl.u32 %v760, 16
      %v987 = vrot.slane %v985, 6
      %v988 = vshll.u32 %v760, 16
      %v990 = vrot.slane %v988, 7
      %v991 = vor.u32 %v987, %v990
      %v992 = vsel %vm369, %v983, %v991
      %v994 = vshrl.u32 %v761, 16
      %v996 = vrot.slane %v994, 6
      %v997 = vshll.u32 %v761, 16
      %v999 = vrot.slane %v997, 7
      %v1000 = vor.u32 %v996, %v999
      %v1001 = vrot.slane %v1000, 4
      %v1003 = vshrl.u32 %v762, 16
      %v1005 = vrot.slane %v1003, 6
      %v1006 = vshll.u32 %v762, 16
      %v1008 = vrot.slane %v1006, 7
      %v1009 = vor.u32 %v1005, %v1008
      %v1010 = vsel %vm369, %v1001, %v1009
      %v1011 = vrot.slane %v1009, 4
      %v1013 = vshrl.u32 %v763, 16
      %v1015 = vrot.slane %v1013, 6
      %v1016 = vshll.u32 %v763, 16
      %v1018 = vrot.slane %v1016, 7
      %v1019 = vor.u32 %v1015, %v1018
      %v1020 = vsel %vm369, %v1011, %v1019
      %v1022 = vshrl.u32 %v764, 16
      %v1024 = vrot.slane %v1022, 6
      %v1025 = vshll.u32 %v764, 16
      %v1027 = vrot.slane %v1025, 7
      %v1028 = vor.u32 %v1024, %v1027
      %v1029 = vrot.slane %v1028, 4
      %v1031 = vshrl.u32 %v765, 16
      %v1033 = vrot.slane %v1031, 6
      %v1034 = vshll.u32 %v765, 16
      %v1036 = vrot.slane %v1034, 7
      %v1037 = vor.u32 %v1033, %v1036
      %v1038 = vsel %vm369, %v1029, %v1037
      %v1039 = vrot.slane %v1037, 4
      %v1041 = vshrl.u32 %v766, 16
      %v1043 = vrot.slane %v1041, 6
      %v1044 = vshll.u32 %v766, 16
      %v1046 = vrot.slane %v1044, 7
      %v1047 = vor.u32 %v1043, %v1046
      %v1048 = vsel %vm369, %v1039, %v1047
      %v1050 = vshrl.u32 %v767, 16
      %v1052 = vrot.slane %v1050, 6
      %v1053 = vshll.u32 %v767, 16
      %v1055 = vrot.slane %v1053, 7
      %v1056 = vor.u32 %v1052, %v1055
      %v1057 = vrot.slane %v1056, 4
      %v1059 = vshrl.u32 %v768, 16
      %v1061 = vrot.slane %v1059, 6
      %v1062 = vshll.u32 %v768, 16
      %v1064 = vrot.slane %v1062, 7
      %v1065 = vor.u32 %v1061, %v1064
      %v1066 = vsel %vm369, %v1057, %v1065
      %v1067 = vrot.slane %v1065, 4
      %v1069 = vshrl.u32 %v769, 16
      %v1071 = vrot.slane %v1069, 6
      %v1072 = vshll.u32 %v769, 16
      %v1074 = vrot.slane %v1072, 7
      %v1075 = vor.u32 %v1071, %v1074
      %v1076 = vsel %vm369, %v1067, %v1075
      %vm1077 = vcmask 1040384
      %vm1078 = vcmask 1044484
      %vm1079 = vmor %vm1077, %vm1078
      %v1080 = vrot.slane %v746, 7
      %v1081 = vrot.slane %v1080, 4
      %v1082 = vrot.slane %v747, 7
      %v1083 = vsel %vm1079, %v1081, %v1082
      %v1084 = vrot.slane %v1082, 4
      %v1085 = vrot.slane %v748, 7
      %v1086 = vsel %vm1079, %v1084, %v1085
      %v1087 = vrot.slane %v749, 7
      %v1088 = vrot.slane %v1087, 4
      %v1089 = vrot.slane %v750, 7
      %v1090 = vsel %vm1079, %v1088, %v1089
      %v1091 = vrot.slane %v1089, 4
      %v1092 = vrot.slane %v751, 7
      %v1093 = vsel %vm1079, %v1091, %v1092
      %v1094 = vrot.slane %v752, 7
      %v1095 = vrot.slane %v1094, 4
      %v1096 = vrot.slane %v753, 7
      %v1097 = vsel %vm1079, %v1095, %v1096
      %v1098 = vrot.slane %v1096, 4
      %v1099 = vrot.slane %v754, 7
      %v1100 = vsel %vm1079, %v1098, %v1099
      %v1101 = vrot.slane %v755, 7
      %v1102 = vrot.slane %v1101, 4
      %v1103 = vrot.slane %v756, 7
      %v1104 = vsel %vm1079, %v1102, %v1103
      %v1105 = vrot.slane %v1103, 4
      %v1106 = vrot.slane %v757, 7
      %v1107 = vsel %vm1079, %v1105, %v1106
      %v1108 = vrot.slane %v758, 7
      %v1109 = vrot.slane %v1108, 4
      %v1110 = vrot.slane %v759, 7
      %v1111 = vsel %vm1079, %v1109, %v1110
      %v1112 = vrot.slane %v1110, 4
      %v1113 = vrot.slane %v760, 7
      %v1114 = vsel %vm1079, %v1112, %v1113
      %v1115 = vrot.slane %v761, 7
      %v1116 = vrot.slane %v1115, 4
      %v1117 = vrot.slane %v762, 7
      %v1118 = vsel %vm1079, %v1116, %v1117
      %v1119 = vrot.slane %v1117, 4
      %v1120 = vrot.slane %v763, 7
      %v1121 = vsel %vm1079, %v1119, %v1120
      %v1122 = vrot.slane %v764, 7
      %v1123 = vrot.slane %v1122, 4
      %v1124 = vrot.slane %v765, 7
      %v1125 = vsel %vm1079, %v1123, %v1124
      %v1126 = vrot.slane %v1124, 4
      %v1127 = vrot.slane %v766, 7
      %v1128 = vsel %vm1079, %v1126, %v1127
      %v1129 = vrot.slane %v767, 7
      %v1130 = vrot.slane %v1129, 4
      %v1131 = vrot.slane %v768, 7
      %v1132 = vsel %vm1079, %v1130, %v1131
      %v1133 = vrot.slane %v1131, 4
      %v1134 = vrot.slane %v769, 7
      %v1135 = vsel %vm1079, %v1133, %v1134
      %v1160 = vrot.slane %v335, 6
      %v1161 = vrot.slane %v1160, 4
      %v1162 = vrot.slane %v336, 6
      %v1163 = vsel %vm796, %v1161, %v1162
      %v1164 = vrot.slane %v1162, 4
      %v1165 = vrot.slane %v337, 6
      %v1166 = vsel %vm796, %v1164, %v1165
      %v1167 = vrot.slane %v339, 6
      %v1168 = vrot.slane %v1167, 4
      %v1169 = vrot.slane %v340, 6
      %v1170 = vsel %vm796, %v1168, %v1169
      %v1171 = vrot.slane %v1169, 4
      %v1172 = vrot.slane %v341, 6
      %v1173 = vsel %vm796, %v1171, %v1172
      %v1174 = vrot.slane %v343, 6
      %v1175 = vrot.slane %v1174, 4
      %v1176 = vrot.slane %v344, 6
      %v1177 = vsel %vm796, %v1175, %v1176
      %v1178 = vrot.slane %v1176, 4
      %v1179 = vrot.slane %v345, 6
      %v1180 = vsel %vm796, %v1178, %v1179
      %v1181 = vrot.slane %v347, 6
      %v1182 = vrot.slane %v1181, 4
      %v1183 = vrot.slane %v348, 6
      %v1184 = vsel %vm796, %v1182, %v1183
      %v1185 = vrot.slane %v1183, 4
      %v1186 = vrot.slane %v349, 6
      %v1187 = vsel %vm796, %v1185, %v1186
      %v1188 = vrot.slane %v351, 6
      %v1189 = vrot.slane %v1188, 4
      %v1190 = vrot.slane %v352, 6
      %v1191 = vsel %vm796, %v1189, %v1190
      %v1192 = vrot.slane %v1190, 4
      %v1193 = vrot.slane %v353, 6
      %v1194 = vsel %vm796, %v1192, %v1193
      %v1195 = vrot.slane %v355, 6
      %v1196 = vrot.slane %v1195, 4
      %v1197 = vrot.slane %v356, 6
      %v1198 = vsel %vm796, %v1196, %v1197
      %v1199 = vrot.slane %v1197, 4
      %v1200 = vrot.slane %v357, 6
      %v1201 = vsel %vm796, %v1199, %v1200
      %v1202 = vrot.slane %v359, 6
      %v1203 = vrot.slane %v1202, 4
      %v1204 = vrot.slane %v360, 6
      %v1205 = vsel %vm796, %v1203, %v1204
      %v1206 = vrot.slane %v1204, 4
      %v1207 = vrot.slane %v361, 6
      %v1208 = vsel %vm796, %v1206, %v1207
      %v1209 = vrot.slane %v363, 6
      %v1210 = vrot.slane %v1209, 4
      %v1211 = vrot.slane %v364, 6
      %v1212 = vsel %vm796, %v1210, %v1211
      %v1213 = vrot.slane %v1211, 4
      %v1214 = vrot.slane %v365, 6
      %v1215 = vsel %vm796, %v1213, %v1214
      %v1216 = vrot.slane %v335, 7
      %v1217 = vrot.slane %v1216, 4
      %v1218 = vrot.slane %v336, 7
      %v1219 = vsel %vm1079, %v1217, %v1218
      %v1220 = vrot.slane %v1218, 4
      %v1221 = vrot.slane %v337, 7
      %v1222 = vsel %vm1079, %v1220, %v1221
      %v1223 = vrot.slane %v339, 7
      %v1224 = vrot.slane %v1223, 4
      %v1225 = vrot.slane %v340, 7
      %v1226 = vsel %vm1079, %v1224, %v1225
      %v1227 = vrot.slane %v1225, 4
      %v1228 = vrot.slane %v341, 7
      %v1229 = vsel %vm1079, %v1227, %v1228
      %v1230 = vrot.slane %v343, 7
      %v1231 = vrot.slane %v1230, 4
      %v1232 = vrot.slane %v344, 7
      %v1233 = vsel %vm1079, %v1231, %v1232
      %v1234 = vrot.slane %v1232, 4
      %v1235 = vrot.slane %v345, 7
      %v1236 = vsel %vm1079, %v1234, %v1235
      %v1237 = vrot.slane %v347, 7
      %v1238 = vrot.slane %v1237, 4
      %v1239 = vrot.slane %v348, 7
      %v1240 = vsel %vm1079, %v1238, %v1239
      %v1241 = vrot.slane %v1239, 4
      %v1242 = vrot.slane %v349, 7
      %v1243 = vsel %vm1079, %v1241, %v1242
      %v1244 = vrot.slane %v351, 7
      %v1245 = vrot.slane %v1244, 4
      %v1246 = vrot.slane %v352, 7
      %v1247 = vsel %vm1079, %v1245, %v1246
      %v1248 = vrot.slane %v1246, 4
      %v1249 = vrot.slane %v353, 7
      %v1250 = vsel %vm1079, %v1248, %v1249
      %v1251 = vrot.slane %v355, 7
      %v1252 = vrot.slane %v1251, 4
      %v1253 = vrot.slane %v356, 7
      %v1254 = vsel %vm1079, %v1252, %v1253
      %v1255 = vrot.slane %v1253, 4
      %v1256 = vrot.slane %v357, 7
      %v1257 = vsel %vm1079, %v1255, %v1256
      %v1258 = vrot.slane %v359, 7
      %v1259 = vrot.slane %v1258, 4
      %v1260 = vrot.slane %v360, 7
      %v1261 = vsel %vm1079, %v1259, %v1260
      %v1262 = vrot.slane %v1260, 4
      %v1263 = vrot.slane %v361, 7
      %v1264 = vsel %vm1079, %v1262, %v1263
      %v1265 = vrot.slane %v363, 7
      %v1266 = vrot.slane %v1265, 4
      %v1267 = vrot.slane %v364, 7
      %v1268 = vsel %vm1079, %v1266, %v1267
      %v1269 = vrot.slane %v1267, 4
      %v1270 = vrot.slane %v365, 7
      %v1271 = vsel %vm1079, %v1269, %v1270
      %s1272 = scalar_lea.vmem %s327, 96
      %v1273 = vld [vmem:[%s1272] sm:$0xf]
      %v1274 = vld [vmem:[%s1272 + $0x4] sm:$0xf]
      %v1275 = vld [vmem:[%s1272 + $0x8] sm:$0xf]
      %v1276 = vld [vmem:[%s1272 + $0x10] sm:$0xf]
      %v1277 = vld [vmem:[%s1272 + $0x14] sm:$0xf]
      %v1278 = vld [vmem:[%s1272 + $0x18] sm:$0xf]
      %v1279 = vld [vmem:[%s1272 + $0x20] sm:$0xf]
      %v1280 = vld [vmem:[%s1272 + $0x24] sm:$0xf]
      %v1281 = vld [vmem:[%s1272 + $0x28] sm:$0xf]
      %v1282 = vld [vmem:[%s1272 + $0x30] sm:$0xf]
      %v1283 = vld [vmem:[%s1272 + $0x34] sm:$0xf]
      %v1284 = vld [vmem:[%s1272 + $0x38] sm:$0xf]
      %v1285 = vld [vmem:[%s1272 + $0x40] sm:$0xf]
      %v1286 = vld [vmem:[%s1272 + $0x44] sm:$0xf]
      %v1287 = vld [vmem:[%s1272 + $0x48] sm:$0xf]
      %v1288 = vld [vmem:[%s1272 + $0x50] sm:$0xf]
      %v1289 = vld [vmem:[%s1272 + $0x54] sm:$0xf]
      %v1290 = vld [vmem:[%s1272 + $0x58] sm:$0xf]
      %v1291 = vld [vmem:[%s1272 + $0x60] sm:$0xf]
      %v1292 = vld [vmem:[%s1272 + $0x64] sm:$0xf]
      %v1293 = vld [vmem:[%s1272 + $0x68] sm:$0xf]
      %v1294 = vld [vmem:[%s1272 + $0x70] sm:$0xf]
      %v1295 = vld [vmem:[%s1272 + $0x74] sm:$0xf]
      %v1296 = vld [vmem:[%s1272 + $0x78] sm:$0xf]
      %v1321 = vrot.slane %v1273, 6
      %v1322 = vrot.slane %v1321, 4
      %v1323 = vrot.slane %v1274, 6
      %v1324 = vsel %vm796, %v1322, %v1323
      %v1325 = vrot.slane %v1323, 4
      %v1326 = vrot.slane %v1275, 6
      %v1327 = vsel %vm796, %v1325, %v1326
      %v1328 = vrot.slane %v1276, 6
      %v1329 = vrot.slane %v1328, 4
      %v1330 = vrot.slane %v1277, 6
      %v1331 = vsel %vm796, %v1329, %v1330
      %v1332 = vrot.slane %v1330, 4
      %v1333 = vrot.slane %v1278, 6
      %v1334 = vsel %vm796, %v1332, %v1333
      %v1335 = vrot.slane %v1279, 6
      %v1336 = vrot.slane %v1335, 4
      %v1337 = vrot.slane %v1280, 6
      %v1338 = vsel %vm796, %v1336, %v1337
      %v1339 = vrot.slane %v1337, 4
      %v1340 = vrot.slane %v1281, 6
      %v1341 = vsel %vm796, %v1339, %v1340
      %v1342 = vrot.slane %v1282, 6
      %v1343 = vrot.slane %v1342, 4
      %v1344 = vrot.slane %v1283, 6
      %v1345 = vsel %vm796, %v1343, %v1344
      %v1346 = vrot.slane %v1344, 4
      %v1347 = vrot.slane %v1284, 6
      %v1348 = vsel %vm796, %v1346, %v1347
      %v1349 = vrot.slane %v1285, 6
      %v1350 = vrot.slane %v1349, 4
      %v1351 = vrot.slane %v1286, 6
      %v1352 = vsel %vm796, %v1350, %v1351
      %v1353 = vrot.slane %v1351, 4
      %v1354 = vrot.slane %v1287, 6
      %v1355 = vsel %vm796, %v1353, %v1354
      %v1356 = vrot.slane %v1288, 6
      %v1357 = vrot.slane %v1356, 4
      %v1358 = vrot.slane %v1289, 6
      %v1359 = vsel %vm796, %v1357, %v1358
      %v1360 = vrot.slane %v1358, 4
      %v1361 = vrot.slane %v1290, 6
      %v1362 = vsel %vm796, %v1360, %v1361
      %v1363 = vrot.slane %v1291, 6
      %v1364 = vrot.slane %v1363, 4
      %v1365 = vrot.slane %v1292, 6
      %v1366 = vsel %vm796, %v1364, %v1365
      %v1367 = vrot.slane %v1365, 4
      %v1368 = vrot.slane %v1293, 6
      %v1369 = vsel %vm796, %v1367, %v1368
      %v1370 = vrot.slane %v1294, 6
      %v1371 = vrot.slane %v1370, 4
      %v1372 = vrot.slane %v1295, 6
      %v1373 = vsel %vm796, %v1371, %v1372
      %v1374 = vrot.slane %v1372, 4
      %v1375 = vrot.slane %v1296, 6
      %v1376 = vsel %vm796, %v1374, %v1375
      %v1378 = vshrl.u32 %v1273, 16
      %v1380 = vrot.slane %v1378, 6
      %v1381 = vshll.u32 %v1273, 16
      %v1383 = vrot.slane %v1381, 7
      %v1384 = vor.u32 %v1380, %v1383
      %v1385 = vrot.slane %v1384, 4
      %v1387 = vshrl.u32 %v1274, 16
      %v1389 = vrot.slane %v1387, 6
      %v1390 = vshll.u32 %v1274, 16
      %v1392 = vrot.slane %v1390, 7
      %v1393 = vor.u32 %v1389, %v1392
      %v1394 = vsel %vm369, %v1385, %v1393
      %v1395 = vrot.slane %v1393, 4
      %v1397 = vshrl.u32 %v1275, 16
      %v1399 = vrot.slane %v1397, 6
      %v1400 = vshll.u32 %v1275, 16
      %v1402 = vrot.slane %v1400, 7
      %v1403 = vor.u32 %v1399, %v1402
      %v1404 = vsel %vm369, %v1395, %v1403
      %v1406 = vshrl.u32 %v1276, 16
      %v1408 = vrot.slane %v1406, 6
      %v1409 = vshll.u32 %v1276, 16
      %v1411 = vrot.slane %v1409, 7
      %v1412 = vor.u32 %v1408, %v1411
      %v1413 = vrot.slane %v1412, 4
      %v1415 = vshrl.u32 %v1277, 16
      %v1417 = vrot.slane %v1415, 6
      %v1418 = vshll.u32 %v1277, 16
      %v1420 = vrot.slane %v1418, 7
      %v1421 = vor.u32 %v1417, %v1420
      %v1422 = vsel %vm369, %v1413, %v1421
      %v1423 = vrot.slane %v1421, 4
      %v1425 = vshrl.u32 %v1278, 16
      %v1427 = vrot.slane %v1425, 6
      %v1428 = vshll.u32 %v1278, 16
      %v1430 = vrot.slane %v1428, 7
      %v1431 = vor.u32 %v1427, %v1430
      %v1432 = vsel %vm369, %v1423, %v1431
      %v1434 = vshrl.u32 %v1279, 16
      %v1436 = vrot.slane %v1434, 6
      %v1437 = vshll.u32 %v1279, 16
      %v1439 = vrot.slane %v1437, 7
      %v1440 = vor.u32 %v1436, %v1439
      %v1441 = vrot.slane %v1440, 4
      %v1443 = vshrl.u32 %v1280, 16
      %v1445 = vrot.slane %v1443, 6
      %v1446 = vshll.u32 %v1280, 16
      %v1448 = vrot.slane %v1446, 7
      %v1449 = vor.u32 %v1445, %v1448
      %v1450 = vsel %vm369, %v1441, %v1449
      %v1451 = vrot.slane %v1449, 4
      %v1453 = vshrl.u32 %v1281, 16
      %v1455 = vrot.slane %v1453, 6
      %v1456 = vshll.u32 %v1281, 16
      %v1458 = vrot.slane %v1456, 7
      %v1459 = vor.u32 %v1455, %v1458
      %v1460 = vsel %vm369, %v1451, %v1459
      %v1462 = vshrl.u32 %v1282, 16
      %v1464 = vrot.slane %v1462, 6
      %v1465 = vshll.u32 %v1282, 16
      %v1467 = vrot.slane %v1465, 7
      %v1468 = vor.u32 %v1464, %v1467
      %v1469 = vrot.slane %v1468, 4
      %v1471 = vshrl.u32 %v1283, 16
      %v1473 = vrot.slane %v1471, 6
      %v1474 = vshll.u32 %v1283, 16
      %v1476 = vrot.slane %v1474, 7
      %v1477 = vor.u32 %v1473, %v1476
      %v1478 = vsel %vm369, %v1469, %v1477
      %v1479 = vrot.slane %v1477, 4
      %v1481 = vshrl.u32 %v1284, 16
      %v1483 = vrot.slane %v1481, 6
      %v1484 = vshll.u32 %v1284, 16
      %v1486 = vrot.slane %v1484, 7
      %v1487 = vor.u32 %v1483, %v1486
      %v1488 = vsel %vm369, %v1479, %v1487
      %v1490 = vshrl.u32 %v1285, 16
      %v1492 = vrot.slane %v1490, 6
      %v1493 = vshll.u32 %v1285, 16
      %v1495 = vrot.slane %v1493, 7
      %v1496 = vor.u32 %v1492, %v1495
      %v1497 = vrot.slane %v1496, 4
      %v1499 = vshrl.u32 %v1286, 16
      %v1501 = vrot.slane %v1499, 6
      %v1502 = vshll.u32 %v1286, 16
      %v1504 = vrot.slane %v1502, 7
      %v1505 = vor.u32 %v1501, %v1504
      %v1506 = vsel %vm369, %v1497, %v1505
      %v1507 = vrot.slane %v1505, 4
      %v1509 = vshrl.u32 %v1287, 16
      %v1511 = vrot.slane %v1509, 6
      %v1512 = vshll.u32 %v1287, 16
      %v1514 = vrot.slane %v1512, 7
      %v1515 = vor.u32 %v1511, %v1514
      %v1516 = vsel %vm369, %v1507, %v1515
      %v1518 = vshrl.u32 %v1288, 16
      %v1520 = vrot.slane %v1518, 6
      %v1521 = vshll.u32 %v1288, 16
      %v1523 = vrot.slane %v1521, 7
      %v1524 = vor.u32 %v1520, %v1523
      %v1525 = vrot.slane %v1524, 4
      %v1527 = vshrl.u32 %v1289, 16
      %v1529 = vrot.slane %v1527, 6
      %v1530 = vshll.u32 %v1289, 16
      %v1532 = vrot.slane %v1530, 7
      %v1533 = vor.u32 %v1529, %v1532
      %v1534 = vsel %vm369, %v1525, %v1533
      %v1535 = vrot.slane %v1533, 4
      %v1537 = vshrl.u32 %v1290, 16
      %v1539 = vrot.slane %v1537, 6
      %v1540 = vshll.u32 %v1290, 16
      %v1542 = vrot.slane %v1540, 7
      %v1543 = vor.u32 %v1539, %v1542
      %v1544 = vsel %vm369, %v1535, %v1543
      %v1546 = vshrl.u32 %v1291, 16
      %v1548 = vrot.slane %v1546, 6
      %v1549 = vshll.u32 %v1291, 16
      %v1551 = vrot.slane %v1549, 7
      %v1552 = vor.u32 %v1548, %v1551
      %v1553 = vrot.slane %v1552, 4
      %v1555 = vshrl.u32 %v1292, 16
      %v1557 = vrot.slane %v1555, 6
      %v1558 = vshll.u32 %v1292, 16
      %v1560 = vrot.slane %v1558, 7
      %v1561 = vor.u32 %v1557, %v1560
      %v1562 = vsel %vm369, %v1553, %v1561
      %v1563 = vrot.slane %v1561, 4
      %v1565 = vshrl.u32 %v1293, 16
      %v1567 = vrot.slane %v1565, 6
      %v1568 = vshll.u32 %v1293, 16
      %v1570 = vrot.slane %v1568, 7
      %v1571 = vor.u32 %v1567, %v1570
      %v1572 = vsel %vm369, %v1563, %v1571
      %v1574 = vshrl.u32 %v1294, 16
      %v1576 = vrot.slane %v1574, 6
      %v1577 = vshll.u32 %v1294, 16
      %v1579 = vrot.slane %v1577, 7
      %v1580 = vor.u32 %v1576, %v1579
      %v1581 = vrot.slane %v1580, 4
      %v1583 = vshrl.u32 %v1295, 16
      %v1585 = vrot.slane %v1583, 6
      %v1586 = vshll.u32 %v1295, 16
      %v1588 = vrot.slane %v1586, 7
      %v1589 = vor.u32 %v1585, %v1588
      %v1590 = vsel %vm369, %v1581, %v1589
      %v1591 = vrot.slane %v1589, 4
      %v1593 = vshrl.u32 %v1296, 16
      %v1595 = vrot.slane %v1593, 6
      %v1596 = vshll.u32 %v1296, 16
      %v1598 = vrot.slane %v1596, 7
      %v1599 = vor.u32 %v1595, %v1598
      %v1600 = vsel %vm369, %v1591, %v1599
      %v1601 = vrot.slane %v1273, 7
      %v1602 = vrot.slane %v1601, 4
      %v1603 = vrot.slane %v1274, 7
      %v1604 = vsel %vm1079, %v1602, %v1603
      %v1605 = vrot.slane %v1603, 4
      %v1606 = vrot.slane %v1275, 7
      %v1607 = vsel %vm1079, %v1605, %v1606
      %v1608 = vrot.slane %v1276, 7
      %v1609 = vrot.slane %v1608, 4
      %v1610 = vrot.slane %v1277, 7
      %v1611 = vsel %vm1079, %v1609, %v1610
      %v1612 = vrot.slane %v1610, 4
      %v1613 = vrot.slane %v1278, 7
      %v1614 = vsel %vm1079, %v1612, %v1613
      %v1615 = vrot.slane %v1279, 7
      %v1616 = vrot.slane %v1615, 4
      %v1617 = vrot.slane %v1280, 7
      %v1618 = vsel %vm1079, %v1616, %v1617
      %v1619 = vrot.slane %v1617, 4
      %v1620 = vrot.slane %v1281, 7
      %v1621 = vsel %vm1079, %v1619, %v1620
      %v1622 = vrot.slane %v1282, 7
      %v1623 = vrot.slane %v1622, 4
      %v1624 = vrot.slane %v1283, 7
      %v1625 = vsel %vm1079, %v1623, %v1624
      %v1626 = vrot.slane %v1624, 4
      %v1627 = vrot.slane %v1284, 7
      %v1628 = vsel %vm1079, %v1626, %v1627
      %v1629 = vrot.slane %v1285, 7
      %v1630 = vrot.slane %v1629, 4
      %v1631 = vrot.slane %v1286, 7
      %v1632 = vsel %vm1079, %v1630, %v1631
      %v1633 = vrot.slane %v1631, 4
      %v1634 = vrot.slane %v1287, 7
      %v1635 = vsel %vm1079, %v1633, %v1634
      %v1636 = vrot.slane %v1288, 7
      %v1637 = vrot.slane %v1636, 4
      %v1638 = vrot.slane %v1289, 7
      %v1639 = vsel %vm1079, %v1637, %v1638
      %v1640 = vrot.slane %v1638, 4
      %v1641 = vrot.slane %v1290, 7
      %v1642 = vsel %vm1079, %v1640, %v1641
      %v1643 = vrot.slane %v1291, 7
      %v1644 = vrot.slane %v1643, 4
      %v1645 = vrot.slane %v1292, 7
      %v1646 = vsel %vm1079, %v1644, %v1645
      %v1647 = vrot.slane %v1645, 4
      %v1648 = vrot.slane %v1293, 7
      %v1649 = vsel %vm1079, %v1647, %v1648
      %v1650 = vrot.slane %v1294, 7
      %v1651 = vrot.slane %v1650, 4
      %v1652 = vrot.slane %v1295, 7
      %v1653 = vsel %vm1079, %v1651, %v1652
      %v1654 = vrot.slane %v1652, 4
      %v1655 = vrot.slane %v1296, 7
      %v1656 = vsel %vm1079, %v1654, %v1655
      %v1657 = vunpack.c.l.b16 %v800
      %v1658 = vunpack.c.l.b16 %v803
      %v1659 = vunpack.c.l.b16 %v807
      %v1660 = vunpack.c.l.b16 %v810
      %v1661 = vunpack.c.l.b16 %v814
      %v1662 = vunpack.c.l.b16 %v817
      %v1663 = vunpack.c.l.b16 %v821
      %v1664 = vunpack.c.l.b16 %v824
      %v1665 = vunpack.c.l.b16 %v828
      %v1666 = vunpack.c.l.b16 %v831
      %v1667 = vunpack.c.l.b16 %v835
      %v1668 = vunpack.c.l.b16 %v838
      %v1669 = vunpack.c.l.b16 %v842
      %v1670 = vunpack.c.l.b16 %v845
      %v1671 = vunpack.c.l.b16 %v849
      %v1672 = vunpack.c.l.b16 %v852
      %v1673 = vpack.c.b16 %v1658, %v1657
      %v1674 = vpack.c.b16 %v1660, %v1659
      %v1675 = vpack.c.b16 %v1662, %v1661
      %v1676 = vpack.c.b16 %v1664, %v1663
      %v1677 = vpack.c.b16 %v1666, %v1665
      %v1678 = vpack.c.b16 %v1668, %v1667
      %v1679 = vpack.c.b16 %v1670, %v1669
      %v1680 = vpack.c.b16 %v1672, %v1671
      %v1681 = vunpack.c.l.b16 %v870
      %v1682 = vunpack.c.l.b16 %v880
      %v1683 = vunpack.c.l.b16 %v898
      %v1684 = vunpack.c.l.b16 %v908
      %v1685 = vunpack.c.l.b16 %v926
      %v1686 = vunpack.c.l.b16 %v936
      %v1687 = vunpack.c.l.b16 %v954
      %v1688 = vunpack.c.l.b16 %v964
      %v1689 = vunpack.c.l.b16 %v982
      %v1690 = vunpack.c.l.b16 %v992
      %v1691 = vunpack.c.l.b16 %v1010
      %v1692 = vunpack.c.l.b16 %v1020
      %v1693 = vunpack.c.l.b16 %v1038
      %v1694 = vunpack.c.l.b16 %v1048
      %v1695 = vunpack.c.l.b16 %v1066
      %v1696 = vunpack.c.l.b16 %v1076
      %v1697 = vpack.c.b16 %v1682, %v1681
      %v1698 = vpack.c.b16 %v1684, %v1683
      %v1699 = vpack.c.b16 %v1686, %v1685
      %v1700 = vpack.c.b16 %v1688, %v1687
      %v1701 = vpack.c.b16 %v1690, %v1689
      %v1702 = vpack.c.b16 %v1692, %v1691
      %v1703 = vpack.c.b16 %v1694, %v1693
      %v1704 = vpack.c.b16 %v1696, %v1695
      %1705 = vrot.lane.b32.xlu0 %v1697, 4
      %v1706 = vpop.permute.xlu0 %1705
      %1707 = vrot.lane.b32.xlu0 %v1698, 4
      %v1708 = vpop.permute.xlu0 %1707
      %1709 = vrot.lane.b32.xlu0 %v1699, 4
      %v1710 = vpop.permute.xlu0 %1709
      %1711 = vrot.lane.b32.xlu0 %v1700, 4
      %v1712 = vpop.permute.xlu0 %1711
      %1713 = vrot.lane.b32.xlu0 %v1701, 4
      %v1714 = vpop.permute.xlu0 %1713
      %1715 = vrot.lane.b32.xlu0 %v1702, 4
      %v1716 = vpop.permute.xlu0 %1715
      %1717 = vrot.lane.b32.xlu0 %v1703, 4
      %v1718 = vpop.permute.xlu0 %1717
      %1719 = vrot.lane.b32.xlu0 %v1704, 4
      %v1720 = vpop.permute.xlu0 %1719
      %v1721 = vunpack.c.l.b16 %v1083
      %v1722 = vunpack.c.l.b16 %v1086
      %v1723 = vunpack.c.l.b16 %v1090
      %v1724 = vunpack.c.l.b16 %v1093
      %v1725 = vunpack.c.l.b16 %v1097
      %v1726 = vunpack.c.l.b16 %v1100
      %v1727 = vunpack.c.l.b16 %v1104
      %v1728 = vunpack.c.l.b16 %v1107
      %v1729 = vunpack.c.l.b16 %v1111
      %v1730 = vunpack.c.l.b16 %v1114
      %v1731 = vunpack.c.l.b16 %v1118
      %v1732 = vunpack.c.l.b16 %v1121
      %v1733 = vunpack.c.l.b16 %v1125
      %v1734 = vunpack.c.l.b16 %v1128
      %v1735 = vunpack.c.l.b16 %v1132
      %v1736 = vunpack.c.l.b16 %v1135
      %v1737 = vpack.c.b16 %v1722, %v1721
      %v1738 = vpack.c.b16 %v1724, %v1723
      %v1739 = vpack.c.b16 %v1726, %v1725
      %v1740 = vpack.c.b16 %v1728, %v1727
      %v1741 = vpack.c.b16 %v1730, %v1729
      %v1742 = vpack.c.b16 %v1732, %v1731
      %v1743 = vpack.c.b16 %v1734, %v1733
      %v1744 = vpack.c.b16 %v1736, %v1735
      %1745 = vrot.lane.b32.xlu0 %v1737, 8
      %v1746 = vpop.permute.xlu0 %1745
      %1747 = vrot.lane.b32.xlu0 %v1738, 8
      %v1748 = vpop.permute.xlu0 %1747
      %1749 = vrot.lane.b32.xlu0 %v1739, 8
      %v1750 = vpop.permute.xlu0 %1749
      %1751 = vrot.lane.b32.xlu0 %v1740, 8
      %v1752 = vpop.permute.xlu0 %1751
      %1753 = vrot.lane.b32.xlu0 %v1741, 8
      %v1754 = vpop.permute.xlu0 %1753
      %1755 = vrot.lane.b32.xlu0 %v1742, 8
      %v1756 = vpop.permute.xlu0 %1755
      %1757 = vrot.lane.b32.xlu0 %v1743, 8
      %v1758 = vpop.permute.xlu0 %1757
      %1759 = vrot.lane.b32.xlu0 %v1744, 8
      %v1760 = vpop.permute.xlu0 %1759
      %v1761 = vunpack.c.l.b16 %v1163
      %v1762 = vunpack.c.l.b16 %v1166
      %v1763 = vunpack.c.l.b16 %v1170
      %v1764 = vunpack.c.l.b16 %v1173
      %v1765 = vunpack.c.l.b16 %v1177
      %v1766 = vunpack.c.l.b16 %v1180
      %v1767 = vunpack.c.l.b16 %v1184
      %v1768 = vunpack.c.l.b16 %v1187
      %v1769 = vunpack.c.l.b16 %v1191
      %v1770 = vunpack.c.l.b16 %v1194
      %v1771 = vunpack.c.l.b16 %v1198
      %v1772 = vunpack.c.l.b16 %v1201
      %v1773 = vunpack.c.l.b16 %v1205
      %v1774 = vunpack.c.l.b16 %v1208
      %v1775 = vunpack.c.l.b16 %v1212
      %v1776 = vunpack.c.l.b16 %v1215
      %v1777 = vpack.c.b16 %v1762, %v1761
      %v1778 = vpack.c.b16 %v1764, %v1763
      %v1779 = vpack.c.b16 %v1766, %v1765
      %v1780 = vpack.c.b16 %v1768, %v1767
      %v1781 = vpack.c.b16 %v1770, %v1769
      %v1782 = vpack.c.b16 %v1772, %v1771
      %v1783 = vpack.c.b16 %v1774, %v1773
      %v1784 = vpack.c.b16 %v1776, %v1775
      %1785 = vrot.lane.b32.xlu0 %v1777, 12
      %v1786 = vpop.permute.xlu0 %1785
      %1787 = vrot.lane.b32.xlu0 %v1778, 12
      %v1788 = vpop.permute.xlu0 %1787
      %1789 = vrot.lane.b32.xlu0 %v1779, 12
      %v1790 = vpop.permute.xlu0 %1789
      %1791 = vrot.lane.b32.xlu0 %v1780, 12
      %v1792 = vpop.permute.xlu0 %1791
      %1793 = vrot.lane.b32.xlu0 %v1781, 12
      %v1794 = vpop.permute.xlu0 %1793
      %1795 = vrot.lane.b32.xlu0 %v1782, 12
      %v1796 = vpop.permute.xlu0 %1795
      %1797 = vrot.lane.b32.xlu0 %v1783, 12
      %v1798 = vpop.permute.xlu0 %1797
      %1799 = vrot.lane.b32.xlu0 %v1784, 12
      %v1800 = vpop.permute.xlu0 %1799
      %v1801 = vunpack.c.l.b16 %v1219
      %v1802 = vunpack.c.l.b16 %v1222
      %v1803 = vunpack.c.l.b16 %v1226
      %v1804 = vunpack.c.l.b16 %v1229
      %v1805 = vunpack.c.l.b16 %v1233
      %v1806 = vunpack.c.l.b16 %v1236
      %v1807 = vunpack.c.l.b16 %v1240
      %v1808 = vunpack.c.l.b16 %v1243
      %v1809 = vunpack.c.l.b16 %v1247
      %v1810 = vunpack.c.l.b16 %v1250
      %v1811 = vunpack.c.l.b16 %v1254
      %v1812 = vunpack.c.l.b16 %v1257
      %v1813 = vunpack.c.l.b16 %v1261
      %v1814 = vunpack.c.l.b16 %v1264
      %v1815 = vunpack.c.l.b16 %v1268
      %v1816 = vunpack.c.l.b16 %v1271
      %v1817 = vpack.c.b16 %v1802, %v1801
      %v1818 = vpack.c.b16 %v1804, %v1803
      %v1819 = vpack.c.b16 %v1806, %v1805
      %v1820 = vpack.c.b16 %v1808, %v1807
      %v1821 = vpack.c.b16 %v1810, %v1809
      %v1822 = vpack.c.b16 %v1812, %v1811
      %v1823 = vpack.c.b16 %v1814, %v1813
      %v1824 = vpack.c.b16 %v1816, %v1815
      %1825 = vrot.lane.b32.xlu0 %v1817, 16
      %v1826 = vpop.permute.xlu0 %1825
      %1827 = vrot.lane.b32.xlu0 %v1818, 16
      %v1828 = vpop.permute.xlu0 %1827
      %1829 = vrot.lane.b32.xlu0 %v1819, 16
      %v1830 = vpop.permute.xlu0 %1829
      %1831 = vrot.lane.b32.xlu0 %v1820, 16
      %v1832 = vpop.permute.xlu0 %1831
      %1833 = vrot.lane.b32.xlu0 %v1821, 16
      %v1834 = vpop.permute.xlu0 %1833
      %1835 = vrot.lane.b32.xlu0 %v1822, 16
      %v1836 = vpop.permute.xlu0 %1835
      %1837 = vrot.lane.b32.xlu0 %v1823, 16
      %v1838 = vpop.permute.xlu0 %1837
      %1839 = vrot.lane.b32.xlu0 %v1824, 16
      %v1840 = vpop.permute.xlu0 %1839
      %v1841 = vunpack.c.l.b16 %v1324
      %v1842 = vunpack.c.l.b16 %v1327
      %v1843 = vunpack.c.l.b16 %v1331
      %v1844 = vunpack.c.l.b16 %v1334
      %v1845 = vunpack.c.l.b16 %v1338
      %v1846 = vunpack.c.l.b16 %v1341
      %v1847 = vunpack.c.l.b16 %v1345
      %v1848 = vunpack.c.l.b16 %v1348
      %v1849 = vunpack.c.l.b16 %v1352
      %v1850 = vunpack.c.l.b16 %v1355
      %v1851 = vunpack.c.l.b16 %v1359
      %v1852 = vunpack.c.l.b16 %v1362
      %v1853 = vunpack.c.l.b16 %v1366
      %v1854 = vunpack.c.l.b16 %v1369
      %v1855 = vunpack.c.l.b16 %v1373
      %v1856 = vunpack.c.l.b16 %v1376
      %v1857 = vpack.c.b16 %v1842, %v1841
      %v1858 = vpack.c.b16 %v1844, %v1843
      %v1859 = vpack.c.b16 %v1846, %v1845
      %v1860 = vpack.c.b16 %v1848, %v1847
      %v1861 = vpack.c.b16 %v1850, %v1849
      %v1862 = vpack.c.b16 %v1852, %v1851
      %v1863 = vpack.c.b16 %v1854, %v1853
      %v1864 = vpack.c.b16 %v1856, %v1855
      %1865 = vrot.lane.b32.xlu0 %v1857, 20
      %v1866 = vpop.permute.xlu0 %1865
      %1867 = vrot.lane.b32.xlu0 %v1858, 20
      %v1868 = vpop.permute.xlu0 %1867
      %1869 = vrot.lane.b32.xlu0 %v1859, 20
      %v1870 = vpop.permute.xlu0 %1869
      %1871 = vrot.lane.b32.xlu0 %v1860, 20
      %v1872 = vpop.permute.xlu0 %1871
      %1873 = vrot.lane.b32.xlu0 %v1861, 20
      %v1874 = vpop.permute.xlu0 %1873
      %1875 = vrot.lane.b32.xlu0 %v1862, 20
      %v1876 = vpop.permute.xlu0 %1875
      %1877 = vrot.lane.b32.xlu0 %v1863, 20
      %v1878 = vpop.permute.xlu0 %1877
      %1879 = vrot.lane.b32.xlu0 %v1864, 20
      %v1880 = vpop.permute.xlu0 %1879
      %v1881 = vunpack.c.l.b16 %v1394
      %v1882 = vunpack.c.l.b16 %v1404
      %v1883 = vunpack.c.l.b16 %v1422
      %v1884 = vunpack.c.l.b16 %v1432
      %v1885 = vunpack.c.l.b16 %v1450
      %v1886 = vunpack.c.l.b16 %v1460
      %v1887 = vunpack.c.l.b16 %v1478
      %v1888 = vunpack.c.l.b16 %v1488
      %v1889 = vunpack.c.l.b16 %v1506
      %v1890 = vunpack.c.l.b16 %v1516
      %v1891 = vunpack.c.l.b16 %v1534
      %v1892 = vunpack.c.l.b16 %v1544
      %v1893 = vunpack.c.l.b16 %v1562
      %v1894 = vunpack.c.l.b16 %v1572
      %v1895 = vunpack.c.l.b16 %v1590
      %v1896 = vunpack.c.l.b16 %v1600
      %v1897 = vpack.c.b16 %v1882, %v1881
      %v1898 = vpack.c.b16 %v1884, %v1883
      %v1899 = vpack.c.b16 %v1886, %v1885
      %v1900 = vpack.c.b16 %v1888, %v1887
      %v1901 = vpack.c.b16 %v1890, %v1889
      %v1902 = vpack.c.b16 %v1892, %v1891
      %v1903 = vpack.c.b16 %v1894, %v1893
      %v1904 = vpack.c.b16 %v1896, %v1895
      %1905 = vrot.lane.b32.xlu0 %v1897, 24
      %v1906 = vpop.permute.xlu0 %1905
      %1907 = vrot.lane.b32.xlu0 %v1898, 24
      %v1908 = vpop.permute.xlu0 %1907
      %1909 = vrot.lane.b32.xlu0 %v1899, 24
      %v1910 = vpop.permute.xlu0 %1909
      %1911 = vrot.lane.b32.xlu0 %v1900, 24
      %v1912 = vpop.permute.xlu0 %1911
      %1913 = vrot.lane.b32.xlu0 %v1901, 24
      %v1914 = vpop.permute.xlu0 %1913
      %1915 = vrot.lane.b32.xlu0 %v1902, 24
      %v1916 = vpop.permute.xlu0 %1915
      %1917 = vrot.lane.b32.xlu0 %v1903, 24
      %v1918 = vpop.permute.xlu0 %1917
      %1919 = vrot.lane.b32.xlu0 %v1904, 24
      %v1920 = vpop.permute.xlu0 %1919
      %v1921 = vunpack.c.l.b16 %v1604
      %v1922 = vunpack.c.l.b16 %v1607
      %v1923 = vunpack.c.l.b16 %v1611
      %v1924 = vunpack.c.l.b16 %v1614
      %v1925 = vunpack.c.l.b16 %v1618
      %v1926 = vunpack.c.l.b16 %v1621
      %v1927 = vunpack.c.l.b16 %v1625
      %v1928 = vunpack.c.l.b16 %v1628
      %v1929 = vunpack.c.l.b16 %v1632
      %v1930 = vunpack.c.l.b16 %v1635
      %v1931 = vunpack.c.l.b16 %v1639
      %v1932 = vunpack.c.l.b16 %v1642
      %v1933 = vunpack.c.l.b16 %v1646
      %v1934 = vunpack.c.l.b16 %v1649
      %v1935 = vunpack.c.l.b16 %v1653
      %v1936 = vunpack.c.l.b16 %v1656
      %v1937 = vpack.c.b16 %v1922, %v1921
      %v1938 = vpack.c.b16 %v1924, %v1923
      %v1939 = vpack.c.b16 %v1926, %v1925
      %v1940 = vpack.c.b16 %v1928, %v1927
      %v1941 = vpack.c.b16 %v1930, %v1929
      %v1942 = vpack.c.b16 %v1932, %v1931
      %v1943 = vpack.c.b16 %v1934, %v1933
      %v1944 = vpack.c.b16 %v1936, %v1935
      %1945 = vrot.lane.b32.xlu0 %v1937, 28
      %v1946 = vpop.permute.xlu0 %1945
      %1947 = vrot.lane.b32.xlu0 %v1938, 28
      %v1948 = vpop.permute.xlu0 %1947
      %1949 = vrot.lane.b32.xlu0 %v1939, 28
      %v1950 = vpop.permute.xlu0 %1949
      %1951 = vrot.lane.b32.xlu0 %v1940, 28
      %v1952 = vpop.permute.xlu0 %1951
      %1953 = vrot.lane.b32.xlu0 %v1941, 28
      %v1954 = vpop.permute.xlu0 %1953
      %1955 = vrot.lane.b32.xlu0 %v1942, 28
      %v1956 = vpop.permute.xlu0 %1955
      %1957 = vrot.lane.b32.xlu0 %v1943, 28
      %v1958 = vpop.permute.xlu0 %1957
      %1959 = vrot.lane.b32.xlu0 %v1944, 28
      %v1960 = vpop.permute.xlu0 %1959
      %v1963 = vsel %vm619, %v1673, %v1706
      %v1966 = vsel %vm619, %v1674, %v1708
      %v1969 = vsel %vm619, %v1675, %v1710
      %v1972 = vsel %vm619, %v1676, %v1712
      %v1975 = vsel %vm619, %v1677, %v1714
      %v1978 = vsel %vm619, %v1678, %v1716
      %v1981 = vsel %vm619, %v1679, %v1718
      %v1984 = vsel %vm619, %v1680, %v1720
      %vm1985 = vcmask 64512
      %v1987 = vsel %vm1985, %v1963, %v1746
      %v1989 = vsel %vm1985, %v1966, %v1748
      %v1991 = vsel %vm1985, %v1969, %v1750
      %v1993 = vsel %vm1985, %v1972, %v1752
      %v1995 = vsel %vm1985, %v1975, %v1754
      %v1997 = vsel %vm1985, %v1978, %v1756
      %v1999 = vsel %vm1985, %v1981, %v1758
      %v2001 = vsel %vm1985, %v1984, %v1760
      %vm2002 = vcmask 97280
      %v2004 = vsel %vm2002, %v1987, %v1786
      %v2006 = vsel %vm2002, %v1989, %v1788
      %v2008 = vsel %vm2002, %v1991, %v1790
      %v2010 = vsel %vm2002, %v1993, %v1792
      %v2012 = vsel %vm2002, %v1995, %v1794
      %v2014 = vsel %vm2002, %v1997, %v1796
      %v2016 = vsel %vm2002, %v1999, %v1798
      %v2018 = vsel %vm2002, %v2001, %v1800
      %vm2019 = vcmask 130048
      %v2021 = vsel %vm2019, %v2004, %v1826
      %v2023 = vsel %vm2019, %v2006, %v1828
      %v2025 = vsel %vm2019, %v2008, %v1830
      %v2027 = vsel %vm2019, %v2010, %v1832
      %v2029 = vsel %vm2019, %v2012, %v1834
      %v2031 = vsel %vm2019, %v2014, %v1836
      %v2033 = vsel %vm2019, %v2016, %v1838
      %v2035 = vsel %vm2019, %v2018, %v1840
      %vm2036 = vcmask 162816
      %v2038 = vsel %vm2036, %v2021, %v1866
      %v2040 = vsel %vm2036, %v2023, %v1868
      %v2042 = vsel %vm2036, %v2025, %v1870
      %v2044 = vsel %vm2036, %v2027, %v1872
      %v2046 = vsel %vm2036, %v2029, %v1874
      %v2048 = vsel %vm2036, %v2031, %v1876
      %v2050 = vsel %vm2036, %v2033, %v1878
      %v2052 = vsel %vm2036, %v2035, %v1880
      %vm2053 = vcmask 195584
      %v2055 = vsel %vm2053, %v2038, %v1906
      %v2057 = vsel %vm2053, %v2040, %v1908
      %v2059 = vsel %vm2053, %v2042, %v1910
      %v2061 = vsel %vm2053, %v2044, %v1912
      %v2063 = vsel %vm2053, %v2046, %v1914
      %v2065 = vsel %vm2053, %v2048, %v1916
      %v2067 = vsel %vm2053, %v2050, %v1918
      %v2069 = vsel %vm2053, %v2052, %v1920
      %vm2070 = vcmask 228352
      %v2072 = vsel %vm2070, %v2055, %v1946
      %v2074 = vsel %vm2070, %v2057, %v1948
      %v2076 = vsel %vm2070, %v2059, %v1950
      %v2078 = vsel %vm2070, %v2061, %v1952
      %v2080 = vsel %vm2070, %v2063, %v1954
      %v2082 = vsel %vm2070, %v2065, %v1956
      %v2084 = vsel %vm2070, %v2067, %v1958
      %v2086 = vsel %vm2070, %v2069, %v1960
      %v2087 = vld [vmem:[%s2] sm:$0xf]
      %v2088 = vld [vmem:[%s2 + $0x4] sm:$0xf]
      %v2089 = vld [vmem:[%s2 + $0x8] sm:$0xf]
      %v2090 = vld [vmem:[%s2 + $0xc] sm:$0xf]
      %v2095 = vunpack.c.l.b16 %v2087
      %v2096 = vunpack.c.l.b16 %v2088
      %v2097 = vunpack.c.l.b16 %v2089
      %v2098 = vunpack.c.l.b16 %v2090
      %v2099 = vpack.c.b16 %v2096, %v2095
      %v2100 = vpack.c.b16 %v2098, %v2097
      %vm2103 = vcmask 261120
      %v2104 = vsel %vm2103, %v2072, 0
      %v2106 = vsel %vm2103, %v2074, 0
      %v2108 = vsel %vm2103, %v2076, 0
      %v2110 = vsel %vm2103, %v2078, 0
      %v2112 = vsel %vm2103, %v2080, 0
      %v2114 = vsel %vm2103, %v2082, 0
      %v2116 = vsel %vm2103, %v2084, 0
      %v2118 = vsel %vm2103, %v2086, 0
      %2120 = vmatprep.subr.bf16.mxu0 0
      %2121 = vmatpush1.bf16.msra.mxu0 0
      %2122 = vmatprep.subr.bf16.mxu0 0
      %2123 = vmatpush1.bf16.msra.mxu0 0
      %2124 = vmatprep.subr.bf16.mxu0 0
      %2125 = vmatpush1.bf16.msra.mxu0 0
      %2126 = vmatprep.subr.bf16.mxu0 0
      %2127 = vmatpush1.bf16.msra.mxu0 0
      %2128 = vmatprep.subr.bf16.mxu0 0
      %2129 = vmatpush1.bf16.msra.mxu0 0
      %2130 = vmatprep.subr.bf16.mxu0 0
      %2131 = vmatpush1.bf16.msra.mxu0 0
      %2132 = vmatprep.subr.bf16.mxu0 0
      %2133 = vmatpush1.bf16.msra.mxu0 %v2100
      %2134 = vmatprep.subr.bf16.mxu0 0
      %2135 = vmatpush1.bf16.msra.mxu0 %v2099
      %2136 = vmatprep.subr.bf16.mxu0 0
      %2137 = vmatpush2.bf16.msra.mxu0 0
      %2138 = vmatprep.subr.bf16.mxu0 0
      %2139 = vmatpush2.bf16.msra.mxu0 0
      %2140 = vmatprep.subr.bf16.mxu0 0
      %2141 = vmatpush2.bf16.msra.mxu0 0
      %2142 = vmatprep.subr.bf16.mxu0 0
      %2143 = vmatpush2.bf16.msra.mxu0 0
      %2144 = vmatprep.subr.bf16.mxu0 0
      %2145 = vmatpush2.bf16.msra.mxu0 0
      %2146 = vmatprep.subr.bf16.mxu0 0
      %2147 = vmatpush2.bf16.msra.mxu0 0
      %2148 = vmatprep.subr.bf16.mxu0 0
      %2149 = vmatpush2.bf16.msra.mxu0 0
      %2150 = vmatprep.subr.bf16.mxu0 0
      %2151 = vmatpush2.bf16.msra.mxu0 0
      %2152 = vmatprep.mubr.bf16.mxu0 0
      %2153 = vmatmul.mubr.bf16.gmra.mxu0 %v2104
      %v2154 = vpop.f32.mrf.mxu0
      %v2155 = vadd.f32 %v683, %v2154
      %v2156 = vpop.f32.mrf.mxu0
      %v2157 = vpop.f32.mrf.mxu0
      %v2158 = vadd.f32 %v686, %v2157
      %v2159 = vpop.f32.mrf.mxu0
      %2160 = vmatprep.mubr.bf16.mxu0 0
      %2161 = vmatmul.mubr.bf16.gmra.mxu0 %v2106
      %v2162 = vpop.f32.mrf.mxu0
      %v2163 = vadd.f32 %v691, %v2162
      %v2164 = vpop.f32.mrf.mxu0
      %v2165 = vpop.f32.mrf.mxu0
      %v2166 = vadd.f32 %v694, %v2165
      %v2167 = vpop.f32.mrf.mxu0
      %2168 = vmatprep.mubr.bf16.mxu0 0
      %2169 = vmatmul.mubr.bf16.gmra.mxu0 %v2108
      %v2170 = vpop.f32.mrf.mxu0
      %v2171 = vadd.f32 %v699, %v2170
      %v2172 = vpop.f32.mrf.mxu0
      %v2173 = vpop.f32.mrf.mxu0
      %v2174 = vadd.f32 %v702, %v2173
      %v2175 = vpop.f32.mrf.mxu0
      %2176 = vmatprep.mubr.bf16.mxu0 0
      %2177 = vmatmul.mubr.bf16.gmra.mxu0 %v2110
      %v2178 = vpop.f32.mrf.mxu0
      %v2179 = vadd.f32 %v707, %v2178
      %v2180 = vpop.f32.mrf.mxu0
      %v2181 = vpop.f32.mrf.mxu0
      %v2182 = vadd.f32 %v710, %v2181
      %v2183 = vpop.f32.mrf.mxu0
      %2184 = vmatprep.mubr.bf16.mxu0 0
      %2185 = vmatmul.mubr.bf16.gmra.mxu0 %v2112
      %v2186 = vpop.f32.mrf.mxu0
      %v2187 = vadd.f32 %v715, %v2186
      %v2188 = vpop.f32.mrf.mxu0
      %v2189 = vpop.f32.mrf.mxu0
      %v2190 = vadd.f32 %v718, %v2189
      %v2191 = vpop.f32.mrf.mxu0
      %2192 = vmatprep.mubr.bf16.mxu0 0
      %2193 = vmatmul.mubr.bf16.gmra.mxu0 %v2114
      %v2194 = vpop.f32.mrf.mxu0
      %v2195 = vadd.f32 %v723, %v2194
      %v2196 = vpop.f32.mrf.mxu0
      %v2197 = vpop.f32.mrf.mxu0
      %v2198 = vadd.f32 %v726, %v2197
      %v2199 = vpop.f32.mrf.mxu0
      %2200 = vmatprep.mubr.bf16.mxu0 0
      %2201 = vmatmul.mubr.bf16.gmra.mxu0 %v2116
      %v2202 = vpop.f32.mrf.mxu0
      %v2203 = vadd.f32 %v731, %v2202
      %v2204 = vpop.f32.mrf.mxu0
      %v2205 = vpop.f32.mrf.mxu0
      %v2206 = vadd.f32 %v734, %v2205
      %v2207 = vpop.f32.mrf.mxu0
      %2208 = vmatprep.mubr.bf16.mxu0 0
      %2209 = vmatmul.mubr.bf16.gmra.mxu0 %v2118
      %v2210 = vpop.f32.mrf.mxu0
      %v2211 = vadd.f32 %v739, %v2210
      %v2212 = vpop.f32.mrf.mxu0
      %v2213 = vpop.f32.mrf.mxu0
      %v2214 = vadd.f32 %v742, %v2213
      %v2215 = vpop.f32.mrf.mxu0
      %2216 = vdwg.mxu0
      %v2217 = vld [vmem:[%s5] sm:$0x1]
      %v2219 = vlaneseq
      %v2220 = vshrl.u32 %v2219, 7
      %v2221 = vsub.s32 0, %v2220
      %v2222 = vrot.slane %v2217, %v2221
      %v2224 = vadd.f32 %v2155, %v2222
      %v2225 = vadd.f32 %v2158, %v2222
      %v2226 = vadd.f32 %v2163, %v2222
      %v2227 = vadd.f32 %v2166, %v2222
      %v2228 = vadd.f32 %v2171, %v2222
      %v2229 = vadd.f32 %v2174, %v2222
      %v2230 = vadd.f32 %v2179, %v2222
      %v2231 = vadd.f32 %v2182, %v2222
      %v2232 = vadd.f32 %v2187, %v2222
      %v2233 = vadd.f32 %v2190, %v2222
      %v2234 = vadd.f32 %v2195, %v2222
      %v2235 = vadd.f32 %v2198, %v2222
      %v2236 = vadd.f32 %v2203, %v2222
      %v2237 = vadd.f32 %v2206, %v2222
      %v2238 = vadd.f32 %v2211, %v2222
      %v2239 = vadd.f32 %v2214, %v2222
      %v2240 = vmax.f32 %v2224, 0.0
      %v2241 = vmax.f32 %v2225, 0.0
      %v2242 = vmax.f32 %v2226, 0.0
      %v2243 = vmax.f32 %v2227, 0.0
      %v2244 = vmax.f32 %v2228, 0.0
      %v2245 = vmax.f32 %v2229, 0.0
      %v2246 = vmax.f32 %v2230, 0.0
      %v2247 = vmax.f32 %v2231, 0.0
      %v2248 = vmax.f32 %v2232, 0.0
      %v2249 = vmax.f32 %v2233, 0.0
      %v2250 = vmax.f32 %v2234, 0.0
      %v2251 = vmax.f32 %v2235, 0.0
      %v2252 = vmax.f32 %v2236, 0.0
      %v2253 = vmax.f32 %v2237, 0.0
      %v2254 = vmax.f32 %v2238, 0.0
      %v2255 = vmax.f32 %v2239, 0.0
      %s2256 = scalar_lea.vmem %s327, 32
      %v2257 = vld [vmem:[%s2256] sm:$0xf]
      %v2258 = vld [vmem:[%s2256 + $0x4] sm:$0xf]
      %v2259 = vld [vmem:[%s2256 + $0x8] sm:$0xf]
      %v2260 = vld [vmem:[%s2256 + $0x10] sm:$0xf]
      %v2261 = vld [vmem:[%s2256 + $0x14] sm:$0xf]
      %v2262 = vld [vmem:[%s2256 + $0x18] sm:$0xf]
      %v2263 = vld [vmem:[%s2256 + $0x20] sm:$0xf]
      %v2264 = vld [vmem:[%s2256 + $0x24] sm:$0xf]
      %v2265 = vld [vmem:[%s2256 + $0x28] sm:$0xf]
      %v2266 = vld [vmem:[%s2256 + $0x30] sm:$0xf]
      %v2267 = vld [vmem:[%s2256 + $0x34] sm:$0xf]
      %v2268 = vld [vmem:[%s2256 + $0x38] sm:$0xf]
      %v2269 = vld [vmem:[%s2256 + $0x40] sm:$0xf]
      %v2270 = vld [vmem:[%s2256 + $0x44] sm:$0xf]
      %v2271 = vld [vmem:[%s2256 + $0x48] sm:$0xf]
      %v2272 = vld [vmem:[%s2256 + $0x50] sm:$0xf]
      %v2273 = vld [vmem:[%s2256 + $0x54] sm:$0xf]
      %v2274 = vld [vmem:[%s2256 + $0x58] sm:$0xf]
      %v2275 = vld [vmem:[%s2256 + $0x60] sm:$0xf]
      %v2276 = vld [vmem:[%s2256 + $0x64] sm:$0xf]
      %v2277 = vld [vmem:[%s2256 + $0x68] sm:$0xf]
      %v2278 = vld [vmem:[%s2256 + $0x70] sm:$0xf]
      %v2279 = vld [vmem:[%s2256 + $0x74] sm:$0xf]
      %v2280 = vld [vmem:[%s2256 + $0x78] sm:$0xf]
      %vm2305 = vcmask 1042432
      %vm2306 = vcmask 1046532
      %vm2307 = vmor %vm2305, %vm2306
      %v2308 = vrot.slane %v2257, 5
      %v2309 = vrot.slane %v2308, 4
      %v2310 = vrot.slane %v2258, 5
      %v2311 = vsel %vm2307, %v2309, %v2310
      %v2312 = vrot.slane %v2310, 4
      %v2313 = vrot.slane %v2259, 5
      %v2314 = vsel %vm2307, %v2312, %v2313
      %v2315 = vrot.slane %v2260, 5
      %v2316 = vrot.slane %v2315, 4
      %v2317 = vrot.slane %v2261, 5
      %v2318 = vsel %vm2307, %v2316, %v2317
      %v2319 = vrot.slane %v2317, 4
      %v2320 = vrot.slane %v2262, 5
      %v2321 = vsel %vm2307, %v2319, %v2320
      %v2322 = vrot.slane %v2263, 5
      %v2323 = vrot.slane %v2322, 4
      %v2324 = vrot.slane %v2264, 5
      %v2325 = vsel %vm2307, %v2323, %v2324
      %v2326 = vrot.slane %v2324, 4
      %v2327 = vrot.slane %v2265, 5
      %v2328 = vsel %vm2307, %v2326, %v2327
      %v2329 = vrot.slane %v2266, 5
      %v2330 = vrot.slane %v2329, 4
      %v2331 = vrot.slane %v2267, 5
      %v2332 = vsel %vm2307, %v2330, %v2331
      %v2333 = vrot.slane %v2331, 4
      %v2334 = vrot.slane %v2268, 5
      %v2335 = vsel %vm2307, %v2333, %v2334
      %v2336 = vrot.slane %v2269, 5
      %v2337 = vrot.slane %v2336, 4
      %v2338 = vrot.slane %v2270, 5
      %v2339 = vsel %vm2307, %v2337, %v2338
      %v2340 = vrot.slane %v2338, 4
      %v2341 = vrot.slane %v2271, 5
      %v2342 = vsel %vm2307, %v2340, %v2341
      %v2343 = vrot.slane %v2272, 5
      %v2344 = vrot.slane %v2343, 4
      %v2345 = vrot.slane %v2273, 5
      %v2346 = vsel %vm2307, %v2344, %v2345
      %v2347 = vrot.slane %v2345, 4
      %v2348 = vrot.slane %v2274, 5
      %v2349 = vsel %vm2307, %v2347, %v2348
      %v2350 = vrot.slane %v2275, 5
      %v2351 = vrot.slane %v2350, 4
      %v2352 = vrot.slane %v2276, 5
      %v2353 = vsel %vm2307, %v2351, %v2352
      %v2354 = vrot.slane %v2352, 4
      %v2355 = vrot.slane %v2277, 5
      %v2356 = vsel %vm2307, %v2354, %v2355
      %v2357 = vrot.slane %v2278, 5
      %v2358 = vrot.slane %v2357, 4
      %v2359 = vrot.slane %v2279, 5
      %v2360 = vsel %vm2307, %v2358, %v2359
      %v2361 = vrot.slane %v2359, 4
      %v2362 = vrot.slane %v2280, 5
      %v2363 = vsel %vm2307, %v2361, %v2362
      %v2365 = vshrl.u32 %v2257, 16
      %v2367 = vrot.slane %v2365, 6
      %v2368 = vshll.u32 %v2257, 16
      %v2370 = vrot.slane %v2368, 7
      %v2371 = vor.u32 %v2367, %v2370
      %v2372 = vrot.slane %v2371, 4
      %v2374 = vshrl.u32 %v2258, 16
      %v2376 = vrot.slane %v2374, 6
      %v2377 = vshll.u32 %v2258, 16
      %v2379 = vrot.slane %v2377, 7
      %v2380 = vor.u32 %v2376, %v2379
      %v2381 = vsel %vm369, %v2372, %v2380
      %v2382 = vrot.slane %v2380, 4
      %v2384 = vshrl.u32 %v2259, 16
      %v2386 = vrot.slane %v2384, 6
      %v2387 = vshll.u32 %v2259, 16
      %v2389 = vrot.slane %v2387, 7
      %v2390 = vor.u32 %v2386, %v2389
      %v2391 = vsel %vm369, %v2382, %v2390
      %v2393 = vshrl.u32 %v2260, 16
      %v2395 = vrot.slane %v2393, 6
      %v2396 = vshll.u32 %v2260, 16
      %v2398 = vrot.slane %v2396, 7
      %v2399 = vor.u32 %v2395, %v2398
      %v2400 = vrot.slane %v2399, 4
      %v2402 = vshrl.u32 %v2261, 16
      %v2404 = vrot.slane %v2402, 6
      %v2405 = vshll.u32 %v2261, 16
      %v2407 = vrot.slane %v2405, 7
      %v2408 = vor.u32 %v2404, %v2407
      %v2409 = vsel %vm369, %v2400, %v2408
      %v2410 = vrot.slane %v2408, 4
      %v2412 = vshrl.u32 %v2262, 16
      %v2414 = vrot.slane %v2412, 6
      %v2415 = vshll.u32 %v2262, 16
      %v2417 = vrot.slane %v2415, 7
      %v2418 = vor.u32 %v2414, %v2417
      %v2419 = vsel %vm369, %v2410, %v2418
      %v2421 = vshrl.u32 %v2263, 16
      %v2423 = vrot.slane %v2421, 6
      %v2424 = vshll.u32 %v2263, 16
      %v2426 = vrot.slane %v2424, 7
      %v2427 = vor.u32 %v2423, %v2426
      %v2428 = vrot.slane %v2427, 4
      %v2430 = vshrl.u32 %v2264, 16
      %v2432 = vrot.slane %v2430, 6
      %v2433 = vshll.u32 %v2264, 16
      %v2435 = vrot.slane %v2433, 7
      %v2436 = vor.u32 %v2432, %v2435
      %v2437 = vsel %vm369, %v2428, %v2436
      %v2438 = vrot.slane %v2436, 4
      %v2440 = vshrl.u32 %v2265, 16
      %v2442 = vrot.slane %v2440, 6
      %v2443 = vshll.u32 %v2265, 16
      %v2445 = vrot.slane %v2443, 7
      %v2446 = vor.u32 %v2442, %v2445
      %v2447 = vsel %vm369, %v2438, %v2446
      %v2449 = vshrl.u32 %v2266, 16
      %v2451 = vrot.slane %v2449, 6
      %v2452 = vshll.u32 %v2266, 16
      %v2454 = vrot.slane %v2452, 7
      %v2455 = vor.u32 %v2451, %v2454
      %v2456 = vrot.slane %v2455, 4
      %v2458 = vshrl.u32 %v2267, 16
      %v2460 = vrot.slane %v2458, 6
      %v2461 = vshll.u32 %v2267, 16
      %v2463 = vrot.slane %v2461, 7
      %v2464 = vor.u32 %v2460, %v2463
      %v2465 = vsel %vm369, %v2456, %v2464
      %v2466 = vrot.slane %v2464, 4
      %v2468 = vshrl.u32 %v2268, 16
      %v2470 = vrot.slane %v2468, 6
      %v2471 = vshll.u32 %v2268, 16
      %v2473 = vrot.slane %v2471, 7
      %v2474 = vor.u32 %v2470, %v2473
      %v2475 = vsel %vm369, %v2466, %v2474
      %v2477 = vshrl.u32 %v2269, 16
      %v2479 = vrot.slane %v2477, 6
      %v2480 = vshll.u32 %v2269, 16
      %v2482 = vrot.slane %v2480, 7
      %v2483 = vor.u32 %v2479, %v2482
      %v2484 = vrot.slane %v2483, 4
      %v2486 = vshrl.u32 %v2270, 16
      %v2488 = vrot.slane %v2486, 6
      %v2489 = vshll.u32 %v2270, 16
      %v2491 = vrot.slane %v2489, 7
      %v2492 = vor.u32 %v2488, %v2491
      %v2493 = vsel %vm369, %v2484, %v2492
      %v2494 = vrot.slane %v2492, 4
      %v2496 = vshrl.u32 %v2271, 16
      %v2498 = vrot.slane %v2496, 6
      %v2499 = vshll.u32 %v2271, 16
      %v2501 = vrot.slane %v2499, 7
      %v2502 = vor.u32 %v2498, %v2501
      %v2503 = vsel %vm369, %v2494, %v2502
      %v2505 = vshrl.u32 %v2272, 16
      %v2507 = vrot.slane %v2505, 6
      %v2508 = vshll.u32 %v2272, 16
      %v2510 = vrot.slane %v2508, 7
      %v2511 = vor.u32 %v2507, %v2510
      %v2512 = vrot.slane %v2511, 4
      %v2514 = vshrl.u32 %v2273, 16
      %v2516 = vrot.slane %v2514, 6
      %v2517 = vshll.u32 %v2273, 16
      %v2519 = vrot.slane %v2517, 7
      %v2520 = vor.u32 %v2516, %v2519
      %v2521 = vsel %vm369, %v2512, %v2520
      %v2522 = vrot.slane %v2520, 4
      %v2524 = vshrl.u32 %v2274, 16
      %v2526 = vrot.slane %v2524, 6
      %v2527 = vshll.u32 %v2274, 16
      %v2529 = vrot.slane %v2527, 7
      %v2530 = vor.u32 %v2526, %v2529
      %v2531 = vsel %vm369, %v2522, %v2530
      %v2533 = vshrl.u32 %v2275, 16
      %v2535 = vrot.slane %v2533, 6
      %v2536 = vshll.u32 %v2275, 16
      %v2538 = vrot.slane %v2536, 7
      %v2539 = vor.u32 %v2535, %v2538
      %v2540 = vrot.slane %v2539, 4
      %v2542 = vshrl.u32 %v2276, 16
      %v2544 = vrot.slane %v2542, 6
      %v2545 = vshll.u32 %v2276, 16
      %v2547 = vrot.slane %v2545, 7
      %v2548 = vor.u32 %v2544, %v2547
      %v2549 = vsel %vm369, %v2540, %v2548
      %v2550 = vrot.slane %v2548, 4
      %v2552 = vshrl.u32 %v2277, 16
      %v2554 = vrot.slane %v2552, 6
      %v2555 = vshll.u32 %v2277, 16
      %v2557 = vrot.slane %v2555, 7
      %v2558 = vor.u32 %v2554, %v2557
      %v2559 = vsel %vm369, %v2550, %v2558
      %v2561 = vshrl.u32 %v2278, 16
      %v2563 = vrot.slane %v2561, 6
      %v2564 = vshll.u32 %v2278, 16
      %v2566 = vrot.slane %v2564, 7
      %v2567 = vor.u32 %v2563, %v2566
      %v2568 = vrot.slane %v2567, 4
      %v2570 = vshrl.u32 %v2279, 16
      %v2572 = vrot.slane %v2570, 6
      %v2573 = vshll.u32 %v2279, 16
      %v2575 = vrot.slane %v2573, 7
      %v2576 = vor.u32 %v2572, %v2575
      %v2577 = vsel %vm369, %v2568, %v2576
      %v2578 = vrot.slane %v2576, 4
      %v2580 = vshrl.u32 %v2280, 16
      %v2582 = vrot.slane %v2580, 6
      %v2583 = vshll.u32 %v2280, 16
      %v2585 = vrot.slane %v2583, 7
      %v2586 = vor.u32 %v2582, %v2585
      %v2587 = vsel %vm369, %v2578, %v2586
      %v2588 = vrot.slane %v335, 5
      %v2589 = vrot.slane %v2588, 4
      %v2590 = vrot.slane %v336, 5
      %v2591 = vsel %vm2307, %v2589, %v2590
      %v2592 = vrot.slane %v2590, 4
      %v2593 = vrot.slane %v337, 5
      %v2594 = vsel %vm2307, %v2592, %v2593
      %v2595 = vrot.slane %v339, 5
      %v2596 = vrot.slane %v2595, 4
      %v2597 = vrot.slane %v340, 5
      %v2598 = vsel %vm2307, %v2596, %v2597
      %v2599 = vrot.slane %v2597, 4
      %v2600 = vrot.slane %v341, 5
      %v2601 = vsel %vm2307, %v2599, %v2600
      %v2602 = vrot.slane %v343, 5
      %v2603 = vrot.slane %v2602, 4
      %v2604 = vrot.slane %v344, 5
      %v2605 = vsel %vm2307, %v2603, %v2604
      %v2606 = vrot.slane %v2604, 4
      %v2607 = vrot.slane %v345, 5
      %v2608 = vsel %vm2307, %v2606, %v2607
      %v2609 = vrot.slane %v347, 5
      %v2610 = vrot.slane %v2609, 4
      %v2611 = vrot.slane %v348, 5
      %v2612 = vsel %vm2307, %v2610, %v2611
      %v2613 = vrot.slane %v2611, 4
      %v2614 = vrot.slane %v349, 5
      %v2615 = vsel %vm2307, %v2613, %v2614
      %v2616 = vrot.slane %v351, 5
      %v2617 = vrot.slane %v2616, 4
      %v2618 = vrot.slane %v352, 5
      %v2619 = vsel %vm2307, %v2617, %v2618
      %v2620 = vrot.slane %v2618, 4
      %v2621 = vrot.slane %v353, 5
      %v2622 = vsel %vm2307, %v2620, %v2621
      %v2623 = vrot.slane %v355, 5
      %v2624 = vrot.slane %v2623, 4
      %v2625 = vrot.slane %v356, 5
      %v2626 = vsel %vm2307, %v2624, %v2625
      %v2627 = vrot.slane %v2625, 4
      %v2628 = vrot.slane %v357, 5
      %v2629 = vsel %vm2307, %v2627, %v2628
      %v2630 = vrot.slane %v359, 5
      %v2631 = vrot.slane %v2630, 4
      %v2632 = vrot.slane %v360, 5
      %v2633 = vsel %vm2307, %v2631, %v2632
      %v2634 = vrot.slane %v2632, 4
      %v2635 = vrot.slane %v361, 5
      %v2636 = vsel %vm2307, %v2634, %v2635
      %v2637 = vrot.slane %v363, 5
      %v2638 = vrot.slane %v2637, 4
      %v2639 = vrot.slane %v364, 5
      %v2640 = vsel %vm2307, %v2638, %v2639
      %v2641 = vrot.slane %v2639, 4
      %v2642 = vrot.slane %v365, 5
      %v2643 = vsel %vm2307, %v2641, %v2642
      %s2644 = scalar_lea.vmem %s327, 128
      %v2645 = vld [vmem:[%s2644] sm:$0xf]
      %v2646 = vld [vmem:[%s2644 + $0x4] sm:$0xf]
      %v2647 = vld [vmem:[%s2644 + $0x8] sm:$0xf]
      %v2648 = vld [vmem:[%s2644 + $0x10] sm:$0xf]
      %v2649 = vld [vmem:[%s2644 + $0x14] sm:$0xf]
      %v2650 = vld [vmem:[%s2644 + $0x18] sm:$0xf]
      %v2651 = vld [vmem:[%s2644 + $0x20] sm:$0xf]
      %v2652 = vld [vmem:[%s2644 + $0x24] sm:$0xf]
      %v2653 = vld [vmem:[%s2644 + $0x28] sm:$0xf]
      %v2654 = vld [vmem:[%s2644 + $0x30] sm:$0xf]
      %v2655 = vld [vmem:[%s2644 + $0x34] sm:$0xf]
      %v2656 = vld [vmem:[%s2644 + $0x38] sm:$0xf]
      %v2657 = vld [vmem:[%s2644 + $0x40] sm:$0xf]
      %v2658 = vld [vmem:[%s2644 + $0x44] sm:$0xf]
      %v2659 = vld [vmem:[%s2644 + $0x48] sm:$0xf]
      %v2660 = vld [vmem:[%s2644 + $0x50] sm:$0xf]
      %v2661 = vld [vmem:[%s2644 + $0x54] sm:$0xf]
      %v2662 = vld [vmem:[%s2644 + $0x58] sm:$0xf]
      %v2663 = vld [vmem:[%s2644 + $0x60] sm:$0xf]
      %v2664 = vld [vmem:[%s2644 + $0x64] sm:$0xf]
      %v2665 = vld [vmem:[%s2644 + $0x68] sm:$0xf]
      %v2666 = vld [vmem:[%s2644 + $0x70] sm:$0xf]
      %v2667 = vld [vmem:[%s2644 + $0x74] sm:$0xf]
      %v2668 = vld [vmem:[%s2644 + $0x78] sm:$0xf]
      %v2693 = vrot.slane %v2645, 5
      %v2694 = vrot.slane %v2693, 4
      %v2695 = vrot.slane %v2646, 5
      %v2696 = vsel %vm2307, %v2694, %v2695
      %v2697 = vrot.slane %v2695, 4
      %v2698 = vrot.slane %v2647, 5
      %v2699 = vsel %vm2307, %v2697, %v2698
      %v2700 = vrot.slane %v2648, 5
      %v2701 = vrot.slane %v2700, 4
      %v2702 = vrot.slane %v2649, 5
      %v2703 = vsel %vm2307, %v2701, %v2702
      %v2704 = vrot.slane %v2702, 4
      %v2705 = vrot.slane %v2650, 5
      %v2706 = vsel %vm2307, %v2704, %v2705
      %v2707 = vrot.slane %v2651, 5
      %v2708 = vrot.slane %v2707, 4
      %v2709 = vrot.slane %v2652, 5
      %v2710 = vsel %vm2307, %v2708, %v2709
      %v2711 = vrot.slane %v2709, 4
      %v2712 = vrot.slane %v2653, 5
      %v2713 = vsel %vm2307, %v2711, %v2712
      %v2714 = vrot.slane %v2654, 5
      %v2715 = vrot.slane %v2714, 4
      %v2716 = vrot.slane %v2655, 5
      %v2717 = vsel %vm2307, %v2715, %v2716
      %v2718 = vrot.slane %v2716, 4
      %v2719 = vrot.slane %v2656, 5
      %v2720 = vsel %vm2307, %v2718, %v2719
      %v2721 = vrot.slane %v2657, 5
      %v2722 = vrot.slane %v2721, 4
      %v2723 = vrot.slane %v2658, 5
      %v2724 = vsel %vm2307, %v2722, %v2723
      %v2725 = vrot.slane %v2723, 4
      %v2726 = vrot.slane %v2659, 5
      %v2727 = vsel %vm2307, %v2725, %v2726
      %v2728 = vrot.slane %v2660, 5
      %v2729 = vrot.slane %v2728, 4
      %v2730 = vrot.slane %v2661, 5
      %v2731 = vsel %vm2307, %v2729, %v2730
      %v2732 = vrot.slane %v2730, 4
      %v2733 = vrot.slane %v2662, 5
      %v2734 = vsel %vm2307, %v2732, %v2733
      %v2735 = vrot.slane %v2663, 5
      %v2736 = vrot.slane %v2735, 4
      %v2737 = vrot.slane %v2664, 5
      %v2738 = vsel %vm2307, %v2736, %v2737
      %v2739 = vrot.slane %v2737, 4
      %v2740 = vrot.slane %v2665, 5
      %v2741 = vsel %vm2307, %v2739, %v2740
      %v2742 = vrot.slane %v2666, 5
      %v2743 = vrot.slane %v2742, 4
      %v2744 = vrot.slane %v2667, 5
      %v2745 = vsel %vm2307, %v2743, %v2744
      %v2746 = vrot.slane %v2744, 4
      %v2747 = vrot.slane %v2668, 5
      %v2748 = vsel %vm2307, %v2746, %v2747
      %v2750 = vshrl.u32 %v2645, 16
      %v2752 = vrot.slane %v2750, 6
      %v2753 = vshll.u32 %v2645, 16
      %v2755 = vrot.slane %v2753, 7
      %v2756 = vor.u32 %v2752, %v2755
      %v2757 = vrot.slane %v2756, 4
      %v2759 = vshrl.u32 %v2646, 16
      %v2761 = vrot.slane %v2759, 6
      %v2762 = vshll.u32 %v2646, 16
      %v2764 = vrot.slane %v2762, 7
      %v2765 = vor.u32 %v2761, %v2764
      %v2766 = vsel %vm369, %v2757, %v2765
      %v2767 = vrot.slane %v2765, 4
      %v2769 = vshrl.u32 %v2647, 16
      %v2771 = vrot.slane %v2769, 6
      %v2772 = vshll.u32 %v2647, 16
      %v2774 = vrot.slane %v2772, 7
      %v2775 = vor.u32 %v2771, %v2774
      %v2776 = vsel %vm369, %v2767, %v2775
      %v2778 = vshrl.u32 %v2648, 16
      %v2780 = vrot.slane %v2778, 6
      %v2781 = vshll.u32 %v2648, 16
      %v2783 = vrot.slane %v2781, 7
      %v2784 = vor.u32 %v2780, %v2783
      %v2785 = vrot.slane %v2784, 4
      %v2787 = vshrl.u32 %v2649, 16
      %v2789 = vrot.slane %v2787, 6
      %v2790 = vshll.u32 %v2649, 16
      %v2792 = vrot.slane %v2790, 7
      %v2793 = vor.u32 %v2789, %v2792
      %v2794 = vsel %vm369, %v2785, %v2793
      %v2795 = vrot.slane %v2793, 4
      %v2797 = vshrl.u32 %v2650, 16
      %v2799 = vrot.slane %v2797, 6
      %v2800 = vshll.u32 %v2650, 16
      %v2802 = vrot.slane %v2800, 7
      %v2803 = vor.u32 %v2799, %v2802
      %v2804 = vsel %vm369, %v2795, %v2803
      %v2806 = vshrl.u32 %v2651, 16
      %v2808 = vrot.slane %v2806, 6
      %v2809 = vshll.u32 %v2651, 16
      %v2811 = vrot.slane %v2809, 7
      %v2812 = vor.u32 %v2808, %v2811
      %v2813 = vrot.slane %v2812, 4
      %v2815 = vshrl.u32 %v2652, 16
      %v2817 = vrot.slane %v2815, 6
      %v2818 = vshll.u32 %v2652, 16
      %v2820 = vrot.slane %v2818, 7
      %v2821 = vor.u32 %v2817, %v2820
      %v2822 = vsel %vm369, %v2813, %v2821
      %v2823 = vrot.slane %v2821, 4
      %v2825 = vshrl.u32 %v2653, 16
      %v2827 = vrot.slane %v2825, 6
      %v2828 = vshll.u32 %v2653, 16
      %v2830 = vrot.slane %v2828, 7
      %v2831 = vor.u32 %v2827, %v2830
      %v2832 = vsel %vm369, %v2823, %v2831
      %v2834 = vshrl.u32 %v2654, 16
      %v2836 = vrot.slane %v2834, 6
      %v2837 = vshll.u32 %v2654, 16
      %v2839 = vrot.slane %v2837, 7
      %v2840 = vor.u32 %v2836, %v2839
      %v2841 = vrot.slane %v2840, 4
      %v2843 = vshrl.u32 %v2655, 16
      %v2845 = vrot.slane %v2843, 6
      %v2846 = vshll.u32 %v2655, 16
      %v2848 = vrot.slane %v2846, 7
      %v2849 = vor.u32 %v2845, %v2848
      %v2850 = vsel %vm369, %v2841, %v2849
      %v2851 = vrot.slane %v2849, 4
      %v2853 = vshrl.u32 %v2656, 16
      %v2855 = vrot.slane %v2853, 6
      %v2856 = vshll.u32 %v2656, 16
      %v2858 = vrot.slane %v2856, 7
      %v2859 = vor.u32 %v2855, %v2858
      %v2860 = vsel %vm369, %v2851, %v2859
      %v2862 = vshrl.u32 %v2657, 16
      %v2864 = vrot.slane %v2862, 6
      %v2865 = vshll.u32 %v2657, 16
      %v2867 = vrot.slane %v2865, 7
      %v2868 = vor.u32 %v2864, %v2867
      %v2869 = vrot.slane %v2868, 4
      %v2871 = vshrl.u32 %v2658, 16
      %v2873 = vrot.slane %v2871, 6
      %v2874 = vshll.u32 %v2658, 16
      %v2876 = vrot.slane %v2874, 7
      %v2877 = vor.u32 %v2873, %v2876
      %v2878 = vsel %vm369, %v2869, %v2877
      %v2879 = vrot.slane %v2877, 4
      %v2881 = vshrl.u32 %v2659, 16
      %v2883 = vrot.slane %v2881, 6
      %v2884 = vshll.u32 %v2659, 16
      %v2886 = vrot.slane %v2884, 7
      %v2887 = vor.u32 %v2883, %v2886
      %v2888 = vsel %vm369, %v2879, %v2887
      %v2890 = vshrl.u32 %v2660, 16
      %v2892 = vrot.slane %v2890, 6
      %v2893 = vshll.u32 %v2660, 16
      %v2895 = vrot.slane %v2893, 7
      %v2896 = vor.u32 %v2892, %v2895
      %v2897 = vrot.slane %v2896, 4
      %v2899 = vshrl.u32 %v2661, 16
      %v2901 = vrot.slane %v2899, 6
      %v2902 = vshll.u32 %v2661, 16
      %v2904 = vrot.slane %v2902, 7
      %v2905 = vor.u32 %v2901, %v2904
      %v2906 = vsel %vm369, %v2897, %v2905
      %v2907 = vrot.slane %v2905, 4
      %v2909 = vshrl.u32 %v2662, 16
      %v2911 = vrot.slane %v2909, 6
      %v2912 = vshll.u32 %v2662, 16
      %v2914 = vrot.slane %v2912, 7
      %v2915 = vor.u32 %v2911, %v2914
      %v2916 = vsel %vm369, %v2907, %v2915
      %v2918 = vshrl.u32 %v2663, 16
      %v2920 = vrot.slane %v2918, 6
      %v2921 = vshll.u32 %v2663, 16
      %v2923 = vrot.slane %v2921, 7
      %v2924 = vor.u32 %v2920, %v2923
      %v2925 = vrot.slane %v2924, 4
      %v2927 = vshrl.u32 %v2664, 16
      %v2929 = vrot.slane %v2927, 6
      %v2930 = vshll.u32 %v2664, 16
      %v2932 = vrot.slane %v2930, 7
      %v2933 = vor.u32 %v2929, %v2932
      %v2934 = vsel %vm369, %v2925, %v2933
      %v2935 = vrot.slane %v2933, 4
      %v2937 = vshrl.u32 %v2665, 16
      %v2939 = vrot.slane %v2937, 6
      %v2940 = vshll.u32 %v2665, 16
      %v2942 = vrot.slane %v2940, 7
      %v2943 = vor.u32 %v2939, %v2942
      %v2944 = vsel %vm369, %v2935, %v2943
      %v2946 = vshrl.u32 %v2666, 16
      %v2948 = vrot.slane %v2946, 6
      %v2949 = vshll.u32 %v2666, 16
      %v2951 = vrot.slane %v2949, 7
      %v2952 = vor.u32 %v2948, %v2951
      %v2953 = vrot.slane %v2952, 4
      %v2955 = vshrl.u32 %v2667, 16
      %v2957 = vrot.slane %v2955, 6
      %v2958 = vshll.u32 %v2667, 16
      %v2960 = vrot.slane %v2958, 7
      %v2961 = vor.u32 %v2957, %v2960
      %v2962 = vsel %vm369, %v2953, %v2961
      %v2963 = vrot.slane %v2961, 4
      %v2965 = vshrl.u32 %v2668, 16
      %v2967 = vrot.slane %v2965, 6
      %v2968 = vshll.u32 %v2668, 16
      %v2970 = vrot.slane %v2968, 7
      %v2971 = vor.u32 %v2967, %v2970
      %v2972 = vsel %vm369, %v2963, %v2971
      %v2973 = vunpack.c.l.b16 %v2311
      %v2974 = vunpack.c.l.b16 %v2314
      %v2975 = vunpack.c.l.b16 %v2318
      %v2976 = vunpack.c.l.b16 %v2321
      %v2977 = vunpack.c.l.b16 %v2325
      %v2978 = vunpack.c.l.b16 %v2328
      %v2979 = vunpack.c.l.b16 %v2332
      %v2980 = vunpack.c.l.b16 %v2335
      %v2981 = vunpack.c.l.b16 %v2339
      %v2982 = vunpack.c.l.b16 %v2342
      %v2983 = vunpack.c.l.b16 %v2346
      %v2984 = vunpack.c.l.b16 %v2349
      %v2985 = vunpack.c.l.b16 %v2353
      %v2986 = vunpack.c.l.b16 %v2356
      %v2987 = vunpack.c.l.b16 %v2360
      %v2988 = vunpack.c.l.b16 %v2363
      %v2989 = vpack.c.b16 %v2974, %v2973
      %v2990 = vpack.c.b16 %v2976, %v2975
      %v2991 = vpack.c.b16 %v2978, %v2977
      %v2992 = vpack.c.b16 %v2980, %v2979
      %v2993 = vpack.c.b16 %v2982, %v2981
      %v2994 = vpack.c.b16 %v2984, %v2983
      %v2995 = vpack.c.b16 %v2986, %v2985
      %v2996 = vpack.c.b16 %v2988, %v2987
      %v2997 = vunpack.c.l.b16 %v2381
      %v2998 = vunpack.c.l.b16 %v2391
      %v2999 = vunpack.c.l.b16 %v2409
      %v3000 = vunpack.c.l.b16 %v2419
      %v3001 = vunpack.c.l.b16 %v2437
      %v3002 = vunpack.c.l.b16 %v2447
      %v3003 = vunpack.c.l.b16 %v2465
      %v3004 = vunpack.c.l.b16 %v2475
      %v3005 = vunpack.c.l.b16 %v2493
      %v3006 = vunpack.c.l.b16 %v2503
      %v3007 = vunpack.c.l.b16 %v2521
      %v3008 = vunpack.c.l.b16 %v2531
      %v3009 = vunpack.c.l.b16 %v2549
      %v3010 = vunpack.c.l.b16 %v2559
      %v3011 = vunpack.c.l.b16 %v2577
      %v3012 = vunpack.c.l.b16 %v2587
      %v3013 = vpack.c.b16 %v2998, %v2997
      %v3014 = vpack.c.b16 %v3000, %v2999
      %v3015 = vpack.c.b16 %v3002, %v3001
      %v3016 = vpack.c.b16 %v3004, %v3003
      %v3017 = vpack.c.b16 %v3006, %v3005
      %v3018 = vpack.c.b16 %v3008, %v3007
      %v3019 = vpack.c.b16 %v3010, %v3009
      %v3020 = vpack.c.b16 %v3012, %v3011
      %3021 = vrot.lane.b32.xlu0 %v3013, 4
      %v3022 = vpop.permute.xlu0 %3021
      %3023 = vrot.lane.b32.xlu0 %v3014, 4
      %v3024 = vpop.permute.xlu0 %3023
      %3025 = vrot.lane.b32.xlu0 %v3015, 4
      %v3026 = vpop.permute.xlu0 %3025
      %3027 = vrot.lane.b32.xlu0 %v3016, 4
      %v3028 = vpop.permute.xlu0 %3027
      %3029 = vrot.lane.b32.xlu0 %v3017, 4
      %v3030 = vpop.permute.xlu0 %3029
      %3031 = vrot.lane.b32.xlu0 %v3018, 4
      %v3032 = vpop.permute.xlu0 %3031
      %3033 = vrot.lane.b32.xlu0 %v3019, 4
      %v3034 = vpop.permute.xlu0 %3033
      %3035 = vrot.lane.b32.xlu0 %v3020, 4
      %v3036 = vpop.permute.xlu0 %3035
      %v3037 = vunpack.c.l.b16 %v2258
      %v3038 = vunpack.c.l.b16 %v2259
      %v3039 = vunpack.c.l.b16 %v2261
      %v3040 = vunpack.c.l.b16 %v2262
      %v3041 = vunpack.c.l.b16 %v2264
      %v3042 = vunpack.c.l.b16 %v2265
      %v3043 = vunpack.c.l.b16 %v2267
      %v3044 = vunpack.c.l.b16 %v2268
      %v3045 = vunpack.c.l.b16 %v2270
      %v3046 = vunpack.c.l.b16 %v2271
      %v3047 = vunpack.c.l.b16 %v2273
      %v3048 = vunpack.c.l.b16 %v2274
      %v3049 = vunpack.c.l.b16 %v2276
      %v3050 = vunpack.c.l.b16 %v2277
      %v3051 = vunpack.c.l.b16 %v2279
      %v3052 = vunpack.c.l.b16 %v2280
      %v3053 = vpack.c.b16 %v3038, %v3037
      %v3054 = vpack.c.b16 %v3040, %v3039
      %v3055 = vpack.c.b16 %v3042, %v3041
      %v3056 = vpack.c.b16 %v3044, %v3043
      %v3057 = vpack.c.b16 %v3046, %v3045
      %v3058 = vpack.c.b16 %v3048, %v3047
      %v3059 = vpack.c.b16 %v3050, %v3049
      %v3060 = vpack.c.b16 %v3052, %v3051
      %3061 = vrot.lane.b32.xlu0 %v3053, 8
      %v3062 = vpop.permute.xlu0 %3061
      %3063 = vrot.lane.b32.xlu0 %v3054, 8
      %v3064 = vpop.permute.xlu0 %3063
      %3065 = vrot.lane.b32.xlu0 %v3055, 8
      %v3066 = vpop.permute.xlu0 %3065
      %3067 = vrot.lane.b32.xlu0 %v3056, 8
      %v3068 = vpop.permute.xlu0 %3067
      %3069 = vrot.lane.b32.xlu0 %v3057, 8
      %v3070 = vpop.permute.xlu0 %3069
      %3071 = vrot.lane.b32.xlu0 %v3058, 8
      %v3072 = vpop.permute.xlu0 %3071
      %3073 = vrot.lane.b32.xlu0 %v3059, 8
      %v3074 = vpop.permute.xlu0 %3073
      %3075 = vrot.lane.b32.xlu0 %v3060, 8
      %v3076 = vpop.permute.xlu0 %3075
      %v3077 = vunpack.c.l.b16 %v2591
      %v3078 = vunpack.c.l.b16 %v2594
      %v3079 = vunpack.c.l.b16 %v2598
      %v3080 = vunpack.c.l.b16 %v2601
      %v3081 = vunpack.c.l.b16 %v2605
      %v3082 = vunpack.c.l.b16 %v2608
      %v3083 = vunpack.c.l.b16 %v2612
      %v3084 = vunpack.c.l.b16 %v2615
      %v3085 = vunpack.c.l.b16 %v2619
      %v3086 = vunpack.c.l.b16 %v2622
      %v3087 = vunpack.c.l.b16 %v2626
      %v3088 = vunpack.c.l.b16 %v2629
      %v3089 = vunpack.c.l.b16 %v2633
      %v3090 = vunpack.c.l.b16 %v2636
      %v3091 = vunpack.c.l.b16 %v2640
      %v3092 = vunpack.c.l.b16 %v2643
      %v3093 = vpack.c.b16 %v3078, %v3077
      %v3094 = vpack.c.b16 %v3080, %v3079
      %v3095 = vpack.c.b16 %v3082, %v3081
      %v3096 = vpack.c.b16 %v3084, %v3083
      %v3097 = vpack.c.b16 %v3086, %v3085
      %v3098 = vpack.c.b16 %v3088, %v3087
      %v3099 = vpack.c.b16 %v3090, %v3089
      %v3100 = vpack.c.b16 %v3092, %v3091
      %3101 = vrot.lane.b32.xlu0 %v3093, 12
      %v3102 = vpop.permute.xlu0 %3101
      %3103 = vrot.lane.b32.xlu0 %v3094, 12
      %v3104 = vpop.permute.xlu0 %3103
      %3105 = vrot.lane.b32.xlu0 %v3095, 12
      %v3106 = vpop.permute.xlu0 %3105
      %3107 = vrot.lane.b32.xlu0 %v3096, 12
      %v3108 = vpop.permute.xlu0 %3107
      %3109 = vrot.lane.b32.xlu0 %v3097, 12
      %v3110 = vpop.permute.xlu0 %3109
      %3111 = vrot.lane.b32.xlu0 %v3098, 12
      %v3112 = vpop.permute.xlu0 %3111
      %3113 = vrot.lane.b32.xlu0 %v3099, 12
      %v3114 = vpop.permute.xlu0 %3113
      %3115 = vrot.lane.b32.xlu0 %v3100, 12
      %v3116 = vpop.permute.xlu0 %3115
      %v3117 = vunpack.c.l.b16 %v336
      %v3118 = vunpack.c.l.b16 %v337
      %v3119 = vunpack.c.l.b16 %v340
      %v3120 = vunpack.c.l.b16 %v341
      %v3121 = vunpack.c.l.b16 %v344
      %v3122 = vunpack.c.l.b16 %v345
      %v3123 = vunpack.c.l.b16 %v348
      %v3124 = vunpack.c.l.b16 %v349
      %v3125 = vunpack.c.l.b16 %v352
      %v3126 = vunpack.c.l.b16 %v353
      %v3127 = vunpack.c.l.b16 %v356
      %v3128 = vunpack.c.l.b16 %v357
      %v3129 = vunpack.c.l.b16 %v360
      %v3130 = vunpack.c.l.b16 %v361
      %v3131 = vunpack.c.l.b16 %v364
      %v3132 = vunpack.c.l.b16 %v365
      %v3133 = vpack.c.b16 %v3118, %v3117
      %v3134 = vpack.c.b16 %v3120, %v3119
      %v3135 = vpack.c.b16 %v3122, %v3121
      %v3136 = vpack.c.b16 %v3124, %v3123
      %v3137 = vpack.c.b16 %v3126, %v3125
      %v3138 = vpack.c.b16 %v3128, %v3127
      %v3139 = vpack.c.b16 %v3130, %v3129
      %v3140 = vpack.c.b16 %v3132, %v3131
      %3141 = vrot.lane.b32.xlu0 %v3133, 16
      %v3142 = vpop.permute.xlu0 %3141
      %3143 = vrot.lane.b32.xlu0 %v3134, 16
      %v3144 = vpop.permute.xlu0 %3143
      %3145 = vrot.lane.b32.xlu0 %v3135, 16
      %v3146 = vpop.permute.xlu0 %3145
      %3147 = vrot.lane.b32.xlu0 %v3136, 16
      %v3148 = vpop.permute.xlu0 %3147
      %3149 = vrot.lane.b32.xlu0 %v3137, 16
      %v3150 = vpop.permute.xlu0 %3149
      %3151 = vrot.lane.b32.xlu0 %v3138, 16
      %v3152 = vpop.permute.xlu0 %3151
      %3153 = vrot.lane.b32.xlu0 %v3139, 16
      %v3154 = vpop.permute.xlu0 %3153
      %3155 = vrot.lane.b32.xlu0 %v3140, 16
      %v3156 = vpop.permute.xlu0 %3155
      %v3157 = vunpack.c.l.b16 %v2696
      %v3158 = vunpack.c.l.b16 %v2699
      %v3159 = vunpack.c.l.b16 %v2703
      %v3160 = vunpack.c.l.b16 %v2706
      %v3161 = vunpack.c.l.b16 %v2710
      %v3162 = vunpack.c.l.b16 %v2713
      %v3163 = vunpack.c.l.b16 %v2717
      %v3164 = vunpack.c.l.b16 %v2720
      %v3165 = vunpack.c.l.b16 %v2724
      %v3166 = vunpack.c.l.b16 %v2727
      %v3167 = vunpack.c.l.b16 %v2731
      %v3168 = vunpack.c.l.b16 %v2734
      %v3169 = vunpack.c.l.b16 %v2738
      %v3170 = vunpack.c.l.b16 %v2741
      %v3171 = vunpack.c.l.b16 %v2745
      %v3172 = vunpack.c.l.b16 %v2748
      %v3173 = vpack.c.b16 %v3158, %v3157
      %v3174 = vpack.c.b16 %v3160, %v3159
      %v3175 = vpack.c.b16 %v3162, %v3161
      %v3176 = vpack.c.b16 %v3164, %v3163
      %v3177 = vpack.c.b16 %v3166, %v3165
      %v3178 = vpack.c.b16 %v3168, %v3167
      %v3179 = vpack.c.b16 %v3170, %v3169
      %v3180 = vpack.c.b16 %v3172, %v3171
      %3181 = vrot.lane.b32.xlu0 %v3173, 20
      %v3182 = vpop.permute.xlu0 %3181
      %3183 = vrot.lane.b32.xlu0 %v3174, 20
      %v3184 = vpop.permute.xlu0 %3183
      %3185 = vrot.lane.b32.xlu0 %v3175, 20
      %v3186 = vpop.permute.xlu0 %3185
      %3187 = vrot.lane.b32.xlu0 %v3176, 20
      %v3188 = vpop.permute.xlu0 %3187
      %3189 = vrot.lane.b32.xlu0 %v3177, 20
      %v3190 = vpop.permute.xlu0 %3189
      %3191 = vrot.lane.b32.xlu0 %v3178, 20
      %v3192 = vpop.permute.xlu0 %3191
      %3193 = vrot.lane.b32.xlu0 %v3179, 20
      %v3194 = vpop.permute.xlu0 %3193
      %3195 = vrot.lane.b32.xlu0 %v3180, 20
      %v3196 = vpop.permute.xlu0 %3195
      %v3197 = vunpack.c.l.b16 %v2766
      %v3198 = vunpack.c.l.b16 %v2776
      %v3199 = vunpack.c.l.b16 %v2794
      %v3200 = vunpack.c.l.b16 %v2804
      %v3201 = vunpack.c.l.b16 %v2822
      %v3202 = vunpack.c.l.b16 %v2832
      %v3203 = vunpack.c.l.b16 %v2850
      %v3204 = vunpack.c.l.b16 %v2860
      %v3205 = vunpack.c.l.b16 %v2878
      %v3206 = vunpack.c.l.b16 %v2888
      %v3207 = vunpack.c.l.b16 %v2906
      %v3208 = vunpack.c.l.b16 %v2916
      %v3209 = vunpack.c.l.b16 %v2934
      %v3210 = vunpack.c.l.b16 %v2944
      %v3211 = vunpack.c.l.b16 %v2962
      %v3212 = vunpack.c.l.b16 %v2972
      %v3213 = vpack.c.b16 %v3198, %v3197
      %v3214 = vpack.c.b16 %v3200, %v3199
      %v3215 = vpack.c.b16 %v3202, %v3201
      %v3216 = vpack.c.b16 %v3204, %v3203
      %v3217 = vpack.c.b16 %v3206, %v3205
      %v3218 = vpack.c.b16 %v3208, %v3207
      %v3219 = vpack.c.b16 %v3210, %v3209
      %v3220 = vpack.c.b16 %v3212, %v3211
      %3221 = vrot.lane.b32.xlu0 %v3213, 24
      %v3222 = vpop.permute.xlu0 %3221
      %3223 = vrot.lane.b32.xlu0 %v3214, 24
      %v3224 = vpop.permute.xlu0 %3223
      %3225 = vrot.lane.b32.xlu0 %v3215, 24
      %v3226 = vpop.permute.xlu0 %3225
      %3227 = vrot.lane.b32.xlu0 %v3216, 24
      %v3228 = vpop.permute.xlu0 %3227
      %3229 = vrot.lane.b32.xlu0 %v3217, 24
      %v3230 = vpop.permute.xlu0 %3229
      %3231 = vrot.lane.b32.xlu0 %v3218, 24
      %v3232 = vpop.permute.xlu0 %3231
      %3233 = vrot.lane.b32.xlu0 %v3219, 24
      %v3234 = vpop.permute.xlu0 %3233
      %3235 = vrot.lane.b32.xlu0 %v3220, 24
      %v3236 = vpop.permute.xlu0 %3235
      %v3237 = vunpack.c.l.b16 %v2646
      %v3238 = vunpack.c.l.b16 %v2647
      %v3239 = vunpack.c.l.b16 %v2649
      %v3240 = vunpack.c.l.b16 %v2650
      %v3241 = vunpack.c.l.b16 %v2652
      %v3242 = vunpack.c.l.b16 %v2653
      %v3243 = vunpack.c.l.b16 %v2655
      %v3244 = vunpack.c.l.b16 %v2656
      %v3245 = vunpack.c.l.b16 %v2658
      %v3246 = vunpack.c.l.b16 %v2659
      %v3247 = vunpack.c.l.b16 %v2661
      %v3248 = vunpack.c.l.b16 %v2662
      %v3249 = vunpack.c.l.b16 %v2664
      %v3250 = vunpack.c.l.b16 %v2665
      %v3251 = vunpack.c.l.b16 %v2667
      %v3252 = vunpack.c.l.b16 %v2668
      %v3253 = vpack.c.b16 %v3238, %v3237
      %v3254 = vpack.c.b16 %v3240, %v3239
      %v3255 = vpack.c.b16 %v3242, %v3241
      %v3256 = vpack.c.b16 %v3244, %v3243
      %v3257 = vpack.c.b16 %v3246, %v3245
      %v3258 = vpack.c.b16 %v3248, %v3247
      %v3259 = vpack.c.b16 %v3250, %v3249
      %v3260 = vpack.c.b16 %v3252, %v3251
      %3261 = vrot.lane.b32.xlu0 %v3253, 28
      %v3262 = vpop.permute.xlu0 %3261
      %3263 = vrot.lane.b32.xlu0 %v3254, 28
      %v3264 = vpop.permute.xlu0 %3263
      %3265 = vrot.lane.b32.xlu0 %v3255, 28
      %v3266 = vpop.permute.xlu0 %3265
      %3267 = vrot.lane.b32.xlu0 %v3256, 28
      %v3268 = vpop.permute.xlu0 %3267
      %3269 = vrot.lane.b32.xlu0 %v3257, 28
      %v3270 = vpop.permute.xlu0 %3269
      %3271 = vrot.lane.b32.xlu0 %v3258, 28
      %v3272 = vpop.permute.xlu0 %3271
      %3273 = vrot.lane.b32.xlu0 %v3259, 28
      %v3274 = vpop.permute.xlu0 %3273
      %3275 = vrot.lane.b32.xlu0 %v3260, 28
      %v3276 = vpop.permute.xlu0 %3275
      %v3279 = vsel %vm619, %v2989, %v3022
      %v3282 = vsel %vm619, %v2990, %v3024
      %v3285 = vsel %vm619, %v2991, %v3026
      %v3288 = vsel %vm619, %v2992, %v3028
      %v3291 = vsel %vm619, %v2993, %v3030
      %v3294 = vsel %vm619, %v2994, %v3032
      %v3297 = vsel %vm619, %v2995, %v3034
      %v3300 = vsel %vm619, %v2996, %v3036
      %v3302 = vsel %vm1985, %v3279, %v3062
      %v3304 = vsel %vm1985, %v3282, %v3064
      %v3306 = vsel %vm1985, %v3285, %v3066
      %v3308 = vsel %vm1985, %v3288, %v3068
      %v3310 = vsel %vm1985, %v3291, %v3070
      %v3312 = vsel %vm1985, %v3294, %v3072
      %v3314 = vsel %vm1985, %v3297, %v3074
      %v3316 = vsel %vm1985, %v3300, %v3076
      %v3318 = vsel %vm2002, %v3302, %v3102
      %v3320 = vsel %vm2002, %v3304, %v3104
      %v3322 = vsel %vm2002, %v3306, %v3106
      %v3324 = vsel %vm2002, %v3308, %v3108
      %v3326 = vsel %vm2002, %v3310, %v3110
      %v3328 = vsel %vm2002, %v3312, %v3112
      %v3330 = vsel %vm2002, %v3314, %v3114
      %v3332 = vsel %vm2002, %v3316, %v3116
      %v3334 = vsel %vm2019, %v3318, %v3142
      %v3336 = vsel %vm2019, %v3320, %v3144
      %v3338 = vsel %vm2019, %v3322, %v3146
      %v3340 = vsel %vm2019, %v3324, %v3148
      %v3342 = vsel %vm2019, %v3326, %v3150
      %v3344 = vsel %vm2019, %v3328, %v3152
      %v3346 = vsel %vm2019, %v3330, %v3154
      %v3348 = vsel %vm2019, %v3332, %v3156
      %v3350 = vsel %vm2036, %v3334, %v3182
      %v3352 = vsel %vm2036, %v3336, %v3184
      %v3354 = vsel %vm2036, %v3338, %v3186
      %v3356 = vsel %vm2036, %v3340, %v3188
      %v3358 = vsel %vm2036, %v3342, %v3190
      %v3360 = vsel %vm2036, %v3344, %v3192
      %v3362 = vsel %vm2036, %v3346, %v3194
      %v3364 = vsel %vm2036, %v3348, %v3196
      %v3366 = vsel %vm2053, %v3350, %v3222
      %v3368 = vsel %vm2053, %v3352, %v3224
      %v3370 = vsel %vm2053, %v3354, %v3226
      %v3372 = vsel %vm2053, %v3356, %v3228
      %v3374 = vsel %vm2053, %v3358, %v3230
      %v3376 = vsel %vm2053, %v3360, %v3232
      %v3378 = vsel %vm2053, %v3362, %v3234
      %v3380 = vsel %vm2053, %v3364, %v3236
      %v3382 = vsel %vm2070, %v3366, %v3262
      %v3384 = vsel %vm2070, %v3368, %v3264
      %v3386 = vsel %vm2070, %v3370, %v3266
      %v3388 = vsel %vm2070, %v3372, %v3268
      %v3390 = vsel %vm2070, %v3374, %v3270
      %v3392 = vsel %vm2070, %v3376, %v3272
      %v3394 = vsel %vm2070, %v3378, %v3274
      %v3396 = vsel %vm2070, %v3380, %v3276
      %v3397 = vld [vmem:[%s3] sm:$0xf]
      %v3398 = vld [vmem:[%s3 + $0x4] sm:$0xf]
      %v3399 = vld [vmem:[%s3 + $0x8] sm:$0xf]
      %v3400 = vld [vmem:[%s3 + $0xc] sm:$0xf]
      %v3405 = vunpack.c.l.b16 %v3397
      %v3406 = vunpack.c.l.b16 %v3398
      %v3407 = vunpack.c.l.b16 %v3399
      %v3408 = vunpack.c.l.b16 %v3400
      %v3409 = vpack.c.b16 %v3406, %v3405
      %v3410 = vpack.c.b16 %v3408, %v3407
      %3429 = vrot.lane.b32.xlu0 %v683, 125
      %v3430 = vpop.permute.xlu0 %3429
      %3431 = vrot.lane.b32.xlu0 %v686, 125
      %v3432 = vpop.permute.xlu0 %3431
      %3433 = vrot.lane.b32.xlu0 %v691, 125
      %v3434 = vpop.permute.xlu0 %3433
      %3435 = vrot.lane.b32.xlu0 %v694, 125
      %v3436 = vpop.permute.xlu0 %3435
      %3437 = vrot.lane.b32.xlu0 %v699, 125
      %v3438 = vpop.permute.xlu0 %3437
      %3439 = vrot.lane.b32.xlu0 %v702, 125
      %v3440 = vpop.permute.xlu0 %3439
      %3441 = vrot.lane.b32.xlu0 %v707, 125
      %v3442 = vpop.permute.xlu0 %3441
      %3443 = vrot.lane.b32.xlu0 %v710, 125
      %v3444 = vpop.permute.xlu0 %3443
      %3445 = vrot.lane.b32.xlu0 %v715, 125
      %v3446 = vpop.permute.xlu0 %3445
      %3447 = vrot.lane.b32.xlu0 %v718, 125
      %v3448 = vpop.permute.xlu0 %3447
      %3449 = vrot.lane.b32.xlu0 %v723, 125
      %v3450 = vpop.permute.xlu0 %3449
      %3451 = vrot.lane.b32.xlu0 %v726, 125
      %v3452 = vpop.permute.xlu0 %3451
      %3453 = vrot.lane.b32.xlu0 %v731, 125
      %v3454 = vpop.permute.xlu0 %3453
      %3455 = vrot.lane.b32.xlu0 %v734, 125
      %v3456 = vpop.permute.xlu0 %3455
      %3457 = vrot.lane.b32.xlu0 %v739, 125
      %v3458 = vpop.permute.xlu0 %3457
      %3459 = vrot.lane.b32.xlu0 %v742, 125
      %v3460 = vpop.permute.xlu0 %3459
      %v3477 = vsel %vm2103, %v3382, 0
      %v3479 = vsel %vm2103, %v3384, 0
      %v3481 = vsel %vm2103, %v3386, 0
      %v3483 = vsel %vm2103, %v3388, 0
      %v3485 = vsel %vm2103, %v3390, 0
      %v3487 = vsel %vm2103, %v3392, 0
      %v3489 = vsel %vm2103, %v3394, 0
      %v3491 = vsel %vm2103, %v3396, 0
      %3493 = vmatprep.subr.bf16.mxu0 0
      %3494 = vmatpush1.bf16.msra.mxu0 0
      %3495 = vmatprep.subr.bf16.mxu0 0
      %3496 = vmatpush1.bf16.msra.mxu0 0
      %3497 = vmatprep.subr.bf16.mxu0 0
      %3498 = vmatpush1.bf16.msra.mxu0 0
      %3499 = vmatprep.subr.bf16.mxu0 0
      %3500 = vmatpush1.bf16.msra.mxu0 0
      %3501 = vmatprep.subr.bf16.mxu0 0
      %3502 = vmatpush1.bf16.msra.mxu0 0
      %3503 = vmatprep.subr.bf16.mxu0 0
      %3504 = vmatpush1.bf16.msra.mxu0 0
      %3505 = vmatprep.subr.bf16.mxu0 0
      %3506 = vmatpush1.bf16.msra.mxu0 %v3410
      %3507 = vmatprep.subr.bf16.mxu0 0
      %3508 = vmatpush1.bf16.msra.mxu0 %v3409
      %3509 = vmatprep.subr.bf16.mxu0 0
      %3510 = vmatpush2.bf16.msra.mxu0 0
      %3511 = vmatprep.subr.bf16.mxu0 0
      %3512 = vmatpush2.bf16.msra.mxu0 0
      %3513 = vmatprep.subr.bf16.mxu0 0
      %3514 = vmatpush2.bf16.msra.mxu0 0
      %3515 = vmatprep.subr.bf16.mxu0 0
      %3516 = vmatpush2.bf16.msra.mxu0 0
      %3517 = vmatprep.subr.bf16.mxu0 0
      %3518 = vmatpush2.bf16.msra.mxu0 0
      %3519 = vmatprep.subr.bf16.mxu0 0
      %3520 = vmatpush2.bf16.msra.mxu0 0
      %3521 = vmatprep.subr.bf16.mxu0 0
      %3522 = vmatpush2.bf16.msra.mxu0 0
      %3523 = vmatprep.subr.bf16.mxu0 0
      %3524 = vmatpush2.bf16.msra.mxu0 0
      %3525 = vmatprep.mubr.bf16.mxu0 0
      %3526 = vmatmul.mubr.bf16.gmra.mxu0 %v3477
      %v3527 = vpop.f32.mrf.mxu0
      %v3528 = vadd.f32 %v3430, %v3527
      %v3529 = vpop.f32.mrf.mxu0
      %v3530 = vpop.f32.mrf.mxu0
      %v3531 = vadd.f32 %v3432, %v3530
      %v3532 = vpop.f32.mrf.mxu0
      %3533 = vmatprep.mubr.bf16.mxu0 0
      %3534 = vmatmul.mubr.bf16.gmra.mxu0 %v3479
      %v3535 = vpop.f32.mrf.mxu0
      %v3536 = vadd.f32 %v3434, %v3535
      %v3537 = vpop.f32.mrf.mxu0
      %v3538 = vpop.f32.mrf.mxu0
      %v3539 = vadd.f32 %v3436, %v3538
      %v3540 = vpop.f32.mrf.mxu0
      %3541 = vmatprep.mubr.bf16.mxu0 0
      %3542 = vmatmul.mubr.bf16.gmra.mxu0 %v3481
      %v3543 = vpop.f32.mrf.mxu0
      %v3544 = vadd.f32 %v3438, %v3543
      %v3545 = vpop.f32.mrf.mxu0
      %v3546 = vpop.f32.mrf.mxu0
      %v3547 = vadd.f32 %v3440, %v3546
      %v3548 = vpop.f32.mrf.mxu0
      %3549 = vmatprep.mubr.bf16.mxu0 0
      %3550 = vmatmul.mubr.bf16.gmra.mxu0 %v3483
      %v3551 = vpop.f32.mrf.mxu0
      %v3552 = vadd.f32 %v3442, %v3551
      %v3553 = vpop.f32.mrf.mxu0
      %v3554 = vpop.f32.mrf.mxu0
      %v3555 = vadd.f32 %v3444, %v3554
      %v3556 = vpop.f32.mrf.mxu0
      %3557 = vmatprep.mubr.bf16.mxu0 0
      %3558 = vmatmul.mubr.bf16.gmra.mxu0 %v3485
      %v3559 = vpop.f32.mrf.mxu0
      %v3560 = vadd.f32 %v3446, %v3559
      %v3561 = vpop.f32.mrf.mxu0
      %v3562 = vpop.f32.mrf.mxu0
      %v3563 = vadd.f32 %v3448, %v3562
      %v3564 = vpop.f32.mrf.mxu0
      %3565 = vmatprep.mubr.bf16.mxu0 0
      %3566 = vmatmul.mubr.bf16.gmra.mxu0 %v3487
      %v3567 = vpop.f32.mrf.mxu0
      %v3568 = vadd.f32 %v3450, %v3567
      %v3569 = vpop.f32.mrf.mxu0
      %v3570 = vpop.f32.mrf.mxu0
      %v3571 = vadd.f32 %v3452, %v3570
      %v3572 = vpop.f32.mrf.mxu0
      %3573 = vmatprep.mubr.bf16.mxu0 0
      %3574 = vmatmul.mubr.bf16.gmra.mxu0 %v3489
      %v3575 = vpop.f32.mrf.mxu0
      %v3576 = vadd.f32 %v3454, %v3575
      %v3577 = vpop.f32.mrf.mxu0
      %v3578 = vpop.f32.mrf.mxu0
      %v3579 = vadd.f32 %v3456, %v3578
      %v3580 = vpop.f32.mrf.mxu0
      %3581 = vmatprep.mubr.bf16.mxu0 0
      %3582 = vmatmul.mubr.bf16.gmra.mxu0 %v3491
      %v3583 = vpop.f32.mrf.mxu0
      %v3584 = vadd.f32 %v3458, %v3583
      %v3585 = vpop.f32.mrf.mxu0
      %v3586 = vpop.f32.mrf.mxu0
      %v3587 = vadd.f32 %v3460, %v3586
      %v3588 = vpop.f32.mrf.mxu0
      %3589 = vdwg.mxu0
      %v3590 = vld [vmem:[%s6] sm:$0x1]
      %v3592 = vlaneseq
      %v3593 = vshrl.u32 %v3592, 7
      %v3594 = vsub.s32 0, %v3593
      %v3595 = vrot.slane %v3590, %v3594
      %v3597 = vadd.f32 %v3528, %v3595
      %v3598 = vadd.f32 %v3531, %v3595
      %v3599 = vadd.f32 %v3536, %v3595
      %v3600 = vadd.f32 %v3539, %v3595
      %v3601 = vadd.f32 %v3544, %v3595
      %v3602 = vadd.f32 %v3547, %v3595
      %v3603 = vadd.f32 %v3552, %v3595
      %v3604 = vadd.f32 %v3555, %v3595
      %v3605 = vadd.f32 %v3560, %v3595
      %v3606 = vadd.f32 %v3563, %v3595
      %v3607 = vadd.f32 %v3568, %v3595
      %v3608 = vadd.f32 %v3571, %v3595
      %v3609 = vadd.f32 %v3576, %v3595
      %v3610 = vadd.f32 %v3579, %v3595
      %v3611 = vadd.f32 %v3584, %v3595
      %v3612 = vadd.f32 %v3587, %v3595
      %v3613 = vmax.f32 %v3597, 0.0
      %v3614 = vmax.f32 %v3598, 0.0
      %v3615 = vmax.f32 %v3599, 0.0
      %v3616 = vmax.f32 %v3600, 0.0
      %v3617 = vmax.f32 %v3601, 0.0
      %v3618 = vmax.f32 %v3602, 0.0
      %v3619 = vmax.f32 %v3603, 0.0
      %v3620 = vmax.f32 %v3604, 0.0
      %v3621 = vmax.f32 %v3605, 0.0
      %v3622 = vmax.f32 %v3606, 0.0
      %v3623 = vmax.f32 %v3607, 0.0
      %v3624 = vmax.f32 %v3608, 0.0
      %v3625 = vmax.f32 %v3609, 0.0
      %v3626 = vmax.f32 %v3610, 0.0
      %v3627 = vmax.f32 %v3611, 0.0
      %v3628 = vmax.f32 %v3612, 0.0
      %v3629 = vadd.f32 %v2240, %v3613
      %v3630 = vadd.f32 %v2241, %v3614
      %v3631 = vadd.f32 %v2242, %v3615
      %v3632 = vadd.f32 %v2243, %v3616
      %v3633 = vadd.f32 %v2244, %v3617
      %v3634 = vadd.f32 %v2245, %v3618
      %v3635 = vadd.f32 %v2246, %v3619
      %v3636 = vadd.f32 %v2247, %v3620
      %v3637 = vadd.f32 %v2248, %v3621
      %v3638 = vadd.f32 %v2249, %v3622
      %v3639 = vadd.f32 %v2250, %v3623
      %v3640 = vadd.f32 %v2251, %v3624
      %v3641 = vadd.f32 %v2252, %v3625
      %v3642 = vadd.f32 %v2253, %v3626
      %v3643 = vadd.f32 %v2254, %v3627
      %v3644 = vadd.f32 %v2255, %v3628
      %v3645 = vld [vmem:[%s327] sm:$0xf]
      %v3646 = vld [vmem:[%s327 + $0x4] sm:$0xf]
      %v3647 = vld [vmem:[%s327 + $0x8] sm:$0xf]
      %v3648 = vld [vmem:[%s327 + $0xc] sm:$0x1]
      %v3649 = vld [vmem:[%s327 + $0x10] sm:$0xf]
      %v3650 = vld [vmem:[%s327 + $0x14] sm:$0xf]
      %v3651 = vld [vmem:[%s327 + $0x18] sm:$0xf]
      %v3652 = vld [vmem:[%s327 + $0x1c] sm:$0x1]
      %v3653 = vld [vmem:[%s327 + $0x20] sm:$0xf]
      %v3654 = vld [vmem:[%s327 + $0x24] sm:$0xf]
      %v3655 = vld [vmem:[%s327 + $0x28] sm:$0xf]
      %v3656 = vld [vmem:[%s327 + $0x2c] sm:$0x1]
      %v3657 = vld [vmem:[%s327 + $0x30] sm:$0xf]
      %v3658 = vld [vmem:[%s327 + $0x34] sm:$0xf]
      %v3659 = vld [vmem:[%s327 + $0x38] sm:$0xf]
      %v3660 = vld [vmem:[%s327 + $0x3c] sm:$0x1]
      %v3661 = vld [vmem:[%s327 + $0x40] sm:$0xf]
      %v3662 = vld [vmem:[%s327 + $0x44] sm:$0xf]
      %v3663 = vld [vmem:[%s327 + $0x48] sm:$0xf]
      %v3664 = vld [vmem:[%s327 + $0x4c] sm:$0x1]
      %v3665 = vld [vmem:[%s327 + $0x50] sm:$0xf]
      %v3666 = vld [vmem:[%s327 + $0x54] sm:$0xf]
      %v3667 = vld [vmem:[%s327 + $0x58] sm:$0xf]
      %v3668 = vld [vmem:[%s327 + $0x5c] sm:$0x1]
      %v3669 = vld [vmem:[%s327 + $0x60] sm:$0xf]
      %v3670 = vld [vmem:[%s327 + $0x64] sm:$0xf]
      %v3671 = vld [vmem:[%s327 + $0x68] sm:$0xf]
      %v3672 = vld [vmem:[%s327 + $0x6c] sm:$0x1]
      %v3673 = vld [vmem:[%s327 + $0x70] sm:$0xf]
      %v3674 = vld [vmem:[%s327 + $0x74] sm:$0xf]
      %v3675 = vld [vmem:[%s327 + $0x78] sm:$0xf]
      %v3676 = vld [vmem:[%s327 + $0x7c] sm:$0x1]
      %v3678 = vshrl.u32 %v3645, 16
      %v3680 = vrot.slane %v3678, 6
      %v3681 = vshll.u32 %v3645, 16
      %v3683 = vrot.slane %v3681, 7
      %v3684 = vor.u32 %v3680, %v3683
      %v3685 = vrot.slane %v3684, 4
      %v3687 = vshrl.u32 %v3646, 16
      %v3689 = vrot.slane %v3687, 6
      %v3690 = vshll.u32 %v3646, 16
      %v3692 = vrot.slane %v3690, 7
      %v3693 = vor.u32 %v3689, %v3692
      %v3694 = vsel %vm369, %v3685, %v3693
      %v3695 = vrot.slane %v3693, 4
      %v3697 = vshrl.u32 %v3647, 16
      %v3699 = vrot.slane %v3697, 6
      %v3700 = vshll.u32 %v3647, 16
      %v3702 = vrot.slane %v3700, 7
      %v3703 = vor.u32 %v3699, %v3702
      %v3704 = vsel %vm369, %v3695, %v3703
      %v3706 = vshrl.u32 %v3649, 16
      %v3708 = vrot.slane %v3706, 6
      %v3709 = vshll.u32 %v3649, 16
      %v3711 = vrot.slane %v3709, 7
      %v3712 = vor.u32 %v3708, %v3711
      %v3713 = vrot.slane %v3712, 4
      %v3715 = vshrl.u32 %v3650, 16
      %v3717 = vrot.slane %v3715, 6
      %v3718 = vshll.u32 %v3650, 16
      %v3720 = vrot.slane %v3718, 7
      %v3721 = vor.u32 %v3717, %v3720
      %v3722 = vsel %vm369, %v3713, %v3721
      %v3723 = vrot.slane %v3721, 4
      %v3725 = vshrl.u32 %v3651, 16
      %v3727 = vrot.slane %v3725, 6
      %v3728 = vshll.u32 %v3651, 16
      %v3730 = vrot.slane %v3728, 7
      %v3731 = vor.u32 %v3727, %v3730
      %v3732 = vsel %vm369, %v3723, %v3731
      %v3734 = vshrl.u32 %v3653, 16
      %v3736 = vrot.slane %v3734, 6
      %v3737 = vshll.u32 %v3653, 16
      %v3739 = vrot.slane %v3737, 7
      %v3740 = vor.u32 %v3736, %v3739
      %v3741 = vrot.slane %v3740, 4
      %v3743 = vshrl.u32 %v3654, 16
      %v3745 = vrot.slane %v3743, 6
      %v3746 = vshll.u32 %v3654, 16
      %v3748 = vrot.slane %v3746, 7
      %v3749 = vor.u32 %v3745, %v3748
      %v3750 = vsel %vm369, %v3741, %v3749
      %v3751 = vrot.slane %v3749, 4
      %v3753 = vshrl.u32 %v3655, 16
      %v3755 = vrot.slane %v3753, 6
      %v3756 = vshll.u32 %v3655, 16
      %v3758 = vrot.slane %v3756, 7
      %v3759 = vor.u32 %v3755, %v3758
      %v3760 = vsel %vm369, %v3751, %v3759
      %v3762 = vshrl.u32 %v3657, 16
      %v3764 = vrot.slane %v3762, 6
      %v3765 = vshll.u32 %v3657, 16
      %v3767 = vrot.slane %v3765, 7
      %v3768 = vor.u32 %v3764, %v3767
      %v3769 = vrot.slane %v3768, 4
      %v3771 = vshrl.u32 %v3658, 16
      %v3773 = vrot.slane %v3771, 6
      %v3774 = vshll.u32 %v3658, 16
      %v3776 = vrot.slane %v3774, 7
      %v3777 = vor.u32 %v3773, %v3776
      %v3778 = vsel %vm369, %v3769, %v3777
      %v3779 = vrot.slane %v3777, 4
      %v3781 = vshrl.u32 %v3659, 16
      %v3783 = vrot.slane %v3781, 6
      %v3784 = vshll.u32 %v3659, 16
      %v3786 = vrot.slane %v3784, 7
      %v3787 = vor.u32 %v3783, %v3786
      %v3788 = vsel %vm369, %v3779, %v3787
      %v3790 = vshrl.u32 %v3661, 16
      %v3792 = vrot.slane %v3790, 6
      %v3793 = vshll.u32 %v3661, 16
      %v3795 = vrot.slane %v3793, 7
      %v3796 = vor.u32 %v3792, %v3795
      %v3797 = vrot.slane %v3796, 4
      %v3799 = vshrl.u32 %v3662, 16
      %v3801 = vrot.slane %v3799, 6
      %v3802 = vshll.u32 %v3662, 16
      %v3804 = vrot.slane %v3802, 7
      %v3805 = vor.u32 %v3801, %v3804
      %v3806 = vsel %vm369, %v3797, %v3805
      %v3807 = vrot.slane %v3805, 4
      %v3809 = vshrl.u32 %v3663, 16
      %v3811 = vrot.slane %v3809, 6
      %v3812 = vshll.u32 %v3663, 16
      %v3814 = vrot.slane %v3812, 7
      %v3815 = vor.u32 %v3811, %v3814
      %v3816 = vsel %vm369, %v3807, %v3815
      %v3818 = vshrl.u32 %v3665, 16
      %v3820 = vrot.slane %v3818, 6
      %v3821 = vshll.u32 %v3665, 16
      %v3823 = vrot.slane %v3821, 7
      %v3824 = vor.u32 %v3820, %v3823
      %v3825 = vrot.slane %v3824, 4
      %v3827 = vshrl.u32 %v3666, 16
      %v3829 = vrot.slane %v3827, 6
      %v3830 = vshll.u32 %v3666, 16
      %v3832 = vrot.slane %v3830, 7
      %v3833 = vor.u32 %v3829, %v3832
      %v3834 = vsel %vm369, %v3825, %v3833
      %v3835 = vrot.slane %v3833, 4
      %v3837 = vshrl.u32 %v3667, 16
      %v3839 = vrot.slane %v3837, 6
      %v3840 = vshll.u32 %v3667, 16
      %v3842 = vrot.slane %v3840, 7
      %v3843 = vor.u32 %v3839, %v3842
      %v3844 = vsel %vm369, %v3835, %v3843
      %v3846 = vshrl.u32 %v3669, 16
      %v3848 = vrot.slane %v3846, 6
      %v3849 = vshll.u32 %v3669, 16
      %v3851 = vrot.slane %v3849, 7
      %v3852 = vor.u32 %v3848, %v3851
      %v3853 = vrot.slane %v3852, 4
      %v3855 = vshrl.u32 %v3670, 16
      %v3857 = vrot.slane %v3855, 6
      %v3858 = vshll.u32 %v3670, 16
      %v3860 = vrot.slane %v3858, 7
      %v3861 = vor.u32 %v3857, %v3860
      %v3862 = vsel %vm369, %v3853, %v3861
      %v3863 = vrot.slane %v3861, 4
      %v3865 = vshrl.u32 %v3671, 16
      %v3867 = vrot.slane %v3865, 6
      %v3868 = vshll.u32 %v3671, 16
      %v3870 = vrot.slane %v3868, 7
      %v3871 = vor.u32 %v3867, %v3870
      %v3872 = vsel %vm369, %v3863, %v3871
      %v3874 = vshrl.u32 %v3673, 16
      %v3876 = vrot.slane %v3874, 6
      %v3877 = vshll.u32 %v3673, 16
      %v3879 = vrot.slane %v3877, 7
      %v3880 = vor.u32 %v3876, %v3879
      %v3881 = vrot.slane %v3880, 4
      %v3883 = vshrl.u32 %v3674, 16
      %v3885 = vrot.slane %v3883, 6
      %v3886 = vshll.u32 %v3674, 16
      %v3888 = vrot.slane %v3886, 7
      %v3889 = vor.u32 %v3885, %v3888
      %v3890 = vsel %vm369, %v3881, %v3889
      %v3891 = vrot.slane %v3889, 4
      %v3893 = vshrl.u32 %v3675, 16
      %v3895 = vrot.slane %v3893, 6
      %v3896 = vshll.u32 %v3675, 16
      %v3898 = vrot.slane %v3896, 7
      %v3899 = vor.u32 %v3895, %v3898
      %v3900 = vsel %vm369, %v3891, %v3899
      %v3925 = vrot.slane %v3646, 5
      %v3926 = vrot.slane %v3925, 4
      %v3927 = vrot.slane %v3647, 5
      %v3928 = vsel %vm2307, %v3926, %v3927
      %v3929 = vrot.slane %v3927, 4
      %v3930 = vrot.slane %v3648, 5
      %v3931 = vsel %vm2307, %v3929, %v3930
      %v3932 = vrot.slane %v3650, 5
      %v3933 = vrot.slane %v3932, 4
      %v3934 = vrot.slane %v3651, 5
      %v3935 = vsel %vm2307, %v3933, %v3934
      %v3936 = vrot.slane %v3934, 4
      %v3937 = vrot.slane %v3652, 5
      %v3938 = vsel %vm2307, %v3936, %v3937
      %v3939 = vrot.slane %v3654, 5
      %v3940 = vrot.slane %v3939, 4
      %v3941 = vrot.slane %v3655, 5
      %v3942 = vsel %vm2307, %v3940, %v3941
      %v3943 = vrot.slane %v3941, 4
      %v3944 = vrot.slane %v3656, 5
      %v3945 = vsel %vm2307, %v3943, %v3944
      %v3946 = vrot.slane %v3658, 5
      %v3947 = vrot.slane %v3946, 4
      %v3948 = vrot.slane %v3659, 5
      %v3949 = vsel %vm2307, %v3947, %v3948
      %v3950 = vrot.slane %v3948, 4
      %v3951 = vrot.slane %v3660, 5
      %v3952 = vsel %vm2307, %v3950, %v3951
      %v3953 = vrot.slane %v3662, 5
      %v3954 = vrot.slane %v3953, 4
      %v3955 = vrot.slane %v3663, 5
      %v3956 = vsel %vm2307, %v3954, %v3955
      %v3957 = vrot.slane %v3955, 4
      %v3958 = vrot.slane %v3664, 5
      %v3959 = vsel %vm2307, %v3957, %v3958
      %v3960 = vrot.slane %v3666, 5
      %v3961 = vrot.slane %v3960, 4
      %v3962 = vrot.slane %v3667, 5
      %v3963 = vsel %vm2307, %v3961, %v3962
      %v3964 = vrot.slane %v3962, 4
      %v3965 = vrot.slane %v3668, 5
      %v3966 = vsel %vm2307, %v3964, %v3965
      %v3967 = vrot.slane %v3670, 5
      %v3968 = vrot.slane %v3967, 4
      %v3969 = vrot.slane %v3671, 5
      %v3970 = vsel %vm2307, %v3968, %v3969
      %v3971 = vrot.slane %v3969, 4
      %v3972 = vrot.slane %v3672, 5
      %v3973 = vsel %vm2307, %v3971, %v3972
      %v3974 = vrot.slane %v3674, 5
      %v3975 = vrot.slane %v3974, 4
      %v3976 = vrot.slane %v3675, 5
      %v3977 = vsel %vm2307, %v3975, %v3976
      %v3978 = vrot.slane %v3976, 4
      %v3979 = vrot.slane %v3676, 5
      %v3980 = vsel %vm2307, %v3978, %v3979
      %v3989 = vrot.slane %v2593, 4
      %v3990 = vrot.slane %v338, 5
      %v3991 = vsel %vm2307, %v3989, %v3990
      %v3992 = vrot.slane %v2600, 4
      %v3993 = vrot.slane %v342, 5
      %v3994 = vsel %vm2307, %v3992, %v3993
      %v3995 = vrot.slane %v2607, 4
      %v3996 = vrot.slane %v346, 5
      %v3997 = vsel %vm2307, %v3995, %v3996
      %v3998 = vrot.slane %v2614, 4
      %v3999 = vrot.slane %v350, 5
      %v4000 = vsel %vm2307, %v3998, %v3999
      %v4001 = vrot.slane %v2621, 4
      %v4002 = vrot.slane %v354, 5
      %v4003 = vsel %vm2307, %v4001, %v4002
      %v4004 = vrot.slane %v2628, 4
      %v4005 = vrot.slane %v358, 5
      %v4006 = vsel %vm2307, %v4004, %v4005
      %v4007 = vrot.slane %v2635, 4
      %v4008 = vrot.slane %v362, 5
      %v4009 = vsel %vm2307, %v4007, %v4008
      %v4010 = vrot.slane %v2642, 4
      %v4011 = vrot.slane %v366, 5
      %v4012 = vsel %vm2307, %v4010, %v4011
      %s4013 = scalar_lea.vmem %s327, 160
      %v4014 = vld [vmem:[%s4013] sm:$0xf]
      %v4015 = vld [vmem:[%s4013 + $0x4] sm:$0xf]
      %v4016 = vld [vmem:[%s4013 + $0x8] sm:$0xf]
      %v4017 = vld [vmem:[%s4013 + $0xc] sm:$0x1]
      %v4018 = vld [vmem:[%s4013 + $0x10] sm:$0xf]
      %v4019 = vld [vmem:[%s4013 + $0x14] sm:$0xf]
      %v4020 = vld [vmem:[%s4013 + $0x18] sm:$0xf]
      %v4021 = vld [vmem:[%s4013 + $0x1c] sm:$0x1]
      %v4022 = vld [vmem:[%s4013 + $0x20] sm:$0xf]
      %v4023 = vld [vmem:[%s4013 + $0x24] sm:$0xf]
      %v4024 = vld [vmem:[%s4013 + $0x28] sm:$0xf]
      %v4025 = vld [vmem:[%s4013 + $0x2c] sm:$0x1]
      %v4026 = vld [vmem:[%s4013 + $0x30] sm:$0xf]
      %v4027 = vld [vmem:[%s4013 + $0x34] sm:$0xf]
      %v4028 = vld [vmem:[%s4013 + $0x38] sm:$0xf]
      %v4029 = vld [vmem:[%s4013 + $0x3c] sm:$0x1]
      %v4030 = vld [vmem:[%s4013 + $0x40] sm:$0xf]
      %v4031 = vld [vmem:[%s4013 + $0x44] sm:$0xf]
      %v4032 = vld [vmem:[%s4013 + $0x48] sm:$0xf]
      %v4033 = vld [vmem:[%s4013 + $0x4c] sm:$0x1]
      %v4034 = vld [vmem:[%s4013 + $0x50] sm:$0xf]
      %v4035 = vld [vmem:[%s4013 + $0x54] sm:$0xf]
      %v4036 = vld [vmem:[%s4013 + $0x58] sm:$0xf]
      %v4037 = vld [vmem:[%s4013 + $0x5c] sm:$0x1]
      %v4038 = vld [vmem:[%s4013 + $0x60] sm:$0xf]
      %v4039 = vld [vmem:[%s4013 + $0x64] sm:$0xf]
      %v4040 = vld [vmem:[%s4013 + $0x68] sm:$0xf]
      %v4041 = vld [vmem:[%s4013 + $0x6c] sm:$0x1]
      %v4042 = vld [vmem:[%s4013 + $0x70] sm:$0xf]
      %v4043 = vld [vmem:[%s4013 + $0x74] sm:$0xf]
      %v4044 = vld [vmem:[%s4013 + $0x78] sm:$0xf]
      %v4045 = vld [vmem:[%s4013 + $0x7c] sm:$0x1]
      %v4047 = vshrl.u32 %v4014, 16
      %v4049 = vrot.slane %v4047, 6
      %v4050 = vshll.u32 %v4014, 16
      %v4052 = vrot.slane %v4050, 7
      %v4053 = vor.u32 %v4049, %v4052
      %v4054 = vrot.slane %v4053, 4
      %v4056 = vshrl.u32 %v4015, 16
      %v4058 = vrot.slane %v4056, 6
      %v4059 = vshll.u32 %v4015, 16
      %v4061 = vrot.slane %v4059, 7
      %v4062 = vor.u32 %v4058, %v4061
      %v4063 = vsel %vm369, %v4054, %v4062
      %v4064 = vrot.slane %v4062, 4
      %v4066 = vshrl.u32 %v4016, 16
      %v4068 = vrot.slane %v4066, 6
      %v4069 = vshll.u32 %v4016, 16
      %v4071 = vrot.slane %v4069, 7
      %v4072 = vor.u32 %v4068, %v4071
      %v4073 = vsel %vm369, %v4064, %v4072
      %v4075 = vshrl.u32 %v4018, 16
      %v4077 = vrot.slane %v4075, 6
      %v4078 = vshll.u32 %v4018, 16
      %v4080 = vrot.slane %v4078, 7
      %v4081 = vor.u32 %v4077, %v4080
      %v4082 = vrot.slane %v4081, 4
      %v4084 = vshrl.u32 %v4019, 16
      %v4086 = vrot.slane %v4084, 6
      %v4087 = vshll.u32 %v4019, 16
      %v4089 = vrot.slane %v4087, 7
      %v4090 = vor.u32 %v4086, %v4089
      %v4091 = vsel %vm369, %v4082, %v4090
      %v4092 = vrot.slane %v4090, 4
      %v4094 = vshrl.u32 %v4020, 16
      %v4096 = vrot.slane %v4094, 6
      %v4097 = vshll.u32 %v4020, 16
      %v4099 = vrot.slane %v4097, 7
      %v4100 = vor.u32 %v4096, %v4099
      %v4101 = vsel %vm369, %v4092, %v4100
      %v4103 = vshrl.u32 %v4022, 16
      %v4105 = vrot.slane %v4103, 6
      %v4106 = vshll.u32 %v4022, 16
      %v4108 = vrot.slane %v4106, 7
      %v4109 = vor.u32 %v4105, %v4108
      %v4110 = vrot.slane %v4109, 4
      %v4112 = vshrl.u32 %v4023, 16
      %v4114 = vrot.slane %v4112, 6
      %v4115 = vshll.u32 %v4023, 16
      %v4117 = vrot.slane %v4115, 7
      %v4118 = vor.u32 %v4114, %v4117
      %v4119 = vsel %vm369, %v4110, %v4118
      %v4120 = vrot.slane %v4118, 4
      %v4122 = vshrl.u32 %v4024, 16
      %v4124 = vrot.slane %v4122, 6
      %v4125 = vshll.u32 %v4024, 16
      %v4127 = vrot.slane %v4125, 7
      %v4128 = vor.u32 %v4124, %v4127
      %v4129 = vsel %vm369, %v4120, %v4128
      %v4131 = vshrl.u32 %v4026, 16
      %v4133 = vrot.slane %v4131, 6
      %v4134 = vshll.u32 %v4026, 16
      %v4136 = vrot.slane %v4134, 7
      %v4137 = vor.u32 %v4133, %v4136
      %v4138 = vrot.slane %v4137, 4
      %v4140 = vshrl.u32 %v4027, 16
      %v4142 = vrot.slane %v4140, 6
      %v4143 = vshll.u32 %v4027, 16
      %v4145 = vrot.slane %v4143, 7
      %v4146 = vor.u32 %v4142, %v4145
      %v4147 = vsel %vm369, %v4138, %v4146
      %v4148 = vrot.slane %v4146, 4
      %v4150 = vshrl.u32 %v4028, 16
      %v4152 = vrot.slane %v4150, 6
      %v4153 = vshll.u32 %v4028, 16
      %v4155 = vrot.slane %v4153, 7
      %v4156 = vor.u32 %v4152, %v4155
      %v4157 = vsel %vm369, %v4148, %v4156
      %v4159 = vshrl.u32 %v4030, 16
      %v4161 = vrot.slane %v4159, 6
      %v4162 = vshll.u32 %v4030, 16
      %v4164 = vrot.slane %v4162, 7
      %v4165 = vor.u32 %v4161, %v4164
      %v4166 = vrot.slane %v4165, 4
      %v4168 = vshrl.u32 %v4031, 16
      %v4170 = vrot.slane %v4168, 6
      %v4171 = vshll.u32 %v4031, 16
      %v4173 = vrot.slane %v4171, 7
      %v4174 = vor.u32 %v4170, %v4173
      %v4175 = vsel %vm369, %v4166, %v4174
      %v4176 = vrot.slane %v4174, 4
      %v4178 = vshrl.u32 %v4032, 16
      %v4180 = vrot.slane %v4178, 6
      %v4181 = vshll.u32 %v4032, 16
      %v4183 = vrot.slane %v4181, 7
      %v4184 = vor.u32 %v4180, %v4183
      %v4185 = vsel %vm369, %v4176, %v4184
      %v4187 = vshrl.u32 %v4034, 16
      %v4189 = vrot.slane %v4187, 6
      %v4190 = vshll.u32 %v4034, 16
      %v4192 = vrot.slane %v4190, 7
      %v4193 = vor.u32 %v4189, %v4192
      %v4194 = vrot.slane %v4193, 4
      %v4196 = vshrl.u32 %v4035, 16
      %v4198 = vrot.slane %v4196, 6
      %v4199 = vshll.u32 %v4035, 16
      %v4201 = vrot.slane %v4199, 7
      %v4202 = vor.u32 %v4198, %v4201
      %v4203 = vsel %vm369, %v4194, %v4202
      %v4204 = vrot.slane %v4202, 4
      %v4206 = vshrl.u32 %v4036, 16
      %v4208 = vrot.slane %v4206, 6
      %v4209 = vshll.u32 %v4036, 16
      %v4211 = vrot.slane %v4209, 7
      %v4212 = vor.u32 %v4208, %v4211
      %v4213 = vsel %vm369, %v4204, %v4212
      %v4215 = vshrl.u32 %v4038, 16
      %v4217 = vrot.slane %v4215, 6
      %v4218 = vshll.u32 %v4038, 16
      %v4220 = vrot.slane %v4218, 7
      %v4221 = vor.u32 %v4217, %v4220
      %v4222 = vrot.slane %v4221, 4
      %v4224 = vshrl.u32 %v4039, 16
      %v4226 = vrot.slane %v4224, 6
      %v4227 = vshll.u32 %v4039, 16
      %v4229 = vrot.slane %v4227, 7
      %v4230 = vor.u32 %v4226, %v4229
      %v4231 = vsel %vm369, %v4222, %v4230
      %v4232 = vrot.slane %v4230, 4
      %v4234 = vshrl.u32 %v4040, 16
      %v4236 = vrot.slane %v4234, 6
      %v4237 = vshll.u32 %v4040, 16
      %v4239 = vrot.slane %v4237, 7
      %v4240 = vor.u32 %v4236, %v4239
      %v4241 = vsel %vm369, %v4232, %v4240
      %v4243 = vshrl.u32 %v4042, 16
      %v4245 = vrot.slane %v4243, 6
      %v4246 = vshll.u32 %v4042, 16
      %v4248 = vrot.slane %v4246, 7
      %v4249 = vor.u32 %v4245, %v4248
      %v4250 = vrot.slane %v4249, 4
      %v4252 = vshrl.u32 %v4043, 16
      %v4254 = vrot.slane %v4252, 6
      %v4255 = vshll.u32 %v4043, 16
      %v4257 = vrot.slane %v4255, 7
      %v4258 = vor.u32 %v4254, %v4257
      %v4259 = vsel %vm369, %v4250, %v4258
      %v4260 = vrot.slane %v4258, 4
      %v4262 = vshrl.u32 %v4044, 16
      %v4264 = vrot.slane %v4262, 6
      %v4265 = vshll.u32 %v4044, 16
      %v4267 = vrot.slane %v4265, 7
      %v4268 = vor.u32 %v4264, %v4267
      %v4269 = vsel %vm369, %v4260, %v4268
      %v4294 = vrot.slane %v4015, 5
      %v4295 = vrot.slane %v4294, 4
      %v4296 = vrot.slane %v4016, 5
      %v4297 = vsel %vm2307, %v4295, %v4296
      %v4298 = vrot.slane %v4296, 4
      %v4299 = vrot.slane %v4017, 5
      %v4300 = vsel %vm2307, %v4298, %v4299
      %v4301 = vrot.slane %v4019, 5
      %v4302 = vrot.slane %v4301, 4
      %v4303 = vrot.slane %v4020, 5
      %v4304 = vsel %vm2307, %v4302, %v4303
      %v4305 = vrot.slane %v4303, 4
      %v4306 = vrot.slane %v4021, 5
      %v4307 = vsel %vm2307, %v4305, %v4306
      %v4308 = vrot.slane %v4023, 5
      %v4309 = vrot.slane %v4308, 4
      %v4310 = vrot.slane %v4024, 5
      %v4311 = vsel %vm2307, %v4309, %v4310
      %v4312 = vrot.slane %v4310, 4
      %v4313 = vrot.slane %v4025, 5
      %v4314 = vsel %vm2307, %v4312, %v4313
      %v4315 = vrot.slane %v4027, 5
      %v4316 = vrot.slane %v4315, 4
      %v4317 = vrot.slane %v4028, 5
      %v4318 = vsel %vm2307, %v4316, %v4317
      %v4319 = vrot.slane %v4317, 4
      %v4320 = vrot.slane %v4029, 5
      %v4321 = vsel %vm2307, %v4319, %v4320
      %v4322 = vrot.slane %v4031, 5
      %v4323 = vrot.slane %v4322, 4
      %v4324 = vrot.slane %v4032, 5
      %v4325 = vsel %vm2307, %v4323, %v4324
      %v4326 = vrot.slane %v4324, 4
      %v4327 = vrot.slane %v4033, 5
      %v4328 = vsel %vm2307, %v4326, %v4327
      %v4329 = vrot.slane %v4035, 5
      %v4330 = vrot.slane %v4329, 4
      %v4331 = vrot.slane %v4036, 5
      %v4332 = vsel %vm2307, %v4330, %v4331
      %v4333 = vrot.slane %v4331, 4
      %v4334 = vrot.slane %v4037, 5
      %v4335 = vsel %vm2307, %v4333, %v4334
      %v4336 = vrot.slane %v4039, 5
      %v4337 = vrot.slane %v4336, 4
      %v4338 = vrot.slane %v4040, 5
      %v4339 = vsel %vm2307, %v4337, %v4338
      %v4340 = vrot.slane %v4338, 4
      %v4341 = vrot.slane %v4041, 5
      %v4342 = vsel %vm2307, %v4340, %v4341
      %v4343 = vrot.slane %v4043, 5
      %v4344 = vrot.slane %v4343, 4
      %v4345 = vrot.slane %v4044, 5
      %v4346 = vsel %vm2307, %v4344, %v4345
      %v4347 = vrot.slane %v4345, 4
      %v4348 = vrot.slane %v4045, 5
      %v4349 = vsel %vm2307, %v4347, %v4348
      %v4358 = vunpack.c.l.b16 %v3645
      %v4359 = vunpack.c.l.b16 %v3646
      %v4360 = vunpack.c.l.b16 %v3649
      %v4361 = vunpack.c.l.b16 %v3650
      %v4362 = vunpack.c.l.b16 %v3653
      %v4363 = vunpack.c.l.b16 %v3654
      %v4364 = vunpack.c.l.b16 %v3657
      %v4365 = vunpack.c.l.b16 %v3658
      %v4366 = vunpack.c.l.b16 %v3661
      %v4367 = vunpack.c.l.b16 %v3662
      %v4368 = vunpack.c.l.b16 %v3665
      %v4369 = vunpack.c.l.b16 %v3666
      %v4370 = vunpack.c.l.b16 %v3669
      %v4371 = vunpack.c.l.b16 %v3670
      %v4372 = vunpack.c.l.b16 %v3673
      %v4373 = vunpack.c.l.b16 %v3674
      %v4374 = vpack.c.b16 %v4359, %v4358
      %v4375 = vpack.c.b16 %v4361, %v4360
      %v4376 = vpack.c.b16 %v4363, %v4362
      %v4377 = vpack.c.b16 %v4365, %v4364
      %v4378 = vpack.c.b16 %v4367, %v4366
      %v4379 = vpack.c.b16 %v4369, %v4368
      %v4380 = vpack.c.b16 %v4371, %v4370
      %v4381 = vpack.c.b16 %v4373, %v4372
      %v4382 = vunpack.c.l.b16 %v3694
      %v4383 = vunpack.c.l.b16 %v3704
      %v4384 = vunpack.c.l.b16 %v3722
      %v4385 = vunpack.c.l.b16 %v3732
      %v4386 = vunpack.c.l.b16 %v3750
      %v4387 = vunpack.c.l.b16 %v3760
      %v4388 = vunpack.c.l.b16 %v3778
      %v4389 = vunpack.c.l.b16 %v3788
      %v4390 = vunpack.c.l.b16 %v3806
      %v4391 = vunpack.c.l.b16 %v3816
      %v4392 = vunpack.c.l.b16 %v3834
      %v4393 = vunpack.c.l.b16 %v3844
      %v4394 = vunpack.c.l.b16 %v3862
      %v4395 = vunpack.c.l.b16 %v3872
      %v4396 = vunpack.c.l.b16 %v3890
      %v4397 = vunpack.c.l.b16 %v3900
      %v4398 = vpack.c.b16 %v4383, %v4382
      %v4399 = vpack.c.b16 %v4385, %v4384
      %v4400 = vpack.c.b16 %v4387, %v4386
      %v4401 = vpack.c.b16 %v4389, %v4388
      %v4402 = vpack.c.b16 %v4391, %v4390
      %v4403 = vpack.c.b16 %v4393, %v4392
      %v4404 = vpack.c.b16 %v4395, %v4394
      %v4405 = vpack.c.b16 %v4397, %v4396
      %4406 = vrot.lane.b32.xlu0 %v4398, 4
      %v4407 = vpop.permute.xlu0 %4406
      %4408 = vrot.lane.b32.xlu0 %v4399, 4
      %v4409 = vpop.permute.xlu0 %4408
      %4410 = vrot.lane.b32.xlu0 %v4400, 4
      %v4411 = vpop.permute.xlu0 %4410
      %4412 = vrot.lane.b32.xlu0 %v4401, 4
      %v4413 = vpop.permute.xlu0 %4412
      %4414 = vrot.lane.b32.xlu0 %v4402, 4
      %v4415 = vpop.permute.xlu0 %4414
      %4416 = vrot.lane.b32.xlu0 %v4403, 4
      %v4417 = vpop.permute.xlu0 %4416
      %4418 = vrot.lane.b32.xlu0 %v4404, 4
      %v4419 = vpop.permute.xlu0 %4418
      %4420 = vrot.lane.b32.xlu0 %v4405, 4
      %v4421 = vpop.permute.xlu0 %4420
      %v4422 = vunpack.c.l.b16 %v3928
      %v4423 = vunpack.c.l.b16 %v3931
      %v4424 = vunpack.c.l.b16 %v3935
      %v4425 = vunpack.c.l.b16 %v3938
      %v4426 = vunpack.c.l.b16 %v3942
      %v4427 = vunpack.c.l.b16 %v3945
      %v4428 = vunpack.c.l.b16 %v3949
      %v4429 = vunpack.c.l.b16 %v3952
      %v4430 = vunpack.c.l.b16 %v3956
      %v4431 = vunpack.c.l.b16 %v3959
      %v4432 = vunpack.c.l.b16 %v3963
      %v4433 = vunpack.c.l.b16 %v3966
      %v4434 = vunpack.c.l.b16 %v3970
      %v4435 = vunpack.c.l.b16 %v3973
      %v4436 = vunpack.c.l.b16 %v3977
      %v4437 = vunpack.c.l.b16 %v3980
      %v4438 = vpack.c.b16 %v4423, %v4422
      %v4439 = vpack.c.b16 %v4425, %v4424
      %v4440 = vpack.c.b16 %v4427, %v4426
      %v4441 = vpack.c.b16 %v4429, %v4428
      %v4442 = vpack.c.b16 %v4431, %v4430
      %v4443 = vpack.c.b16 %v4433, %v4432
      %v4444 = vpack.c.b16 %v4435, %v4434
      %v4445 = vpack.c.b16 %v4437, %v4436
      %4446 = vrot.lane.b32.xlu0 %v4438, 8
      %v4447 = vpop.permute.xlu0 %4446
      %4448 = vrot.lane.b32.xlu0 %v4439, 8
      %v4449 = vpop.permute.xlu0 %4448
      %4450 = vrot.lane.b32.xlu0 %v4440, 8
      %v4451 = vpop.permute.xlu0 %4450
      %4452 = vrot.lane.b32.xlu0 %v4441, 8
      %v4453 = vpop.permute.xlu0 %4452
      %4454 = vrot.lane.b32.xlu0 %v4442, 8
      %v4455 = vpop.permute.xlu0 %4454
      %4456 = vrot.lane.b32.xlu0 %v4443, 8
      %v4457 = vpop.permute.xlu0 %4456
      %4458 = vrot.lane.b32.xlu0 %v4444, 8
      %v4459 = vpop.permute.xlu0 %4458
      %4460 = vrot.lane.b32.xlu0 %v4445, 8
      %v4461 = vpop.permute.xlu0 %4460
      %v4462 = vunpack.c.l.b16 %v335
      %v4463 = vunpack.c.l.b16 %v339
      %v4464 = vunpack.c.l.b16 %v343
      %v4465 = vunpack.c.l.b16 %v347
      %v4466 = vunpack.c.l.b16 %v351
      %v4467 = vunpack.c.l.b16 %v355
      %v4468 = vunpack.c.l.b16 %v359
      %v4469 = vunpack.c.l.b16 %v363
      %v4470 = vpack.c.b16 %v3117, %v4462
      %v4471 = vpack.c.b16 %v3119, %v4463
      %v4472 = vpack.c.b16 %v3121, %v4464
      %v4473 = vpack.c.b16 %v3123, %v4465
      %v4474 = vpack.c.b16 %v3125, %v4466
      %v4475 = vpack.c.b16 %v3127, %v4467
      %v4476 = vpack.c.b16 %v3129, %v4468
      %v4477 = vpack.c.b16 %v3131, %v4469
      %4478 = vrot.lane.b32.xlu0 %v4470, 12
      %v4479 = vpop.permute.xlu0 %4478
      %4480 = vrot.lane.b32.xlu0 %v4471, 12
      %v4481 = vpop.permute.xlu0 %4480
      %4482 = vrot.lane.b32.xlu0 %v4472, 12
      %v4483 = vpop.permute.xlu0 %4482
      %4484 = vrot.lane.b32.xlu0 %v4473, 12
      %v4485 = vpop.permute.xlu0 %4484
      %4486 = vrot.lane.b32.xlu0 %v4474, 12
      %v4487 = vpop.permute.xlu0 %4486
      %4488 = vrot.lane.b32.xlu0 %v4475, 12
      %v4489 = vpop.permute.xlu0 %4488
      %4490 = vrot.lane.b32.xlu0 %v4476, 12
      %v4491 = vpop.permute.xlu0 %4490
      %4492 = vrot.lane.b32.xlu0 %v4477, 12
      %v4493 = vpop.permute.xlu0 %4492
      %v4494 = vunpack.c.l.b16 %v3991
      %v4495 = vunpack.c.l.b16 %v3994
      %v4496 = vunpack.c.l.b16 %v3997
      %v4497 = vunpack.c.l.b16 %v4000
      %v4498 = vunpack.c.l.b16 %v4003
      %v4499 = vunpack.c.l.b16 %v4006
      %v4500 = vunpack.c.l.b16 %v4009
      %v4501 = vunpack.c.l.b16 %v4012
      %v4502 = vpack.c.b16 %v4494, %v3078
      %v4503 = vpack.c.b16 %v4495, %v3080
      %v4504 = vpack.c.b16 %v4496, %v3082
      %v4505 = vpack.c.b16 %v4497, %v3084
      %v4506 = vpack.c.b16 %v4498, %v3086
      %v4507 = vpack.c.b16 %v4499, %v3088
      %v4508 = vpack.c.b16 %v4500, %v3090
      %v4509 = vpack.c.b16 %v4501, %v3092
      %4510 = vrot.lane.b32.xlu0 %v4502, 16
      %v4511 = vpop.permute.xlu0 %4510
      %4512 = vrot.lane.b32.xlu0 %v4503, 16
      %v4513 = vpop.permute.xlu0 %4512
      %4514 = vrot.lane.b32.xlu0 %v4504, 16
      %v4515 = vpop.permute.xlu0 %4514
      %4516 = vrot.lane.b32.xlu0 %v4505, 16
      %v4517 = vpop.permute.xlu0 %4516
      %4518 = vrot.lane.b32.xlu0 %v4506, 16
      %v4519 = vpop.permute.xlu0 %4518
      %4520 = vrot.lane.b32.xlu0 %v4507, 16
      %v4521 = vpop.permute.xlu0 %4520
      %4522 = vrot.lane.b32.xlu0 %v4508, 16
      %v4523 = vpop.permute.xlu0 %4522
      %4524 = vrot.lane.b32.xlu0 %v4509, 16
      %v4525 = vpop.permute.xlu0 %4524
      %v4534 = vunpack.c.l.b16 %v4014
      %v4535 = vunpack.c.l.b16 %v4015
      %v4536 = vunpack.c.l.b16 %v4018
      %v4537 = vunpack.c.l.b16 %v4019
      %v4538 = vunpack.c.l.b16 %v4022
      %v4539 = vunpack.c.l.b16 %v4023
      %v4540 = vunpack.c.l.b16 %v4026
      %v4541 = vunpack.c.l.b16 %v4027
      %v4542 = vunpack.c.l.b16 %v4030
      %v4543 = vunpack.c.l.b16 %v4031
      %v4544 = vunpack.c.l.b16 %v4034
      %v4545 = vunpack.c.l.b16 %v4035
      %v4546 = vunpack.c.l.b16 %v4038
      %v4547 = vunpack.c.l.b16 %v4039
      %v4548 = vunpack.c.l.b16 %v4042
      %v4549 = vunpack.c.l.b16 %v4043
      %v4550 = vpack.c.b16 %v4535, %v4534
      %v4551 = vpack.c.b16 %v4537, %v4536
      %v4552 = vpack.c.b16 %v4539, %v4538
      %v4553 = vpack.c.b16 %v4541, %v4540
      %v4554 = vpack.c.b16 %v4543, %v4542
      %v4555 = vpack.c.b16 %v4545, %v4544
      %v4556 = vpack.c.b16 %v4547, %v4546
      %v4557 = vpack.c.b16 %v4549, %v4548
      %4558 = vrot.lane.b32.xlu0 %v4550, 20
      %v4559 = vpop.permute.xlu0 %4558
      %4560 = vrot.lane.b32.xlu0 %v4551, 20
      %v4561 = vpop.permute.xlu0 %4560
      %4562 = vrot.lane.b32.xlu0 %v4552, 20
      %v4563 = vpop.permute.xlu0 %4562
      %4564 = vrot.lane.b32.xlu0 %v4553, 20
      %v4565 = vpop.permute.xlu0 %4564
      %4566 = vrot.lane.b32.xlu0 %v4554, 20
      %v4567 = vpop.permute.xlu0 %4566
      %4568 = vrot.lane.b32.xlu0 %v4555, 20
      %v4569 = vpop.permute.xlu0 %4568
      %4570 = vrot.lane.b32.xlu0 %v4556, 20
      %v4571 = vpop.permute.xlu0 %4570
      %4572 = vrot.lane.b32.xlu0 %v4557, 20
      %v4573 = vpop.permute.xlu0 %4572
      %v4574 = vunpack.c.l.b16 %v4063
      %v4575 = vunpack.c.l.b16 %v4073
      %v4576 = vunpack.c.l.b16 %v4091
      %v4577 = vunpack.c.l.b16 %v4101
      %v4578 = vunpack.c.l.b16 %v4119
      %v4579 = vunpack.c.l.b16 %v4129
      %v4580 = vunpack.c.l.b16 %v4147
      %v4581 = vunpack.c.l.b16 %v4157
      %v4582 = vunpack.c.l.b16 %v4175
      %v4583 = vunpack.c.l.b16 %v4185
      %v4584 = vunpack.c.l.b16 %v4203
      %v4585 = vunpack.c.l.b16 %v4213
      %v4586 = vunpack.c.l.b16 %v4231
      %v4587 = vunpack.c.l.b16 %v4241
      %v4588 = vunpack.c.l.b16 %v4259
      %v4589 = vunpack.c.l.b16 %v4269
      %v4590 = vpack.c.b16 %v4575, %v4574
      %v4591 = vpack.c.b16 %v4577, %v4576
      %v4592 = vpack.c.b16 %v4579, %v4578
      %v4593 = vpack.c.b16 %v4581, %v4580
      %v4594 = vpack.c.b16 %v4583, %v4582
      %v4595 = vpack.c.b16 %v4585, %v4584
      %v4596 = vpack.c.b16 %v4587, %v4586
      %v4597 = vpack.c.b16 %v4589, %v4588
      %4598 = vrot.lane.b32.xlu0 %v4590, 24
      %v4599 = vpop.permute.xlu0 %4598
      %4600 = vrot.lane.b32.xlu0 %v4591, 24
      %v4601 = vpop.permute.xlu0 %4600
      %4602 = vrot.lane.b32.xlu0 %v4592, 24
      %v4603 = vpop.permute.xlu0 %4602
      %4604 = vrot.lane.b32.xlu0 %v4593, 24
      %v4605 = vpop.permute.xlu0 %4604
      %4606 = vrot.lane.b32.xlu0 %v4594, 24
      %v4607 = vpop.permute.xlu0 %4606
      %4608 = vrot.lane.b32.xlu0 %v4595, 24
      %v4609 = vpop.permute.xlu0 %4608
      %4610 = vrot.lane.b32.xlu0 %v4596, 24
      %v4611 = vpop.permute.xlu0 %4610
      %4612 = vrot.lane.b32.xlu0 %v4597, 24
      %v4613 = vpop.permute.xlu0 %4612
      %v4614 = vunpack.c.l.b16 %v4297
      %v4615 = vunpack.c.l.b16 %v4300
      %v4616 = vunpack.c.l.b16 %v4304
      %v4617 = vunpack.c.l.b16 %v4307
      %v4618 = vunpack.c.l.b16 %v4311
      %v4619 = vunpack.c.l.b16 %v4314
      %v4620 = vunpack.c.l.b16 %v4318
      %v4621 = vunpack.c.l.b16 %v4321
      %v4622 = vunpack.c.l.b16 %v4325
      %v4623 = vunpack.c.l.b16 %v4328
      %v4624 = vunpack.c.l.b16 %v4332
      %v4625 = vunpack.c.l.b16 %v4335
      %v4626 = vunpack.c.l.b16 %v4339
      %v4627 = vunpack.c.l.b16 %v4342
      %v4628 = vunpack.c.l.b16 %v4346
      %v4629 = vunpack.c.l.b16 %v4349
      %v4630 = vpack.c.b16 %v4615, %v4614
      %v4631 = vpack.c.b16 %v4617, %v4616
      %v4632 = vpack.c.b16 %v4619, %v4618
      %v4633 = vpack.c.b16 %v4621, %v4620
      %v4634 = vpack.c.b16 %v4623, %v4622
      %v4635 = vpack.c.b16 %v4625, %v4624
      %v4636 = vpack.c.b16 %v4627, %v4626
      %v4637 = vpack.c.b16 %v4629, %v4628
      %4638 = vrot.lane.b32.xlu0 %v4630, 28
      %v4639 = vpop.permute.xlu0 %4638
      %4640 = vrot.lane.b32.xlu0 %v4631, 28
      %v4641 = vpop.permute.xlu0 %4640
      %4642 = vrot.lane.b32.xlu0 %v4632, 28
      %v4643 = vpop.permute.xlu0 %4642
      %4644 = vrot.lane.b32.xlu0 %v4633, 28
      %v4645 = vpop.permute.xlu0 %4644
      %4646 = vrot.lane.b32.xlu0 %v4634, 28
      %v4647 = vpop.permute.xlu0 %4646
      %4648 = vrot.lane.b32.xlu0 %v4635, 28
      %v4649 = vpop.permute.xlu0 %4648
      %4650 = vrot.lane.b32.xlu0 %v4636, 28
      %v4651 = vpop.permute.xlu0 %4650
      %4652 = vrot.lane.b32.xlu0 %v4637, 28
      %v4653 = vpop.permute.xlu0 %4652
      %v4656 = vsel %vm619, %v4374, %v4407
      %v4659 = vsel %vm619, %v4375, %v4409
      %v4662 = vsel %vm619, %v4376, %v4411
      %v4665 = vsel %vm619, %v4377, %v4413
      %v4668 = vsel %vm619, %v4378, %v4415
      %v4671 = vsel %vm619, %v4379, %v4417
      %v4674 = vsel %vm619, %v4380, %v4419
      %v4677 = vsel %vm619, %v4381, %v4421
      %v4679 = vsel %vm1985, %v4656, %v4447
      %v4681 = vsel %vm1985, %v4659, %v4449
      %v4683 = vsel %vm1985, %v4662, %v4451
      %v4685 = vsel %vm1985, %v4665, %v4453
      %v4687 = vsel %vm1985, %v4668, %v4455
      %v4689 = vsel %vm1985, %v4671, %v4457
      %v4691 = vsel %vm1985, %v4674, %v4459
      %v4693 = vsel %vm1985, %v4677, %v4461
      %v4695 = vsel %vm2002, %v4679, %v4479
      %v4697 = vsel %vm2002, %v4681, %v4481
      %v4699 = vsel %vm2002, %v4683, %v4483
      %v4701 = vsel %vm2002, %v4685, %v4485
      %v4703 = vsel %vm2002, %v4687, %v4487
      %v4705 = vsel %vm2002, %v4689, %v4489
      %v4707 = vsel %vm2002, %v4691, %v4491
      %v4709 = vsel %vm2002, %v4693, %v4493
      %v4711 = vsel %vm2019, %v4695, %v4511
      %v4713 = vsel %vm2019, %v4697, %v4513
      %v4715 = vsel %vm2019, %v4699, %v4515
      %v4717 = vsel %vm2019, %v4701, %v4517
      %v4719 = vsel %vm2019, %v4703, %v4519
      %v4721 = vsel %vm2019, %v4705, %v4521
      %v4723 = vsel %vm2019, %v4707, %v4523
      %v4725 = vsel %vm2019, %v4709, %v4525
      %v4727 = vsel %vm2036, %v4711, %v4559
      %v4729 = vsel %vm2036, %v4713, %v4561
      %v4731 = vsel %vm2036, %v4715, %v4563
      %v4733 = vsel %vm2036, %v4717, %v4565
      %v4735 = vsel %vm2036, %v4719, %v4567
      %v4737 = vsel %vm2036, %v4721, %v4569
      %v4739 = vsel %vm2036, %v4723, %v4571
      %v4741 = vsel %vm2036, %v4725, %v4573
      %v4743 = vsel %vm2053, %v4727, %v4599
      %v4745 = vsel %vm2053, %v4729, %v4601
      %v4747 = vsel %vm2053, %v4731, %v4603
      %v4749 = vsel %vm2053, %v4733, %v4605
      %v4751 = vsel %vm2053, %v4735, %v4607
      %v4753 = vsel %vm2053, %v4737, %v4609
      %v4755 = vsel %vm2053, %v4739, %v4611
      %v4757 = vsel %vm2053, %v4741, %v4613
      %v4759 = vsel %vm2070, %v4743, %v4639
      %v4761 = vsel %vm2070, %v4745, %v4641
      %v4763 = vsel %vm2070, %v4747, %v4643
      %v4765 = vsel %vm2070, %v4749, %v4645
      %v4767 = vsel %vm2070, %v4751, %v4647
      %v4769 = vsel %vm2070, %v4753, %v4649
      %v4771 = vsel %vm2070, %v4755, %v4651
      %v4773 = vsel %vm2070, %v4757, %v4653
      %v4774 = vld [vmem:[%s4] sm:$0xf]
      %v4775 = vld [vmem:[%s4 + $0x4] sm:$0xf]
      %v4776 = vld [vmem:[%s4 + $0x8] sm:$0xf]
      %v4777 = vld [vmem:[%s4 + $0xc] sm:$0xf]
      %v4782 = vunpack.c.l.b16 %v4774
      %v4783 = vunpack.c.l.b16 %v4775
      %v4784 = vunpack.c.l.b16 %v4776
      %v4785 = vunpack.c.l.b16 %v4777
      %v4786 = vpack.c.b16 %v4783, %v4782
      %v4787 = vpack.c.b16 %v4785, %v4784
      %4790 = vrot.lane.b32.xlu0 %v683, 122
      %v4791 = vpop.permute.xlu0 %4790
      %4792 = vrot.lane.b32.xlu0 %v686, 122
      %v4793 = vpop.permute.xlu0 %4792
      %4794 = vrot.lane.b32.xlu0 %v691, 122
      %v4795 = vpop.permute.xlu0 %4794
      %4796 = vrot.lane.b32.xlu0 %v694, 122
      %v4797 = vpop.permute.xlu0 %4796
      %4798 = vrot.lane.b32.xlu0 %v699, 122
      %v4799 = vpop.permute.xlu0 %4798
      %4800 = vrot.lane.b32.xlu0 %v702, 122
      %v4801 = vpop.permute.xlu0 %4800
      %4802 = vrot.lane.b32.xlu0 %v707, 122
      %v4803 = vpop.permute.xlu0 %4802
      %4804 = vrot.lane.b32.xlu0 %v710, 122
      %v4805 = vpop.permute.xlu0 %4804
      %4806 = vrot.lane.b32.xlu0 %v715, 122
      %v4807 = vpop.permute.xlu0 %4806
      %4808 = vrot.lane.b32.xlu0 %v718, 122
      %v4809 = vpop.permute.xlu0 %4808
      %4810 = vrot.lane.b32.xlu0 %v723, 122
      %v4811 = vpop.permute.xlu0 %4810
      %4812 = vrot.lane.b32.xlu0 %v726, 122
      %v4813 = vpop.permute.xlu0 %4812
      %4814 = vrot.lane.b32.xlu0 %v731, 122
      %v4815 = vpop.permute.xlu0 %4814
      %4816 = vrot.lane.b32.xlu0 %v734, 122
      %v4817 = vpop.permute.xlu0 %4816
      %4818 = vrot.lane.b32.xlu0 %v739, 122
      %v4819 = vpop.permute.xlu0 %4818
      %4820 = vrot.lane.b32.xlu0 %v742, 122
      %v4821 = vpop.permute.xlu0 %4820
      %v4838 = vsel %vm2103, %v4759, 0
      %v4840 = vsel %vm2103, %v4761, 0
      %v4842 = vsel %vm2103, %v4763, 0
      %v4844 = vsel %vm2103, %v4765, 0
      %v4846 = vsel %vm2103, %v4767, 0
      %v4848 = vsel %vm2103, %v4769, 0
      %v4850 = vsel %vm2103, %v4771, 0
      %v4852 = vsel %vm2103, %v4773, 0
      %4854 = vmatprep.subr.bf16.mxu0 0
      %4855 = vmatpush1.bf16.msra.mxu0 0
      %4856 = vmatprep.subr.bf16.mxu0 0
      %4857 = vmatpush1.bf16.msra.mxu0 0
      %4858 = vmatprep.subr.bf16.mxu0 0
      %4859 = vmatpush1.bf16.msra.mxu0 0
      %4860 = vmatprep.subr.bf16.mxu0 0
      %4861 = vmatpush1.bf16.msra.mxu0 0
      %4862 = vmatprep.subr.bf16.mxu0 0
      %4863 = vmatpush1.bf16.msra.mxu0 0
      %4864 = vmatprep.subr.bf16.mxu0 0
      %4865 = vmatpush1.bf16.msra.mxu0 0
      %4866 = vmatprep.subr.bf16.mxu0 0
      %4867 = vmatpush1.bf16.msra.mxu0 %v4787
      %4868 = vmatprep.subr.bf16.mxu0 0
      %4869 = vmatpush1.bf16.msra.mxu0 %v4786
      %4870 = vmatprep.subr.bf16.mxu0 0
      %4871 = vmatpush2.bf16.msra.mxu0 0
      %4872 = vmatprep.subr.bf16.mxu0 0
      %4873 = vmatpush2.bf16.msra.mxu0 0
      %4874 = vmatprep.subr.bf16.mxu0 0
      %4875 = vmatpush2.bf16.msra.mxu0 0
      %4876 = vmatprep.subr.bf16.mxu0 0
      %4877 = vmatpush2.bf16.msra.mxu0 0
      %4878 = vmatprep.subr.bf16.mxu0 0
      %4879 = vmatpush2.bf16.msra.mxu0 0
      %4880 = vmatprep.subr.bf16.mxu0 0
      %4881 = vmatpush2.bf16.msra.mxu0 0
      %4882 = vmatprep.subr.bf16.mxu0 0
      %4883 = vmatpush2.bf16.msra.mxu0 0
      %4884 = vmatprep.subr.bf16.mxu0 0
      %4885 = vmatpush2.bf16.msra.mxu0 0
      %4886 = vmatprep.mubr.bf16.mxu0 0
      %4887 = vmatmul.mubr.bf16.gmra.mxu0 %v4838
      %v4888 = vpop.f32.mrf.mxu0
      %v4889 = vadd.f32 %v4791, %v4888
      %v4890 = vpop.f32.mrf.mxu0
      %v4891 = vpop.f32.mrf.mxu0
      %v4892 = vadd.f32 %v4793, %v4891
      %v4893 = vpop.f32.mrf.mxu0
      %4894 = vmatprep.mubr.bf16.mxu0 0
      %4895 = vmatmul.mubr.bf16.gmra.mxu0 %v4840
      %v4896 = vpop.f32.mrf.mxu0
      %v4897 = vadd.f32 %v4795, %v4896
      %v4898 = vpop.f32.mrf.mxu0
      %v4899 = vpop.f32.mrf.mxu0
      %v4900 = vadd.f32 %v4797, %v4899
      %v4901 = vpop.f32.mrf.mxu0
      %4902 = vmatprep.mubr.bf16.mxu0 0
      %4903 = vmatmul.mubr.bf16.gmra.mxu0 %v4842
      %v4904 = vpop.f32.mrf.mxu0
      %v4905 = vadd.f32 %v4799, %v4904
      %v4906 = vpop.f32.mrf.mxu0
      %v4907 = vpop.f32.mrf.mxu0
      %v4908 = vadd.f32 %v4801, %v4907
      %v4909 = vpop.f32.mrf.mxu0
      %4910 = vmatprep.mubr.bf16.mxu0 0
      %4911 = vmatmul.mubr.bf16.gmra.mxu0 %v4844
      %v4912 = vpop.f32.mrf.mxu0
      %v4913 = vadd.f32 %v4803, %v4912
      %v4914 = vpop.f32.mrf.mxu0
      %v4915 = vpop.f32.mrf.mxu0
      %v4916 = vadd.f32 %v4805, %v4915
      %v4917 = vpop.f32.mrf.mxu0
      %4918 = vmatprep.mubr.bf16.mxu0 0
      %4919 = vmatmul.mubr.bf16.gmra.mxu0 %v4846
      %v4920 = vpop.f32.mrf.mxu0
      %v4921 = vadd.f32 %v4807, %v4920
      %v4922 = vpop.f32.mrf.mxu0
      %v4923 = vpop.f32.mrf.mxu0
      %v4924 = vadd.f32 %v4809, %v4923
      %v4925 = vpop.f32.mrf.mxu0
      %4926 = vmatprep.mubr.bf16.mxu0 0
      %4927 = vmatmul.mubr.bf16.gmra.mxu0 %v4848
      %v4928 = vpop.f32.mrf.mxu0
      %v4929 = vadd.f32 %v4811, %v4928
      %v4930 = vpop.f32.mrf.mxu0
      %v4931 = vpop.f32.mrf.mxu0
      %v4932 = vadd.f32 %v4813, %v4931
      %v4933 = vpop.f32.mrf.mxu0
      %4934 = vmatprep.mubr.bf16.mxu0 0
      %4935 = vmatmul.mubr.bf16.gmra.mxu0 %v4850
      %v4936 = vpop.f32.mrf.mxu0
      %v4937 = vadd.f32 %v4815, %v4936
      %v4938 = vpop.f32.mrf.mxu0
      %v4939 = vpop.f32.mrf.mxu0
      %v4940 = vadd.f32 %v4817, %v4939
      %v4941 = vpop.f32.mrf.mxu0
      %4942 = vmatprep.mubr.bf16.mxu0 0
      %4943 = vmatmul.mubr.bf16.gmra.mxu0 %v4852
      %v4944 = vpop.f32.mrf.mxu0
      %v4945 = vadd.f32 %v4819, %v4944
      %v4946 = vpop.f32.mrf.mxu0
      %v4947 = vpop.f32.mrf.mxu0
      %v4948 = vadd.f32 %v4821, %v4947
      %v4949 = vpop.f32.mrf.mxu0
      %4950 = vdwg.mxu0
      %v4951 = vld [vmem:[%s7] sm:$0x1]
      %v4953 = vlaneseq
      %v4954 = vshrl.u32 %v4953, 7
      %v4955 = vsub.s32 0, %v4954
      %v4956 = vrot.slane %v4951, %v4955
      %v4958 = vadd.f32 %v4889, %v4956
      %v4959 = vadd.f32 %v4892, %v4956
      %v4960 = vadd.f32 %v4897, %v4956
      %v4961 = vadd.f32 %v4900, %v4956
      %v4962 = vadd.f32 %v4905, %v4956
      %v4963 = vadd.f32 %v4908, %v4956
      %v4964 = vadd.f32 %v4913, %v4956
      %v4965 = vadd.f32 %v4916, %v4956
      %v4966 = vadd.f32 %v4921, %v4956
      %v4967 = vadd.f32 %v4924, %v4956
      %v4968 = vadd.f32 %v4929, %v4956
      %v4969 = vadd.f32 %v4932, %v4956
      %v4970 = vadd.f32 %v4937, %v4956
      %v4971 = vadd.f32 %v4940, %v4956
      %v4972 = vadd.f32 %v4945, %v4956
      %v4973 = vadd.f32 %v4948, %v4956
      %v4974 = vmax.f32 %v4958, 0.0
      %v4975 = vmax.f32 %v4959, 0.0
      %v4976 = vmax.f32 %v4960, 0.0
      %v4977 = vmax.f32 %v4961, 0.0
      %v4978 = vmax.f32 %v4962, 0.0
      %v4979 = vmax.f32 %v4963, 0.0
      %v4980 = vmax.f32 %v4964, 0.0
      %v4981 = vmax.f32 %v4965, 0.0
      %v4982 = vmax.f32 %v4966, 0.0
      %v4983 = vmax.f32 %v4967, 0.0
      %v4984 = vmax.f32 %v4968, 0.0
      %v4985 = vmax.f32 %v4969, 0.0
      %v4986 = vmax.f32 %v4970, 0.0
      %v4987 = vmax.f32 %v4971, 0.0
      %v4988 = vmax.f32 %v4972, 0.0
      %v4989 = vmax.f32 %v4973, 0.0
      %v4990 = vadd.f32 %v3629, %v4974
      %v4991 = vadd.f32 %v3630, %v4975
      %v4992 = vadd.f32 %v3631, %v4976
      %v4993 = vadd.f32 %v3632, %v4977
      %v4994 = vadd.f32 %v3633, %v4978
      %v4995 = vadd.f32 %v3634, %v4979
      %v4996 = vadd.f32 %v3635, %v4980
      %v4997 = vadd.f32 %v3636, %v4981
      %v4998 = vadd.f32 %v3637, %v4982
      %v4999 = vadd.f32 %v3638, %v4983
      %v5000 = vadd.f32 %v3639, %v4984
      %v5001 = vadd.f32 %v3640, %v4985
      %v5002 = vadd.f32 %v3641, %v4986
      %v5003 = vadd.f32 %v3642, %v4987
      %v5004 = vadd.f32 %v3643, %v4988
      %v5005 = vadd.f32 %v3644, %v4989
      %v5006 = vld [vmem:[%s8] sm:$0x1]
      %v5008 = vlaneseq
      %v5009 = vshrl.u32 %v5008, 7
      %v5010 = vsub.s32 0, %v5009
      %v5011 = vrot.slane %v5006, %v5010
      %5012 = vrot.lane.b32.xlu0 %v5011, 9
      %v5013 = vpop.permute.xlu0 %5012
      %v5015 = vadd.f32 %v683, %v5013
      %v5016 = vadd.f32 %v686, %v5013
      %v5017 = vadd.f32 %v691, %v5013
      %v5018 = vadd.f32 %v694, %v5013
      %v5019 = vadd.f32 %v699, %v5013
      %v5020 = vadd.f32 %v702, %v5013
      %v5021 = vadd.f32 %v707, %v5013
      %v5022 = vadd.f32 %v710, %v5013
      %v5023 = vadd.f32 %v715, %v5013
      %v5024 = vadd.f32 %v718, %v5013
      %v5025 = vadd.f32 %v723, %v5013
      %v5026 = vadd.f32 %v726, %v5013
      %v5027 = vadd.f32 %v731, %v5013
      %v5028 = vadd.f32 %v734, %v5013
      %v5029 = vadd.f32 %v739, %v5013
      %v5030 = vadd.f32 %v742, %v5013
      %v5031 = vmax.f32 %v5015, 0.0
      %v5032 = vmax.f32 %v5016, 0.0
      %v5033 = vmax.f32 %v5017, 0.0
      %v5034 = vmax.f32 %v5018, 0.0
      %v5035 = vmax.f32 %v5019, 0.0
      %v5036 = vmax.f32 %v5020, 0.0
      %v5037 = vmax.f32 %v5021, 0.0
      %v5038 = vmax.f32 %v5022, 0.0
      %v5039 = vmax.f32 %v5023, 0.0
      %v5040 = vmax.f32 %v5024, 0.0
      %v5041 = vmax.f32 %v5025, 0.0
      %v5042 = vmax.f32 %v5026, 0.0
      %v5043 = vmax.f32 %v5027, 0.0
      %v5044 = vmax.f32 %v5028, 0.0
      %v5045 = vmax.f32 %v5029, 0.0
      %v5046 = vmax.f32 %v5030, 0.0
      %vm5047 = vcmask 23552
      %5048 = vst.msk [vmem:[%s332] sm:$0xff] %vm5047, %v4990
      %5049 = vst.msk [vmem:[%s332 + $0x8] sm:$0xff] %vm5047, %v4991
      %5050 = vst.msk [vmem:[%s332 + $0x10] sm:$0xff] %vm5047, %v4992
      %5051 = vst.msk [vmem:[%s332 + $0x18] sm:$0xff] %vm5047, %v4993
      %5052 = vst.msk [vmem:[%s332 + $0x20] sm:$0xff] %vm5047, %v4994
      %5053 = vst.msk [vmem:[%s332 + $0x28] sm:$0xff] %vm5047, %v4995
      %5054 = vst.msk [vmem:[%s332 + $0x30] sm:$0xff] %vm5047, %v4996
      %5055 = vst.msk [vmem:[%s332 + $0x38] sm:$0xff] %vm5047, %v4997
      %5056 = vst.msk [vmem:[%s332 + $0x40] sm:$0xff] %vm5047, %v4998
      %5057 = vst.msk [vmem:[%s332 + $0x48] sm:$0xff] %vm5047, %v4999
      %5058 = vst.msk [vmem:[%s332 + $0x50] sm:$0xff] %vm5047, %v5000
      %5059 = vst.msk [vmem:[%s332 + $0x58] sm:$0xff] %vm5047, %v5001
      %5060 = vst.msk [vmem:[%s332 + $0x60] sm:$0xff] %vm5047, %v5002
      %5061 = vst.msk [vmem:[%s332 + $0x68] sm:$0xff] %vm5047, %v5003
      %5062 = vst.msk [vmem:[%s332 + $0x70] sm:$0xff] %vm5047, %v5004
      %5063 = vst.msk [vmem:[%s332 + $0x78] sm:$0xff] %vm5047, %v5005
      %5080 = vrot.lane.b32.xlu0 %v5031, 122
      %v5081 = vpop.permute.xlu0 %5080
      %5082 = vrot.lane.b32.xlu0 %v5032, 122
      %v5083 = vpop.permute.xlu0 %5082
      %5084 = vrot.lane.b32.xlu0 %v5033, 122
      %v5085 = vpop.permute.xlu0 %5084
      %5086 = vrot.lane.b32.xlu0 %v5034, 122
      %v5087 = vpop.permute.xlu0 %5086
      %5088 = vrot.lane.b32.xlu0 %v5035, 122
      %v5089 = vpop.permute.xlu0 %5088
      %5090 = vrot.lane.b32.xlu0 %v5036, 122
      %v5091 = vpop.permute.xlu0 %5090
      %5092 = vrot.lane.b32.xlu0 %v5037, 122
      %v5093 = vpop.permute.xlu0 %5092
      %5094 = vrot.lane.b32.xlu0 %v5038, 122
      %v5095 = vpop.permute.xlu0 %5094
      %5096 = vrot.lane.b32.xlu0 %v5039, 122
      %v5097 = vpop.permute.xlu0 %5096
      %5098 = vrot.lane.b32.xlu0 %v5040, 122
      %v5099 = vpop.permute.xlu0 %5098
      %5100 = vrot.lane.b32.xlu0 %v5041, 122
      %v5101 = vpop.permute.xlu0 %5100
      %5102 = vrot.lane.b32.xlu0 %v5042, 122
      %v5103 = vpop.permute.xlu0 %5102
      %5104 = vrot.lane.b32.xlu0 %v5043, 122
      %v5105 = vpop.permute.xlu0 %5104
      %5106 = vrot.lane.b32.xlu0 %v5044, 122
      %v5107 = vpop.permute.xlu0 %5106
      %5108 = vrot.lane.b32.xlu0 %v5045, 122
      %v5109 = vpop.permute.xlu0 %5108
      %5110 = vrot.lane.b32.xlu0 %v5046, 122
      %v5111 = vpop.permute.xlu0 %5110
      %vm5128 = vcmask 39960
      %5129 = vst.msk [vmem:[%s332] sm:$0xff] %vm5128, %v5081
      %5130 = vst.msk [vmem:[%s332 + $0x8] sm:$0xff] %vm5128, %v5083
      %5131 = vst.msk [vmem:[%s332 + $0x10] sm:$0xff] %vm5128, %v5085
      %5132 = vst.msk [vmem:[%s332 + $0x18] sm:$0xff] %vm5128, %v5087
      %5133 = vst.msk [vmem:[%s332 + $0x20] sm:$0xff] %vm5128, %v5089
      %5134 = vst.msk [vmem:[%s332 + $0x28] sm:$0xff] %vm5128, %v5091
      %5135 = vst.msk [vmem:[%s332 + $0x30] sm:$0xff] %vm5128, %v5093
      %5136 = vst.msk [vmem:[%s332 + $0x38] sm:$0xff] %vm5128, %v5095
      %5137 = vst.msk [vmem:[%s332 + $0x40] sm:$0xff] %vm5128, %v5097
      %5138 = vst.msk [vmem:[%s332 + $0x48] sm:$0xff] %vm5128, %v5099
      %5139 = vst.msk [vmem:[%s332 + $0x50] sm:$0xff] %vm5128, %v5101
      %5140 = vst.msk [vmem:[%s332 + $0x58] sm:$0xff] %vm5128, %v5103
      %5141 = vst.msk [vmem:[%s332 + $0x60] sm:$0xff] %vm5128, %v5105
      %5142 = vst.msk [vmem:[%s332 + $0x68] sm:$0xff] %vm5128, %v5107
      %5143 = vst.msk [vmem:[%s332 + $0x70] sm:$0xff] %vm5128, %v5109
      %5144 = vst.msk [vmem:[%s332 + $0x78] sm:$0xff] %vm5128, %v5111
      %p5145 = scmp.lt.s32.totalorder %s20, 3
      %s5146 = scalar_select %p5145, %s20, 3
      %s5147 = smul.addr %s5146, 16
      %s5148 = smul.addr %s5147, 8
      %s5149 = scalar_lea.vmem %s9, %s5148
      // Predicated region
      $region57: #{conv_our_d_forward.1} parent=55 // pred_check
        %p5150 = pneg %p232
      $region58: #{conv_our_d_forward.1} parent=55 // pred_check_branch
        %5152 = sbr.rel (%p5150) target = $region60
      $region59: #{conv_our_d_forward.1} parent=55 // pred_region
        _
      $region60: #{conv_our_d_forward.1} parent=55 // pred_fallthru
        _
    $region56: #{conv_our_d_forward.1} parent=5 // pred_fallthru
      _
    %p5153 = scmp.le.s32.totalorder 2, %s15
    // Predicated region
    $region61: #{conv_our_d_forward.1} parent=5 // pred_check
      %p5154 = pneg %p5153
    $region62: #{conv_our_d_forward.1} parent=5 // pred_check_branch
      %5156 = sbr.rel (%p5154) target = $region64
    $region63: #{conv_our_d_forward.1} parent=5 // pred_region
      %s5157 = ssub.s32 %s15, 2
      // Predicated region
      $region65: #{conv_our_d_forward.1} parent=63 // pred_check
        %p5158 = pneg %p238
      $region66: #{conv_our_d_forward.1} parent=63 // pred_check_branch
        %5160 = sbr.rel (%p5158) target = $region68
      $region67: #{conv_our_d_forward.1} parent=63 // pred_region
        %p5161 = scmp.lt.s32.totalorder %s21, 3
        %s5162 = scalar_select %p5161, %s21, 3
        %s5163 = smul.addr %s5162, 16
        %s5164 = smul.addr %s5163, 8
        %s5165 = scalar_lea.vmem %s9, %s5164
      $region68: #{conv_our_d_forward.1} parent=63 // pred_fallthru
        _
    $region64: #{conv_our_d_forward.1} parent=5 // pred_fallthru
      _
  $region6: #{conv_our_d_forward.1} parent=0 // loop_footer
    %s19 = sadd.s32 1, %s15
  $region7: #{conv_our_d_forward.1} parent=0 // loop_footer_branch
    %14 = sbr.rel target = $region3
  $region8: #{conv_our_d_forward.1} parent=0 // loop_exit
    _

</llo_original>
